<compile_context>
chip_gen: v5e
topology: v5e:2x2
jax: 0.10.0
libtpu: 0.0.40
codegen_flags: <defaults>
</compile_context>

<pallas_src>
import functools
import math

import jax
import jax.numpy as jnp
from jax import lax
from jax.experimental import pallas as pl
from jax.experimental.pallas import tpu as pltpu

EMBED_DIM = 128                     # lane-dense activations (module default 512; kept small)
NUM_HEADS = 8                       # matches module default num_heads=8
HEAD_DIM = EMBED_DIM // NUM_HEADS   # 16
FF_DIM = 4 * EMBED_DIM              # TODO(synk): FeedForward hidden assumed 4*embed_dim + ReLU (layer source not shown)
NUM_BLOCKS = 3
LN_EPS = 1e-5                       # PyTorch nn.LayerNorm default

# MXU operand dtype. f32 matches the PyTorch module; set to jnp.bfloat16 on
# v6e/v7x (bf16-native MXU) — accumulation stays f32 via preferred_element_type.
MXU_DTYPE = jnp.float32


# ---------------------------------------------------------------------------
# shared math helpers (pure jnp -> usable inside the kernel and in the ref)
# ---------------------------------------------------------------------------
def _layer_norm(v, g, b):
    mu = jnp.mean(v, axis=-1, keepdims=True)
    var = jnp.mean((v - mu) ** 2, axis=-1, keepdims=True)
    return (v - mu) * lax.rsqrt(var + LN_EPS) * g + b


def _mm(a, b):
    """Matmul on the MXU with f32 accumulation."""
    return jnp.dot(a.astype(MXU_DTYPE), b.astype(MXU_DTYPE),
                   preferred_element_type=jnp.float32)


def _mm_nt(a, b):
    """a @ b.T (contract the last dim of both) without materializing b.T."""
    return lax.dot_general(a.astype(MXU_DTYPE), b.astype(MXU_DTYPE),
                           (((1,), (1,)), ((), ())),
                           preferred_element_type=jnp.float32)


def sinusoidal_pe(seq_len, d_model):
    pos = jnp.arange(seq_len, dtype=jnp.float32)[:, None]
    i = jnp.arange(0, d_model, 2, dtype=jnp.float32)
    div = jnp.exp(-math.log(10000.0) * i / d_model)
    pe = jnp.zeros((seq_len, d_model), jnp.float32)
    pe = pe.at[:, 0::2].set(jnp.sin(pos * div))
    pe = pe.at[:, 1::2].set(jnp.cos(pos * div))
    return pe


# ---------------------------------------------------------------------------
# Pallas kernel: 3 fused encoder blocks for ONE batch element per grid step
# ---------------------------------------------------------------------------
def _encoder_stack_kernel(has_mask, *refs):
    if has_mask:
        (x_ref, bias_ref, wqkv_ref, bqkv_ref, wo_ref, bo_ref,
         w1_ref, b1_ref, w2_ref, b2_ref, lng_ref, lnb_ref, out_ref) = refs
    else:
        (x_ref, wqkv_ref, bqkv_ref, wo_ref, bo_ref,
         w1_ref, b1_ref, w2_ref, b2_ref, lng_ref, lnb_ref, out_ref) = refs

    x = x_ref[...].astype(jnp.float32)                                   # (S, D)
    bias = bias_ref[...].astype(jnp.float32) if has_mask else None       # (S, S)

    for blk in range(NUM_BLOCKS):                       # static unroll over blocks
        ln_g = lng_ref[blk]                             # (2, 1, D)
        ln_b = lnb_ref[blk]

        # ---- fused QKV: one lane-dense (S,128)@(128,384) matmul --------------
        qkv = _mm(x, wqkv_ref[blk]) + bqkv_ref[blk]     # (S, 3D); Q pre-scaled

        def head(part, h, _qkv=qkv):                    # static lane slice
            off = part * EMBED_DIM + h * HEAD_DIM
            return _qkv[:, off:off + HEAD_DIM]          # (S, Hd)

        # ---- per-head attention (K=Hd=16 contractions are inherent to MHA) ----
        scores = jnp.stack(
            [_mm_nt(head(0, h), head(1, h)) for h in range(NUM_HEADS)],
            axis=0)                                     # (H, S, S)
        if bias is not None:
            scores = scores + bias[None]
        m = jnp.max(scores, axis=-1, keepdims=True)
        e = jnp.exp(scores - m)
        p = e / jnp.sum(e, axis=-1, keepdims=True)      # exact softmax

        # per-head context concatenated back onto the lane axis -> (S, D)
        ctx = jnp.concatenate(
            [_mm(p[h], head(2, h)) for h in range(NUM_HEADS)], axis=1)

        # ---- output projection: one (S,128)@(128,128) matmul ------------------
        att = _mm(ctx, wo_ref[blk]) + bo_ref[blk]
        # TODO(synk): Encoder_Block internals not shown; standard post-LN residual assumed.
        x = _layer_norm(x + att, ln_g[0], ln_b[0])

        # ---- feed-forward ------------------------------------------------------
        h1 = jnp.maximum(_mm(x, w1_ref[blk]) + b1_ref[blk], 0.0)
        ff = _mm(h1, w2_ref[blk]) + b2_ref[blk]
        x = _layer_norm(x + ff, ln_g[1], ln_b[1])

    out_ref[...] = x.astype(out_ref.dtype)


_WEIGHT_NAMES = ("w_qkv", "b_qkv", "w_o", "b_o",
                 "w_ff1", "b_ff1", "w_ff2", "b_ff2", "ln_g", "ln_b")


def encoder_stack(x0, packed, bias=None):
    """Run all 3 encoder blocks in one pallas_call. x0: (B, S, D)."""
    B, S, D = x0.shape
    has_mask = bias is not None
    weights = [packed[k] for k in _WEIGHT_NAMES]

    def resident(arr):                                  # same block every grid step
        nd = arr.ndim
        return pl.BlockSpec(arr.shape, lambda b, _n=nd: (0,) * _n)

    in_specs = [pl.BlockSpec((None, S, D), lambda b: (b, 0, 0))]
    if has_mask:
        in_specs.append(pl.BlockSpec((None, S, S), lambda b: (b, 0, 0)))
    in_specs += [resident(w) for w in weights]
    inputs = [x0] + ([bias] if has_mask else []) + weights

    # Explicit VMEM budget: resident weights (x2 buffering) + streamed
    # activation/mask tiles (x4 for in/out double-buffering) + transient
    # scores/qkv/ffn slabs + headroom, clamped under v7x's 64 MiB physical VMEM.
    weight_bytes = sum(int(w.size) * w.dtype.itemsize for w in weights)
    act_bytes = (2 * S * D + (S * S if has_mask else 0)) * 4
    scratch_bytes = (NUM_HEADS * S * S + 3 * S * D + S * FF_DIM) * 4
    vmem_limit = int(min(2 * weight_bytes + 4 * act_bytes + 4 * scratch_bytes
                         + (16 << 20), 48 << 20))

    kernel = functools.partial(_encoder_stack_kernel, has_mask)
    return pl.pallas_call(
        kernel,
        out_shape=jax.ShapeDtypeStruct((B, S, D), x0.dtype),
        grid=(B,),
        in_specs=in_specs,
        out_specs=pl.BlockSpec((None, S, D), lambda b: (b, 0, 0)),
        compiler_params=pltpu.CompilerParams(
            dimension_semantics=("parallel",),
            vmem_limit_bytes=vmem_limit),
    )(*inputs)


# ---------------------------------------------------------------------------
# parameter packing (done ONCE at model load, not per forward call)
# ---------------------------------------------------------------------------
def _pack_block(p):
    scale = 1.0 / math.sqrt(HEAD_DIM)                     # fold 1/sqrt(d_k) into Q
    w_qkv = jnp.concatenate([p["w_q"] * scale, p["w_k"], p["w_v"]], axis=1)   # (D, 3D)
    b_qkv = jnp.concatenate([p["b_q"] * scale, p["b_k"], p["b_v"]])[None, :]  # (1, 3D)
    ln_g = jnp.stack([p["ln1_g"], p["ln2_g"]])[:, None, :]                    # (2, 1, D)
    ln_b = jnp.stack([p["ln1_b"], p["ln2_b"]])[:, None, :]
    return dict(w_qkv=w_qkv, b_qkv=b_qkv,
                w_o=p["w_o"], b_o=p["b_o"][None, :],
                w_ff1=p["w_ff1"], b_ff1=p["b_ff1"][None, :],
                w_ff2=p["w_ff2"], b_ff2=p["b_ff2"][None, :],
                ln_g=ln_g, ln_b=ln_b)


def pack_params(params):
    blocks = [_pack_block(params[f"block{i}"]) for i in (1, 2, 3)]
    return {k: jnp.stack([b[k] for b in blocks]) for k in blocks[0]}


def prepare_params(params, max_seq_len):
    """Pack weights + PE table once at model load (hoisted out of the jit)."""
    packed = pack_params(params)
    packed["embedding"] = params["embedding"]
    packed["pe"] = sinusoidal_pe(max_seq_len, EMBED_DIM)
    return jax.tree_util.tree_map(jnp.asarray, packed)


# ---------------------------------------------------------------------------
# SourceEncoder forward (embedding + PE in plain JAX, 3 blocks in one kernel)
# ---------------------------------------------------------------------------
@jax.jit
def source_encoder_forward(tokens, packed, source_mask=None):
    B, S = tokens.shape
    emb = jnp.take(packed["embedding"], tokens, axis=0)                 # (B, S, D)
    x0 = emb + packed["pe"][None, :S]

    bias = None
    if source_mask is not None:
        # TODO(synk): exact mask convention depends on the unshown MultiHeadAttention;
        # additive (0 = keep, -1e9 = masked), streamed per-batch as (S,S) blocks.
        sm = jnp.asarray(source_mask, jnp.float32)
        if sm.ndim == 2:
            sm = jnp.broadcast_to(sm[None], (B, S, S))
        bias = sm
    return encoder_stack(x0, packed, bias)


# ---------------------------------------------------------------------------
# pure-JAX reference (batched, exact softmax) for correctness checking
# ---------------------------------------------------------------------------
def _softmax_ref(x):
    m = jnp.max(x, axis=-1, keepdims=True)
    e = jnp.exp(x - m)
    return e / jnp.sum(e, axis=-1, keepdims=True)


def _mha_ref(x, mask, p):
    q = x @ p["w_q"] + p["b_q"]
    k = x @ p["w_k"] + p["b_k"]
    v = x @ p["w_v"] + p["b_v"]
    B, S, D = q.shape
    qh = q.reshape(B, S, NUM_HEADS, HEAD_DIM).transpose(0, 2, 1, 3)
    kh = k.reshape(B, S, NUM_HEADS, HEAD_DIM).transpose(0, 2, 1, 3)
    vh = v.reshape(B, S, NUM_HEADS, HEAD_DIM).transpose(0, 2, 1, 3)
    scores = jnp.einsum("bhqd,bhkd->bhqk", qh, kh) / math.sqrt(HEAD_DIM)
    if mask is not None:
        m = jnp.asarray(mask, jnp.float32)
        if m.ndim == 2:
            m = jnp.broadcast_to(m[None], (B, S, S))
        scores = scores + m[:, None]
    pr = _softmax_ref(scores)
    o = jnp.einsum("bhqk,bhkd->bhqd", pr, vh).transpose(0, 2, 1, 3).reshape(B, S, D)
    return o @ p["w_o"] + p["b_o"]


def _encoder_block_ref(x, mask, p):
    a = _mha_ref(x, mask, p)
    x = _layer_norm(x + a, p["ln1_g"], p["ln1_b"])
    h = jnp.maximum(x @ p["w_ff1"] + p["b_ff1"], 0.0)
    ff = h @ p["w_ff2"] + p["b_ff2"]
    return _layer_norm(x + ff, p["ln2_g"], p["ln2_b"])


def source_encoder_forward_ref(tokens, params, source_mask=None):
    B, S = tokens.shape
    x = jnp.take(params["embedding"], tokens, axis=0)
    x = x + sinusoidal_pe(S, EMBED_DIM)[None]
    for i in (1, 2, 3):
        x = _encoder_block_ref(x, source_mask, params[f"block{i}"])
    return x


# ---------------------------------------------------------------------------
# deterministic parameter initialization (PyTorch LayerNorm defaults for LN)
# ---------------------------------------------------------------------------
def init_block_params(key):
    ks = jax.random.split(key, 12)
    s = 0.05
    dd = (EMBED_DIM, EMBED_DIM)
    return dict(
        w_q=jax.random.normal(ks[0], dd, jnp.float32) * s,
        b_q=jax.random.normal(ks[1], (EMBED_DIM,), jnp.float32) * s,
        w_k=jax.random.normal(ks[2], dd, jnp.float32) * s,
        b_k=jax.random.normal(ks[3], (EMBED_DIM,), jnp.float32) * s,
        w_v=jax.random.normal(ks[4], dd, jnp.float32) * s,
        b_v=jax.random.normal(ks[5], (EMBED_DIM,), jnp.float32) * s,
        w_o=jax.random.normal(ks[6], dd, jnp.float32) * s,
        b_o=jax.random.normal(ks[7], (EMBED_DIM,), jnp.float32) * s,
        w_ff1=jax.random.normal(ks[8], (EMBED_DIM, FF_DIM), jnp.float32) * s,
        b_ff1=jax.random.normal(ks[9], (FF_DIM,), jnp.float32) * s,
        w_ff2=jax.random.normal(ks[10], (FF_DIM, EMBED_DIM), jnp.float32) * s,
        b_ff2=jax.random.normal(ks[11], (EMBED_DIM,), jnp.float32) * s,
        ln1_g=jnp.ones((EMBED_DIM,), jnp.float32),
        ln1_b=jnp.zeros((EMBED_DIM,), jnp.float32),
        ln2_g=jnp.ones((EMBED_DIM,), jnp.float32),
        ln2_b=jnp.zeros((EMBED_DIM,), jnp.float32),
    )


if __name__ == "__main__":
    key = jax.random.PRNGKey(0)
    vocab_size = 50
    B, S = 2, 8

    k_tok, k_emb, k1, k2, k3 = jax.random.split(key, 5)
    tokens = jax.random.randint(k_tok, (B, S), 0, vocab_size)
    params = dict(
        embedding=jax.random.normal(k_emb, (vocab_size, EMBED_DIM), jnp.float32),
        block1=init_block_params(k1),
        block2=init_block_params(k2),
        block3=init_block_params(k3),
    )

    # weight packing + PE table built ONCE, outside the per-call jitted forward
    packed = prepare_params(params, max_seq_len=S)

    # module default: source_mask=None (no mask DMA, per-batch attention)
    out = source_encoder_forward(tokens, packed)
    out = jax.block_until_ready(out)

    with jax.default_matmul_precision("highest"):
        ref = source_encoder_forward_ref(tokens, params)
    ref = jax.block_until_ready(ref)

    assert out.shape == (B, S, EMBED_DIM)
    assert jnp.allclose(out, ref, atol=1e-3, rtol=1e-3), \
        "Pallas kernel mismatch vs JAX reference"

    print("KERNEL_OK")
</pallas_src>

<mosaic_0001>
module attributes {stable_mosaic.version = 11 : i64} {
  func.func @_encoder_stack_kernel(%arg0: i32, %arg1: memref<1x8x128xf32, #tpu.memory_space<vmem>>, %arg2: memref<3x128x384xf32, #tpu.memory_space<vmem>>, %arg3: memref<3x1x384xf32, #tpu.memory_space<vmem>>, %arg4: memref<3x128x128xf32, #tpu.memory_space<vmem>>, %arg5: memref<3x1x128xf32, #tpu.memory_space<vmem>>, %arg6: memref<3x128x512xf32, #tpu.memory_space<vmem>>, %arg7: memref<3x1x512xf32, #tpu.memory_space<vmem>>, %arg8: memref<3x512x128xf32, #tpu.memory_space<vmem>>, %arg9: memref<3x1x128xf32, #tpu.memory_space<vmem>>, %arg10: memref<3x2x1x128xf32, #tpu.memory_space<vmem>>, %arg11: memref<3x2x1x128xf32, #tpu.memory_space<vmem>>, %arg12: memref<1x8x128xf32, #tpu.memory_space<vmem>>) attributes {dimension_semantics = [#tpu.dimension_semantics<parallel>], iteration_bounds = array<i64: 2>, scalar_prefetch = 0 : i64, scratch_operands = 0 : i64, tpu.core_type = #tpu.core_type<tc>, window_params = [{transform_indices = @transform_0, window_bounds = array<i64: 1, 8, 128>}, {pipeline_mode = #tpu.pipeline_mode<synchronous>, transform_indices = @transform_1, window_bounds = array<i64: 3, 128, 384>}, {pipeline_mode = #tpu.pipeline_mode<synchronous>, transform_indices = @transform_2, window_bounds = array<i64: 3, 1, 384>}, {pipeline_mode = #tpu.pipeline_mode<synchronous>, transform_indices = @transform_3, window_bounds = array<i64: 3, 128, 128>}, {pipeline_mode = #tpu.pipeline_mode<synchronous>, transform_indices = @transform_4, window_bounds = array<i64: 3, 1, 128>}, {pipeline_mode = #tpu.pipeline_mode<synchronous>, transform_indices = @transform_5, window_bounds = array<i64: 3, 128, 512>}, {pipeline_mode = #tpu.pipeline_mode<synchronous>, transform_indices = @transform_6, window_bounds = array<i64: 3, 1, 512>}, {pipeline_mode = #tpu.pipeline_mode<synchronous>, transform_indices = @transform_7, window_bounds = array<i64: 3, 512, 128>}, {pipeline_mode = #tpu.pipeline_mode<synchronous>, transform_indices = @transform_8, window_bounds = array<i64: 3, 1, 128>}, {pipeline_mode = #tpu.pipeline_mode<synchronous>, transform_indices = @transform_9, window_bounds = array<i64: 3, 2, 1, 128>}, {pipeline_mode = #tpu.pipeline_mode<synchronous>, transform_indices = @transform_10, window_bounds = array<i64: 3, 2, 1, 128>}, {transform_indices = @transform_11, window_bounds = array<i64: 1, 8, 128>}]} {
    %c0 = arith.constant 0 : index
    %c0_0 = arith.constant 0 : index
    %c0_1 = arith.constant 0 : index
    %0 = vector.load %arg1[%c0, %c0_0, %c0_1] : memref<1x8x128xf32, #tpu.memory_space<vmem>>, vector<1x8x128xf32>
    %1 = vector.shape_cast %0 : vector<1x8x128xf32> to vector<8x128xf32>
    %c0_2 = arith.constant 0 : index
    %c0_3 = arith.constant 0 : index
    %c0_4 = arith.constant 0 : index
    %c0_5 = arith.constant 0 : index
    %2 = vector.load %arg10[%c0_2, %c0_3, %c0_4, %c0_5] : memref<3x2x1x128xf32, #tpu.memory_space<vmem>>, vector<1x2x1x128xf32>
    %3 = vector.shape_cast %2 : vector<1x2x1x128xf32> to vector<2x1x128xf32>
    %c0_6 = arith.constant 0 : index
    %c0_7 = arith.constant 0 : index
    %c0_8 = arith.constant 0 : index
    %c0_9 = arith.constant 0 : index
    %4 = vector.load %arg11[%c0_6, %c0_7, %c0_8, %c0_9] : memref<3x2x1x128xf32, #tpu.memory_space<vmem>>, vector<1x2x1x128xf32>
    %5 = vector.shape_cast %4 : vector<1x2x1x128xf32> to vector<2x1x128xf32>
    %c0_10 = arith.constant 0 : index
    %c0_11 = arith.constant 0 : index
    %c0_12 = arith.constant 0 : index
    %6 = vector.load %arg2[%c0_10, %c0_11, %c0_12] : memref<3x128x384xf32, #tpu.memory_space<vmem>>, vector<1x128x384xf32>
    %7 = vector.shape_cast %6 : vector<1x128x384xf32> to vector<128x384xf32>
    %cst = arith.constant dense<0.000000e+00> : vector<8x384xf32>
    %8 = tpu.matmul %1, %7, %cst {dimension_numbers = #tpu.dot_dimension_numbers<[1], [0], [0], [1], [0, 0, 1, 1], [], []>} : vector<8x128xf32>, vector<128x384xf32>, vector<8x384xf32> -> vector<8x384xf32>
    %c0_13 = arith.constant 0 : index
    %c0_14 = arith.constant 0 : index
    %c0_15 = arith.constant 0 : index
    %9 = vector.load %arg3[%c0_13, %c0_14, %c0_15] : memref<3x1x384xf32, #tpu.memory_space<vmem>>, vector<1x1x384xf32>
    %10 = vector.shape_cast %9 : vector<1x1x384xf32> to vector<1x384xf32>
    %11 = vector.broadcast %10 : vector<1x384xf32> to vector<8x384xf32>
    %12 = arith.addf %8, %11 : vector<8x384xf32>
    %13 = vector.extract_strided_slice %12 {offsets = [0, 0], sizes = [8, 16], strides = [1, 1]} : vector<8x384xf32> to vector<8x16xf32>
    %14 = vector.extract_strided_slice %12 {offsets = [0, 128], sizes = [8, 16], strides = [1, 1]} : vector<8x384xf32> to vector<8x16xf32>
    %cst_16 = arith.constant dense<0.000000e+00> : vector<8x8xf32>
    %15 = tpu.matmul %13, %14, %cst_16 {dimension_numbers = #tpu.dot_dimension_numbers<[1], [1], [0], [0], [0, 0, 1, 0], [], []>} : vector<8x16xf32>, vector<8x16xf32>, vector<8x8xf32> -> vector<8x8xf32>
    %16 = vector.extract_strided_slice %12 {offsets = [0, 16], sizes = [8, 16], strides = [1, 1]} : vector<8x384xf32> to vector<8x16xf32>
    %17 = vector.extract_strided_slice %12 {offsets = [0, 144], sizes = [8, 16], strides = [1, 1]} : vector<8x384xf32> to vector<8x16xf32>
    %cst_17 = arith.constant dense<0.000000e+00> : vector<8x8xf32>
    %18 = tpu.matmul %16, %17, %cst_17 {dimension_numbers = #tpu.dot_dimension_numbers<[1], [1], [0], [0], [0, 0, 1, 0], [], []>} : vector<8x16xf32>, vector<8x16xf32>, vector<8x8xf32> -> vector<8x8xf32>
    %19 = vector.extract_strided_slice %12 {offsets = [0, 32], sizes = [8, 16], strides = [1, 1]} : vector<8x384xf32> to vector<8x16xf32>
    %20 = vector.extract_strided_slice %12 {offsets = [0, 160], sizes = [8, 16], strides = [1, 1]} : vector<8x384xf32> to vector<8x16xf32>
    %cst_18 = arith.constant dense<0.000000e+00> : vector<8x8xf32>
    %21 = tpu.matmul %19, %20, %cst_18 {dimension_numbers = #tpu.dot_dimension_numbers<[1], [1], [0], [0], [0, 0, 1, 0], [], []>} : vector<8x16xf32>, vector<8x16xf32>, vector<8x8xf32> -> vector<8x8xf32>
    %22 = vector.extract_strided_slice %12 {offsets = [0, 48], sizes = [8, 16], strides = [1, 1]} : vector<8x384xf32> to vector<8x16xf32>
    %23 = vector.extract_strided_slice %12 {offsets = [0, 176], sizes = [8, 16], strides = [1, 1]} : vector<8x384xf32> to vector<8x16xf32>
    %cst_19 = arith.constant dense<0.000000e+00> : vector<8x8xf32>
    %24 = tpu.matmul %22, %23, %cst_19 {dimension_numbers = #tpu.dot_dimension_numbers<[1], [1], [0], [0], [0, 0, 1, 0], [], []>} : vector<8x16xf32>, vector<8x16xf32>, vector<8x8xf32> -> vector<8x8xf32>
    %25 = vector.extract_strided_slice %12 {offsets = [0, 64], sizes = [8, 16], strides = [1, 1]} : vector<8x384xf32> to vector<8x16xf32>
    %26 = vector.extract_strided_slice %12 {offsets = [0, 192], sizes = [8, 16], strides = [1, 1]} : vector<8x384xf32> to vector<8x16xf32>
    %cst_20 = arith.constant dense<0.000000e+00> : vector<8x8xf32>
    %27 = tpu.matmul %25, %26, %cst_20 {dimension_numbers = #tpu.dot_dimension_numbers<[1], [1], [0], [0], [0, 0, 1, 0], [], []>} : vector<8x16xf32>, vector<8x16xf32>, vector<8x8xf32> -> vector<8x8xf32>
    %28 = vector.extract_strided_slice %12 {offsets = [0, 80], sizes = [8, 16], strides = [1, 1]} : vector<8x384xf32> to vector<8x16xf32>
    %29 = vector.extract_strided_slice %12 {offsets = [0, 208], sizes = [8, 16], strides = [1, 1]} : vector<8x384xf32> to vector<8x16xf32>
    %cst_21 = arith.constant dense<0.000000e+00> : vector<8x8xf32>
    %30 = tpu.matmul %28, %29, %cst_21 {dimension_numbers = #tpu.dot_dimension_numbers<[1], [1], [0], [0], [0, 0, 1, 0], [], []>} : vector<8x16xf32>, vector<8x16xf32>, vector<8x8xf32> -> vector<8x8xf32>
    %31 = vector.extract_strided_slice %12 {offsets = [0, 96], sizes = [8, 16], strides = [1, 1]} : vector<8x384xf32> to vector<8x16xf32>
    %32 = vector.extract_strided_slice %12 {offsets = [0, 224], sizes = [8, 16], strides = [1, 1]} : vector<8x384xf32> to vector<8x16xf32>
    %cst_22 = arith.constant dense<0.000000e+00> : vector<8x8xf32>
    %33 = tpu.matmul %31, %32, %cst_22 {dimension_numbers = #tpu.dot_dimension_numbers<[1], [1], [0], [0], [0, 0, 1, 0], [], []>} : vector<8x16xf32>, vector<8x16xf32>, vector<8x8xf32> -> vector<8x8xf32>
    %34 = vector.extract_strided_slice %12 {offsets = [0, 112], sizes = [8, 16], strides = [1, 1]} : vector<8x384xf32> to vector<8x16xf32>
    %35 = vector.extract_strided_slice %12 {offsets = [0, 240], sizes = [8, 16], strides = [1, 1]} : vector<8x384xf32> to vector<8x16xf32>
    %cst_23 = arith.constant dense<0.000000e+00> : vector<8x8xf32>
    %36 = tpu.matmul %34, %35, %cst_23 {dimension_numbers = #tpu.dot_dimension_numbers<[1], [1], [0], [0], [0, 0, 1, 0], [], []>} : vector<8x16xf32>, vector<8x16xf32>, vector<8x8xf32> -> vector<8x8xf32>
    %37 = vector.shape_cast %15 : vector<8x8xf32> to vector<1x8x8xf32>
    %38 = vector.shape_cast %18 : vector<8x8xf32> to vector<1x8x8xf32>
    %39 = vector.shape_cast %21 : vector<8x8xf32> to vector<1x8x8xf32>
    %40 = vector.shape_cast %24 : vector<8x8xf32> to vector<1x8x8xf32>
    %41 = vector.shape_cast %27 : vector<8x8xf32> to vector<1x8x8xf32>
    %42 = vector.shape_cast %30 : vector<8x8xf32> to vector<1x8x8xf32>
    %43 = vector.shape_cast %33 : vector<8x8xf32> to vector<1x8x8xf32>
    %44 = vector.shape_cast %36 : vector<8x8xf32> to vector<1x8x8xf32>
    %45 = tpu.concatenate %37, %38, %39, %40, %41, %42, %43, %44 in 0 : vector<1x8x8xf32>, vector<1x8x8xf32>, vector<1x8x8xf32>, vector<1x8x8xf32>, vector<1x8x8xf32>, vector<1x8x8xf32>, vector<1x8x8xf32>, vector<1x8x8xf32> -> vector<8x8x8xf32>
    %cst_24 = arith.constant dense<0xFF800000> : vector<8x8xf32>
    %46 = vector.multi_reduction <maximumf>, %45, %cst_24 [2] : vector<8x8x8xf32> to vector<8x8xf32>
    %47 = vector.shape_cast %46 : vector<8x8xf32> to vector<8x8x1xf32>
    %48 = vector.broadcast %47 : vector<8x8x1xf32> to vector<8x8x8xf32>
    %49 = arith.subf %45, %48 : vector<8x8x8xf32>
    %50 = math.exp %49 : vector<8x8x8xf32>
    %cst_25 = arith.constant dense<0.000000e+00> : vector<8x8xf32>
    %51 = vector.multi_reduction <add>, %50, %cst_25 [2] : vector<8x8x8xf32> to vector<8x8xf32>
    %52 = vector.shape_cast %51 : vector<8x8xf32> to vector<8x8x1xf32>
    %53 = vector.broadcast %52 : vector<8x8x1xf32> to vector<8x8x8xf32>
    %54 = arith.divf %50, %53 : vector<8x8x8xf32>
    %55 = vector.extract_strided_slice %54 {offsets = [0, 0, 0], sizes = [1, 8, 8], strides = [1, 1, 1]} : vector<8x8x8xf32> to vector<1x8x8xf32>
    %56 = vector.shape_cast %55 : vector<1x8x8xf32> to vector<8x8xf32>
    %57 = vector.extract_strided_slice %12 {offsets = [0, 256], sizes = [8, 16], strides = [1, 1]} : vector<8x384xf32> to vector<8x16xf32>
    %cst_26 = arith.constant dense<0.000000e+00> : vector<8x16xf32>
    %58 = tpu.matmul %56, %57, %cst_26 {dimension_numbers = #tpu.dot_dimension_numbers<[1], [0], [0], [1], [0, 0, 1, 1], [], []>} : vector<8x8xf32>, vector<8x16xf32>, vector<8x16xf32> -> vector<8x16xf32>
    %59 = vector.extract_strided_slice %54 {offsets = [1, 0, 0], sizes = [1, 8, 8], strides = [1, 1, 1]} : vector<8x8x8xf32> to vector<1x8x8xf32>
    %60 = vector.shape_cast %59 : vector<1x8x8xf32> to vector<8x8xf32>
    %61 = vector.extract_strided_slice %12 {offsets = [0, 272], sizes = [8, 16], strides = [1, 1]} : vector<8x384xf32> to vector<8x16xf32>
    %cst_27 = arith.constant dense<0.000000e+00> : vector<8x16xf32>
    %62 = tpu.matmul %60, %61, %cst_27 {dimension_numbers = #tpu.dot_dimension_numbers<[1], [0], [0], [1], [0, 0, 1, 1], [], []>} : vector<8x8xf32>, vector<8x16xf32>, vector<8x16xf32> -> vector<8x16xf32>
    %63 = vector.extract_strided_slice %54 {offsets = [2, 0, 0], sizes = [1, 8, 8], strides = [1, 1, 1]} : vector<8x8x8xf32> to vector<1x8x8xf32>
    %64 = vector.shape_cast %63 : vector<1x8x8xf32> to vector<8x8xf32>
    %65 = vector.extract_strided_slice %12 {offsets = [0, 288], sizes = [8, 16], strides = [1, 1]} : vector<8x384xf32> to vector<8x16xf32>
    %cst_28 = arith.constant dense<0.000000e+00> : vector<8x16xf32>
    %66 = tpu.matmul %64, %65, %cst_28 {dimension_numbers = #tpu.dot_dimension_numbers<[1], [0], [0], [1], [0, 0, 1, 1], [], []>} : vector<8x8xf32>, vector<8x16xf32>, vector<8x16xf32> -> vector<8x16xf32>
    %67 = vector.extract_strided_slice %54 {offsets = [3, 0, 0], sizes = [1, 8, 8], strides = [1, 1, 1]} : vector<8x8x8xf32> to vector<1x8x8xf32>
    %68 = vector.shape_cast %67 : vector<1x8x8xf32> to vector<8x8xf32>
    %69 = vector.extract_strided_slice %12 {offsets = [0, 304], sizes = [8, 16], strides = [1, 1]} : vector<8x384xf32> to vector<8x16xf32>
    %cst_29 = arith.constant dense<0.000000e+00> : vector<8x16xf32>
    %70 = tpu.matmul %68, %69, %cst_29 {dimension_numbers = #tpu.dot_dimension_numbers<[1], [0], [0], [1], [0, 0, 1, 1], [], []>} : vector<8x8xf32>, vector<8x16xf32>, vector<8x16xf32> -> vector<8x16xf32>
    %71 = vector.extract_strided_slice %54 {offsets = [4, 0, 0], sizes = [1, 8, 8], strides = [1, 1, 1]} : vector<8x8x8xf32> to vector<1x8x8xf32>
    %72 = vector.shape_cast %71 : vector<1x8x8xf32> to vector<8x8xf32>
    %73 = vector.extract_strided_slice %12 {offsets = [0, 320], sizes = [8, 16], strides = [1, 1]} : vector<8x384xf32> to vector<8x16xf32>
    %cst_30 = arith.constant dense<0.000000e+00> : vector<8x16xf32>
    %74 = tpu.matmul %72, %73, %cst_30 {dimension_numbers = #tpu.dot_dimension_numbers<[1], [0], [0], [1], [0, 0, 1, 1], [], []>} : vector<8x8xf32>, vector<8x16xf32>, vector<8x16xf32> -> vector<8x16xf32>
    %75 = vector.extract_strided_slice %54 {offsets = [5, 0, 0], sizes = [1, 8, 8], strides = [1, 1, 1]} : vector<8x8x8xf32> to vector<1x8x8xf32>
    %76 = vector.shape_cast %75 : vector<1x8x8xf32> to vector<8x8xf32>
    %77 = vector.extract_strided_slice %12 {offsets = [0, 336], sizes = [8, 16], strides = [1, 1]} : vector<8x384xf32> to vector<8x16xf32>
    %cst_31 = arith.constant dense<0.000000e+00> : vector<8x16xf32>
    %78 = tpu.matmul %76, %77, %cst_31 {dimension_numbers = #tpu.dot_dimension_numbers<[1], [0], [0], [1], [0, 0, 1, 1], [], []>} : vector<8x8xf32>, vector<8x16xf32>, vector<8x16xf32> -> vector<8x16xf32>
    %79 = vector.extract_strided_slice %54 {offsets = [6, 0, 0], sizes = [1, 8, 8], strides = [1, 1, 1]} : vector<8x8x8xf32> to vector<1x8x8xf32>
    %80 = vector.shape_cast %79 : vector<1x8x8xf32> to vector<8x8xf32>
    %81 = vector.extract_strided_slice %12 {offsets = [0, 352], sizes = [8, 16], strides = [1, 1]} : vector<8x384xf32> to vector<8x16xf32>
    %cst_32 = arith.constant dense<0.000000e+00> : vector<8x16xf32>
    %82 = tpu.matmul %80, %81, %cst_32 {dimension_numbers = #tpu.dot_dimension_numbers<[1], [0], [0], [1], [0, 0, 1, 1], [], []>} : vector<8x8xf32>, vector<8x16xf32>, vector<8x16xf32> -> vector<8x16xf32>
    %83 = vector.extract_strided_slice %54 {offsets = [7, 0, 0], sizes = [1, 8, 8], strides = [1, 1, 1]} : vector<8x8x8xf32> to vector<1x8x8xf32>
    %84 = vector.shape_cast %83 : vector<1x8x8xf32> to vector<8x8xf32>
    %85 = vector.extract_strided_slice %12 {offsets = [0, 368], sizes = [8, 16], strides = [1, 1]} : vector<8x384xf32> to vector<8x16xf32>
    %cst_33 = arith.constant dense<0.000000e+00> : vector<8x16xf32>
    %86 = tpu.matmul %84, %85, %cst_33 {dimension_numbers = #tpu.dot_dimension_numbers<[1], [0], [0], [1], [0, 0, 1, 1], [], []>} : vector<8x8xf32>, vector<8x16xf32>, vector<8x16xf32> -> vector<8x16xf32>
    %87 = tpu.concatenate %58, %62, %66, %70, %74, %78, %82, %86 in 1 : vector<8x16xf32>, vector<8x16xf32>, vector<8x16xf32>, vector<8x16xf32>, vector<8x16xf32>, vector<8x16xf32>, vector<8x16xf32>, vector<8x16xf32> -> vector<8x128xf32>
    %c0_34 = arith.constant 0 : index
    %c0_35 = arith.constant 0 : index
    %c0_36 = arith.constant 0 : index
    %88 = vector.load %arg4[%c0_34, %c0_35, %c0_36] : memref<3x128x128xf32, #tpu.memory_space<vmem>>, vector<1x128x128xf32>
    %89 = vector.shape_cast %88 : vector<1x128x128xf32> to vector<128x128xf32>
    %cst_37 = arith.constant dense<0.000000e+00> : vector<8x128xf32>
    %90 = tpu.matmul %87, %89, %cst_37 {dimension_numbers = #tpu.dot_dimension_numbers<[1], [0], [0], [1], [0, 0, 1, 1], [], []>} : vector<8x128xf32>, vector<128x128xf32>, vector<8x128xf32> -> vector<8x128xf32>
    %c0_38 = arith.constant 0 : index
    %c0_39 = arith.constant 0 : index
    %c0_40 = arith.constant 0 : index
    %91 = vector.load %arg5[%c0_38, %c0_39, %c0_40] : memref<3x1x128xf32, #tpu.memory_space<vmem>>, vector<1x1x128xf32>
    %92 = vector.shape_cast %91 : vector<1x1x128xf32> to vector<1x128xf32>
    %93 = vector.broadcast %92 : vector<1x128xf32> to vector<8x128xf32>
    %94 = arith.addf %90, %93 : vector<8x128xf32>
    %95 = arith.addf %1, %94 : vector<8x128xf32>
    %96 = vector.extract_strided_slice %3 {offsets = [0, 0, 0], sizes = [1, 1, 128], strides = [1, 1, 1]} : vector<2x1x128xf32> to vector<1x1x128xf32>
    %97 = vector.shape_cast %96 : vector<1x1x128xf32> to vector<1x128xf32>
    %98 = vector.extract_strided_slice %5 {offsets = [0, 0, 0], sizes = [1, 1, 128], strides = [1, 1, 1]} : vector<2x1x128xf32> to vector<1x1x128xf32>
    %99 = vector.shape_cast %98 : vector<1x1x128xf32> to vector<1x128xf32>
    %cst_41 = arith.constant dense<0.000000e+00> : vector<8xf32>
    %100 = vector.multi_reduction <add>, %95, %cst_41 [1] : vector<8x128xf32> to vector<8xf32>
    %101 = vector.shape_cast %100 : vector<8xf32> to vector<8x1xf32>
    %cst_42 = arith.constant 1.280000e+02 : f32
    %102 = vector.broadcast %cst_42 : f32 to vector<8x1xf32>
    %103 = arith.divf %101, %102 : vector<8x1xf32>
    %104 = vector.broadcast %103 : vector<8x1xf32> to vector<8x128xf32>
    %105 = arith.subf %95, %104 : vector<8x128xf32>
    %106 = arith.mulf %105, %105 : vector<8x128xf32>
    %cst_43 = arith.constant dense<0.000000e+00> : vector<8xf32>
    %107 = vector.multi_reduction <add>, %106, %cst_43 [1] : vector<8x128xf32> to vector<8xf32>
    %108 = vector.shape_cast %107 : vector<8xf32> to vector<8x1xf32>
    %cst_44 = arith.constant 1.280000e+02 : f32
    %109 = vector.broadcast %cst_44 : f32 to vector<8x1xf32>
    %110 = arith.divf %108, %109 : vector<8x1xf32>
    %111 = vector.broadcast %103 : vector<8x1xf32> to vector<8x128xf32>
    %112 = arith.subf %95, %111 : vector<8x128xf32>
    %cst_45 = arith.constant 9.99999974E-6 : f32
    %113 = vector.broadcast %cst_45 : f32 to vector<8x1xf32>
    %114 = arith.addf %110, %113 : vector<8x1xf32>
    %115 = math.rsqrt %114 : vector<8x1xf32>
    %116 = vector.broadcast %115 : vector<8x1xf32> to vector<8x128xf32>
    %117 = arith.mulf %112, %116 : vector<8x128xf32>
    %118 = vector.broadcast %97 : vector<1x128xf32> to vector<8x128xf32>
    %119 = arith.mulf %117, %118 : vector<8x128xf32>
    %120 = vector.broadcast %99 : vector<1x128xf32> to vector<8x128xf32>
    %121 = arith.addf %119, %120 : vector<8x128xf32>
    %c0_46 = arith.constant 0 : index
    %c0_47 = arith.constant 0 : index
    %c0_48 = arith.constant 0 : index
    %122 = vector.load %arg6[%c0_46, %c0_47, %c0_48] : memref<3x128x512xf32, #tpu.memory_space<vmem>>, vector<1x128x512xf32>
    %123 = vector.shape_cast %122 : vector<1x128x512xf32> to vector<128x512xf32>
    %cst_49 = arith.constant dense<0.000000e+00> : vector<8x512xf32>
    %124 = tpu.matmul %121, %123, %cst_49 {dimension_numbers = #tpu.dot_dimension_numbers<[1], [0], [0], [1], [0, 0, 1, 1], [], []>} : vector<8x128xf32>, vector<128x512xf32>, vector<8x512xf32> -> vector<8x512xf32>
    %c0_50 = arith.constant 0 : index
    %c0_51 = arith.constant 0 : index
    %c0_52 = arith.constant 0 : index
    %125 = vector.load %arg7[%c0_50, %c0_51, %c0_52] : memref<3x1x512xf32, #tpu.memory_space<vmem>>, vector<1x1x512xf32>
    %126 = vector.shape_cast %125 : vector<1x1x512xf32> to vector<1x512xf32>
    %127 = vector.broadcast %126 : vector<1x512xf32> to vector<8x512xf32>
    %128 = arith.addf %124, %127 : vector<8x512xf32>
    %cst_53 = arith.constant 0.000000e+00 : f32
    %129 = vector.broadcast %cst_53 : f32 to vector<8x512xf32>
    %130 = arith.maximumf %128, %129 : vector<8x512xf32>
    %c0_54 = arith.constant 0 : index
    %c0_55 = arith.constant 0 : index
    %c0_56 = arith.constant 0 : index
    %131 = vector.load %arg8[%c0_54, %c0_55, %c0_56] : memref<3x512x128xf32, #tpu.memory_space<vmem>>, vector<1x512x128xf32>
    %132 = vector.shape_cast %131 : vector<1x512x128xf32> to vector<512x128xf32>
    %cst_57 = arith.constant dense<0.000000e+00> : vector<8x128xf32>
    %133 = tpu.matmul %130, %132, %cst_57 {dimension_numbers = #tpu.dot_dimension_numbers<[1], [0], [0], [1], [0, 0, 1, 1], [], []>} : vector<8x512xf32>, vector<512x128xf32>, vector<8x128xf32> -> vector<8x128xf32>
    %c0_58 = arith.constant 0 : index
    %c0_59 = arith.constant 0 : index
    %c0_60 = arith.constant 0 : index
    %134 = vector.load %arg9[%c0_58, %c0_59, %c0_60] : memref<3x1x128xf32, #tpu.memory_space<vmem>>, vector<1x1x128xf32>
    %135 = vector.shape_cast %134 : vector<1x1x128xf32> to vector<1x128xf32>
    %136 = vector.broadcast %135 : vector<1x128xf32> to vector<8x128xf32>
    %137 = arith.addf %133, %136 : vector<8x128xf32>
    %138 = arith.addf %121, %137 : vector<8x128xf32>
    %139 = vector.extract_strided_slice %3 {offsets = [1, 0, 0], sizes = [1, 1, 128], strides = [1, 1, 1]} : vector<2x1x128xf32> to vector<1x1x128xf32>
    %140 = vector.shape_cast %139 : vector<1x1x128xf32> to vector<1x128xf32>
    %141 = vector.extract_strided_slice %5 {offsets = [1, 0, 0], sizes = [1, 1, 128], strides = [1, 1, 1]} : vector<2x1x128xf32> to vector<1x1x128xf32>
    %142 = vector.shape_cast %141 : vector<1x1x128xf32> to vector<1x128xf32>
    %cst_61 = arith.constant dense<0.000000e+00> : vector<8xf32>
    %143 = vector.multi_reduction <add>, %138, %cst_61 [1] : vector<8x128xf32> to vector<8xf32>
    %144 = vector.shape_cast %143 : vector<8xf32> to vector<8x1xf32>
    %cst_62 = arith.constant 1.280000e+02 : f32
    %145 = vector.broadcast %cst_62 : f32 to vector<8x1xf32>
    %146 = arith.divf %144, %145 : vector<8x1xf32>
    %147 = vector.broadcast %146 : vector<8x1xf32> to vector<8x128xf32>
    %148 = arith.subf %138, %147 : vector<8x128xf32>
    %149 = arith.mulf %148, %148 : vector<8x128xf32>
    %cst_63 = arith.constant dense<0.000000e+00> : vector<8xf32>
    %150 = vector.multi_reduction <add>, %149, %cst_63 [1] : vector<8x128xf32> to vector<8xf32>
    %151 = vector.shape_cast %150 : vector<8xf32> to vector<8x1xf32>
    %cst_64 = arith.constant 1.280000e+02 : f32
    %152 = vector.broadcast %cst_64 : f32 to vector<8x1xf32>
    %153 = arith.divf %151, %152 : vector<8x1xf32>
    %154 = vector.broadcast %146 : vector<8x1xf32> to vector<8x128xf32>
    %155 = arith.subf %138, %154 : vector<8x128xf32>
    %cst_65 = arith.constant 9.99999974E-6 : f32
    %156 = vector.broadcast %cst_65 : f32 to vector<8x1xf32>
    %157 = arith.addf %153, %156 : vector<8x1xf32>
    %158 = math.rsqrt %157 : vector<8x1xf32>
    %159 = vector.broadcast %158 : vector<8x1xf32> to vector<8x128xf32>
    %160 = arith.mulf %155, %159 : vector<8x128xf32>
    %161 = vector.broadcast %140 : vector<1x128xf32> to vector<8x128xf32>
    %162 = arith.mulf %160, %161 : vector<8x128xf32>
    %163 = vector.broadcast %142 : vector<1x128xf32> to vector<8x128xf32>
    %164 = arith.addf %162, %163 : vector<8x128xf32>
    %c1 = arith.constant 1 : index
    %c0_66 = arith.constant 0 : index
    %c0_67 = arith.constant 0 : index
    %c0_68 = arith.constant 0 : index
    %165 = vector.load %arg10[%c1, %c0_66, %c0_67, %c0_68] : memref<3x2x1x128xf32, #tpu.memory_space<vmem>>, vector<1x2x1x128xf32>
    %166 = vector.shape_cast %165 : vector<1x2x1x128xf32> to vector<2x1x128xf32>
    %c1_69 = arith.constant 1 : index
    %c0_70 = arith.constant 0 : index
    %c0_71 = arith.constant 0 : index
    %c0_72 = arith.constant 0 : index
    %167 = vector.load %arg11[%c1_69, %c0_70, %c0_71, %c0_72] : memref<3x2x1x128xf32, #tpu.memory_space<vmem>>, vector<1x2x1x128xf32>
    %168 = vector.shape_cast %167 : vector<1x2x1x128xf32> to vector<2x1x128xf32>
    %c1_73 = arith.constant 1 : index
    %c0_74 = arith.constant 0 : index
    %c0_75 = arith.constant 0 : index
    %169 = vector.load %arg2[%c1_73, %c0_74, %c0_75] : memref<3x128x384xf32, #tpu.memory_space<vmem>>, vector<1x128x384xf32>
    %170 = vector.shape_cast %169 : vector<1x128x384xf32> to vector<128x384xf32>
    %cst_76 = arith.constant dense<0.000000e+00> : vector<8x384xf32>
    %171 = tpu.matmul %164, %170, %cst_76 {dimension_numbers = #tpu.dot_dimension_numbers<[1], [0], [0], [1], [0, 0, 1, 1], [], []>} : vector<8x128xf32>, vector<128x384xf32>, vector<8x384xf32> -> vector<8x384xf32>
    %c1_77 = arith.constant 1 : index
    %c0_78 = arith.constant 0 : index
    %c0_79 = arith.constant 0 : index
    %172 = vector.load %arg3[%c1_77, %c0_78, %c0_79] : memref<3x1x384xf32, #tpu.memory_space<vmem>>, vector<1x1x384xf32>
    %173 = vector.shape_cast %172 : vector<1x1x384xf32> to vector<1x384xf32>
    %174 = vector.broadcast %173 : vector<1x384xf32> to vector<8x384xf32>
    %175 = arith.addf %171, %174 : vector<8x384xf32>
    %176 = vector.extract_strided_slice %175 {offsets = [0, 0], sizes = [8, 16], strides = [1, 1]} : vector<8x384xf32> to vector<8x16xf32>
    %177 = vector.extract_strided_slice %175 {offsets = [0, 128], sizes = [8, 16], strides = [1, 1]} : vector<8x384xf32> to vector<8x16xf32>
    %cst_80 = arith.constant dense<0.000000e+00> : vector<8x8xf32>
    %178 = tpu.matmul %176, %177, %cst_80 {dimension_numbers = #tpu.dot_dimension_numbers<[1], [1], [0], [0], [0, 0, 1, 0], [], []>} : vector<8x16xf32>, vector<8x16xf32>, vector<8x8xf32> -> vector<8x8xf32>
    %179 = vector.extract_strided_slice %175 {offsets = [0, 16], sizes = [8, 16], strides = [1, 1]} : vector<8x384xf32> to vector<8x16xf32>
    %180 = vector.extract_strided_slice %175 {offsets = [0, 144], sizes = [8, 16], strides = [1, 1]} : vector<8x384xf32> to vector<8x16xf32>
    %cst_81 = arith.constant dense<0.000000e+00> : vector<8x8xf32>
    %181 = tpu.matmul %179, %180, %cst_81 {dimension_numbers = #tpu.dot_dimension_numbers<[1], [1], [0], [0], [0, 0, 1, 0], [], []>} : vector<8x16xf32>, vector<8x16xf32>, vector<8x8xf32> -> vector<8x8xf32>
    %182 = vector.extract_strided_slice %175 {offsets = [0, 32], sizes = [8, 16], strides = [1, 1]} : vector<8x384xf32> to vector<8x16xf32>
    %183 = vector.extract_strided_slice %175 {offsets = [0, 160], sizes = [8, 16], strides = [1, 1]} : vector<8x384xf32> to vector<8x16xf32>
    %cst_82 = arith.constant dense<0.000000e+00> : vector<8x8xf32>
    %184 = tpu.matmul %182, %183, %cst_82 {dimension_numbers = #tpu.dot_dimension_numbers<[1], [1], [0], [0], [0, 0, 1, 0], [], []>} : vector<8x16xf32>, vector<8x16xf32>, vector<8x8xf32> -> vector<8x8xf32>
    %185 = vector.extract_strided_slice %175 {offsets = [0, 48], sizes = [8, 16], strides = [1, 1]} : vector<8x384xf32> to vector<8x16xf32>
    %186 = vector.extract_strided_slice %175 {offsets = [0, 176], sizes = [8, 16], strides = [1, 1]} : vector<8x384xf32> to vector<8x16xf32>
    %cst_83 = arith.constant dense<0.000000e+00> : vector<8x8xf32>
    %187 = tpu.matmul %185, %186, %cst_83 {dimension_numbers = #tpu.dot_dimension_numbers<[1], [1], [0], [0], [0, 0, 1, 0], [], []>} : vector<8x16xf32>, vector<8x16xf32>, vector<8x8xf32> -> vector<8x8xf32>
    %188 = vector.extract_strided_slice %175 {offsets = [0, 64], sizes = [8, 16], strides = [1, 1]} : vector<8x384xf32> to vector<8x16xf32>
    %189 = vector.extract_strided_slice %175 {offsets = [0, 192], sizes = [8, 16], strides = [1, 1]} : vector<8x384xf32> to vector<8x16xf32>
    %cst_84 = arith.constant dense<0.000000e+00> : vector<8x8xf32>
    %190 = tpu.matmul %188, %189, %cst_84 {dimension_numbers = #tpu.dot_dimension_numbers<[1], [1], [0], [0], [0, 0, 1, 0], [], []>} : vector<8x16xf32>, vector<8x16xf32>, vector<8x8xf32> -> vector<8x8xf32>
    %191 = vector.extract_strided_slice %175 {offsets = [0, 80], sizes = [8, 16], strides = [1, 1]} : vector<8x384xf32> to vector<8x16xf32>
    %192 = vector.extract_strided_slice %175 {offsets = [0, 208], sizes = [8, 16], strides = [1, 1]} : vector<8x384xf32> to vector<8x16xf32>
    %cst_85 = arith.constant dense<0.000000e+00> : vector<8x8xf32>
    %193 = tpu.matmul %191, %192, %cst_85 {dimension_numbers = #tpu.dot_dimension_numbers<[1], [1], [0], [0], [0, 0, 1, 0], [], []>} : vector<8x16xf32>, vector<8x16xf32>, vector<8x8xf32> -> vector<8x8xf32>
    %194 = vector.extract_strided_slice %175 {offsets = [0, 96], sizes = [8, 16], strides = [1, 1]} : vector<8x384xf32> to vector<8x16xf32>
    %195 = vector.extract_strided_slice %175 {offsets = [0, 224], sizes = [8, 16], strides = [1, 1]} : vector<8x384xf32> to vector<8x16xf32>
    %cst_86 = arith.constant dense<0.000000e+00> : vector<8x8xf32>
    %196 = tpu.matmul %194, %195, %cst_86 {dimension_numbers = #tpu.dot_dimension_numbers<[1], [1], [0], [0], [0, 0, 1, 0], [], []>} : vector<8x16xf32>, vector<8x16xf32>, vector<8x8xf32> -> vector<8x8xf32>
    %197 = vector.extract_strided_slice %175 {offsets = [0, 112], sizes = [8, 16], strides = [1, 1]} : vector<8x384xf32> to vector<8x16xf32>
    %198 = vector.extract_strided_slice %175 {offsets = [0, 240], sizes = [8, 16], strides = [1, 1]} : vector<8x384xf32> to vector<8x16xf32>
    %cst_87 = arith.constant dense<0.000000e+00> : vector<8x8xf32>
    %199 = tpu.matmul %197, %198, %cst_87 {dimension_numbers = #tpu.dot_dimension_numbers<[1], [1], [0], [0], [0, 0, 1, 0], [], []>} : vector<8x16xf32>, vector<8x16xf32>, vector<8x8xf32> -> vector<8x8xf32>
    %200 = vector.shape_cast %178 : vector<8x8xf32> to vector<1x8x8xf32>
    %201 = vector.shape_cast %181 : vector<8x8xf32> to vector<1x8x8xf32>
    %202 = vector.shape_cast %184 : vector<8x8xf32> to vector<1x8x8xf32>
    %203 = vector.shape_cast %187 : vector<8x8xf32> to vector<1x8x8xf32>
    %204 = vector.shape_cast %190 : vector<8x8xf32> to vector<1x8x8xf32>
    %205 = vector.shape_cast %193 : vector<8x8xf32> to vector<1x8x8xf32>
    %206 = vector.shape_cast %196 : vector<8x8xf32> to vector<1x8x8xf32>
    %207 = vector.shape_cast %199 : vector<8x8xf32> to vector<1x8x8xf32>
    %208 = tpu.concatenate %200, %201, %202, %203, %204, %205, %206, %207 in 0 : vector<1x8x8xf32>, vector<1x8x8xf32>, vector<1x8x8xf32>, vector<1x8x8xf32>, vector<1x8x8xf32>, vector<1x8x8xf32>, vector<1x8x8xf32>, vector<1x8x8xf32> -> vector<8x8x8xf32>
    %cst_88 = arith.constant dense<0xFF800000> : vector<8x8xf32>
    %209 = vector.multi_reduction <maximumf>, %208, %cst_88 [2] : vector<8x8x8xf32> to vector<8x8xf32>
    %210 = vector.shape_cast %209 : vector<8x8xf32> to vector<8x8x1xf32>
    %211 = vector.broadcast %210 : vector<8x8x1xf32> to vector<8x8x8xf32>
    %212 = arith.subf %208, %211 : vector<8x8x8xf32>
    %213 = math.exp %212 : vector<8x8x8xf32>
    %cst_89 = arith.constant dense<0.000000e+00> : vector<8x8xf32>
    %214 = vector.multi_reduction <add>, %213, %cst_89 [2] : vector<8x8x8xf32> to vector<8x8xf32>
    %215 = vector.shape_cast %214 : vector<8x8xf32> to vector<8x8x1xf32>
    %216 = vector.broadcast %215 : vector<8x8x1xf32> to vector<8x8x8xf32>
    %217 = arith.divf %213, %216 : vector<8x8x8xf32>
    %218 = vector.extract_strided_slice %217 {offsets = [0, 0, 0], sizes = [1, 8, 8], strides = [1, 1, 1]} : vector<8x8x8xf32> to vector<1x8x8xf32>
    %219 = vector.shape_cast %218 : vector<1x8x8xf32> to vector<8x8xf32>
    %220 = vector.extract_strided_slice %175 {offsets = [0, 256], sizes = [8, 16], strides = [1, 1]} : vector<8x384xf32> to vector<8x16xf32>
    %cst_90 = arith.constant dense<0.000000e+00> : vector<8x16xf32>
    %221 = tpu.matmul %219, %220, %cst_90 {dimension_numbers = #tpu.dot_dimension_numbers<[1], [0], [0], [1], [0, 0, 1, 1], [], []>} : vector<8x8xf32>, vector<8x16xf32>, vector<8x16xf32> -> vector<8x16xf32>
    %222 = vector.extract_strided_slice %217 {offsets = [1, 0, 0], sizes = [1, 8, 8], strides = [1, 1, 1]} : vector<8x8x8xf32> to vector<1x8x8xf32>
    %223 = vector.shape_cast %222 : vector<1x8x8xf32> to vector<8x8xf32>
    %224 = vector.extract_strided_slice %175 {offsets = [0, 272], sizes = [8, 16], strides = [1, 1]} : vector<8x384xf32> to vector<8x16xf32>
    %cst_91 = arith.constant dense<0.000000e+00> : vector<8x16xf32>
    %225 = tpu.matmul %223, %224, %cst_91 {dimension_numbers = #tpu.dot_dimension_numbers<[1], [0], [0], [1], [0, 0, 1, 1], [], []>} : vector<8x8xf32>, vector<8x16xf32>, vector<8x16xf32> -> vector<8x16xf32>
    %226 = vector.extract_strided_slice %217 {offsets = [2, 0, 0], sizes = [1, 8, 8], strides = [1, 1, 1]} : vector<8x8x8xf32> to vector<1x8x8xf32>
    %227 = vector.shape_cast %226 : vector<1x8x8xf32> to vector<8x8xf32>
    %228 = vector.extract_strided_slice %175 {offsets = [0, 288], sizes = [8, 16], strides = [1, 1]} : vector<8x384xf32> to vector<8x16xf32>
    %cst_92 = arith.constant dense<0.000000e+00> : vector<8x16xf32>
    %229 = tpu.matmul %227, %228, %cst_92 {dimension_numbers = #tpu.dot_dimension_numbers<[1], [0], [0], [1], [0, 0, 1, 1], [], []>} : vector<8x8xf32>, vector<8x16xf32>, vector<8x16xf32> -> vector<8x16xf32>
    %230 = vector.extract_strided_slice %217 {offsets = [3, 0, 0], sizes = [1, 8, 8], strides = [1, 1, 1]} : vector<8x8x8xf32> to vector<1x8x8xf32>
    %231 = vector.shape_cast %230 : vector<1x8x8xf32> to vector<8x8xf32>
    %232 = vector.extract_strided_slice %175 {offsets = [0, 304], sizes = [8, 16], strides = [1, 1]} : vector<8x384xf32> to vector<8x16xf32>
    %cst_93 = arith.constant dense<0.000000e+00> : vector<8x16xf32>
    %233 = tpu.matmul %231, %232, %cst_93 {dimension_numbers = #tpu.dot_dimension_numbers<[1], [0], [0], [1], [0, 0, 1, 1], [], []>} : vector<8x8xf32>, vector<8x16xf32>, vector<8x16xf32> -> vector<8x16xf32>
    %234 = vector.extract_strided_slice %217 {offsets = [4, 0, 0], sizes = [1, 8, 8], strides = [1, 1, 1]} : vector<8x8x8xf32> to vector<1x8x8xf32>
    %235 = vector.shape_cast %234 : vector<1x8x8xf32> to vector<8x8xf32>
    %236 = vector.extract_strided_slice %175 {offsets = [0, 320], sizes = [8, 16], strides = [1, 1]} : vector<8x384xf32> to vector<8x16xf32>
    %cst_94 = arith.constant dense<0.000000e+00> : vector<8x16xf32>
    %237 = tpu.matmul %235, %236, %cst_94 {dimension_numbers = #tpu.dot_dimension_numbers<[1], [0], [0], [1], [0, 0, 1, 1], [], []>} : vector<8x8xf32>, vector<8x16xf32>, vector<8x16xf32> -> vector<8x16xf32>
    %238 = vector.extract_strided_slice %217 {offsets = [5, 0, 0], sizes = [1, 8, 8], strides = [1, 1, 1]} : vector<8x8x8xf32> to vector<1x8x8xf32>
    %239 = vector.shape_cast %238 : vector<1x8x8xf32> to vector<8x8xf32>
    %240 = vector.extract_strided_slice %175 {offsets = [0, 336], sizes = [8, 16], strides = [1, 1]} : vector<8x384xf32> to vector<8x16xf32>
    %cst_95 = arith.constant dense<0.000000e+00> : vector<8x16xf32>
    %241 = tpu.matmul %239, %240, %cst_95 {dimension_numbers = #tpu.dot_dimension_numbers<[1], [0], [0], [1], [0, 0, 1, 1], [], []>} : vector<8x8xf32>, vector<8x16xf32>, vector<8x16xf32> -> vector<8x16xf32>
    %242 = vector.extract_strided_slice %217 {offsets = [6, 0, 0], sizes = [1, 8, 8], strides = [1, 1, 1]} : vector<8x8x8xf32> to vector<1x8x8xf32>
    %243 = vector.shape_cast %242 : vector<1x8x8xf32> to vector<8x8xf32>
    %244 = vector.extract_strided_slice %175 {offsets = [0, 352], sizes = [8, 16], strides = [1, 1]} : vector<8x384xf32> to vector<8x16xf32>
    %cst_96 = arith.constant dense<0.000000e+00> : vector<8x16xf32>
    %245 = tpu.matmul %243, %244, %cst_96 {dimension_numbers = #tpu.dot_dimension_numbers<[1], [0], [0], [1], [0, 0, 1, 1], [], []>} : vector<8x8xf32>, vector<8x16xf32>, vector<8x16xf32> -> vector<8x16xf32>
    %246 = vector.extract_strided_slice %217 {offsets = [7, 0, 0], sizes = [1, 8, 8], strides = [1, 1, 1]} : vector<8x8x8xf32> to vector<1x8x8xf32>
    %247 = vector.shape_cast %246 : vector<1x8x8xf32> to vector<8x8xf32>
    %248 = vector.extract_strided_slice %175 {offsets = [0, 368], sizes = [8, 16], strides = [1, 1]} : vector<8x384xf32> to vector<8x16xf32>
    %cst_97 = arith.constant dense<0.000000e+00> : vector<8x16xf32>
    %249 = tpu.matmul %247, %248, %cst_97 {dimension_numbers = #tpu.dot_dimension_numbers<[1], [0], [0], [1], [0, 0, 1, 1], [], []>} : vector<8x8xf32>, vector<8x16xf32>, vector<8x16xf32> -> vector<8x16xf32>
    %250 = tpu.concatenate %221, %225, %229, %233, %237, %241, %245, %249 in 1 : vector<8x16xf32>, vector<8x16xf32>, vector<8x16xf32>, vector<8x16xf32>, vector<8x16xf32>, vector<8x16xf32>, vector<8x16xf32>, vector<8x16xf32> -> vector<8x128xf32>
    %c1_98 = arith.constant 1 : index
    %c0_99 = arith.constant 0 : index
    %c0_100 = arith.constant 0 : index
    %251 = vector.load %arg4[%c1_98, %c0_99, %c0_100] : memref<3x128x128xf32, #tpu.memory_space<vmem>>, vector<1x128x128xf32>
    %252 = vector.shape_cast %251 : vector<1x128x128xf32> to vector<128x128xf32>
    %cst_101 = arith.constant dense<0.000000e+00> : vector<8x128xf32>
    %253 = tpu.matmul %250, %252, %cst_101 {dimension_numbers = #tpu.dot_dimension_numbers<[1], [0], [0], [1], [0, 0, 1, 1], [], []>} : vector<8x128xf32>, vector<128x128xf32>, vector<8x128xf32> -> vector<8x128xf32>
    %c1_102 = arith.constant 1 : index
    %c0_103 = arith.constant 0 : index
    %c0_104 = arith.constant 0 : index
    %254 = vector.load %arg5[%c1_102, %c0_103, %c0_104] : memref<3x1x128xf32, #tpu.memory_space<vmem>>, vector<1x1x128xf32>
    %255 = vector.shape_cast %254 : vector<1x1x128xf32> to vector<1x128xf32>
    %256 = vector.broadcast %255 : vector<1x128xf32> to vector<8x128xf32>
    %257 = arith.addf %253, %256 : vector<8x128xf32>
    %258 = arith.addf %164, %257 : vector<8x128xf32>
    %259 = vector.extract_strided_slice %166 {offsets = [0, 0, 0], sizes = [1, 1, 128], strides = [1, 1, 1]} : vector<2x1x128xf32> to vector<1x1x128xf32>
    %260 = vector.shape_cast %259 : vector<1x1x128xf32> to vector<1x128xf32>
    %261 = vector.extract_strided_slice %168 {offsets = [0, 0, 0], sizes = [1, 1, 128], strides = [1, 1, 1]} : vector<2x1x128xf32> to vector<1x1x128xf32>
    %262 = vector.shape_cast %261 : vector<1x1x128xf32> to vector<1x128xf32>
    %cst_105 = arith.constant dense<0.000000e+00> : vector<8xf32>
    %263 = vector.multi_reduction <add>, %258, %cst_105 [1] : vector<8x128xf32> to vector<8xf32>
    %264 = vector.shape_cast %263 : vector<8xf32> to vector<8x1xf32>
    %cst_106 = arith.constant 1.280000e+02 : f32
    %265 = vector.broadcast %cst_106 : f32 to vector<8x1xf32>
    %266 = arith.divf %264, %265 : vector<8x1xf32>
    %267 = vector.broadcast %266 : vector<8x1xf32> to vector<8x128xf32>
    %268 = arith.subf %258, %267 : vector<8x128xf32>
    %269 = arith.mulf %268, %268 : vector<8x128xf32>
    %cst_107 = arith.constant dense<0.000000e+00> : vector<8xf32>
    %270 = vector.multi_reduction <add>, %269, %cst_107 [1] : vector<8x128xf32> to vector<8xf32>
    %271 = vector.shape_cast %270 : vector<8xf32> to vector<8x1xf32>
    %cst_108 = arith.constant 1.280000e+02 : f32
    %272 = vector.broadcast %cst_108 : f32 to vector<8x1xf32>
    %273 = arith.divf %271, %272 : vector<8x1xf32>
    %274 = vector.broadcast %266 : vector<8x1xf32> to vector<8x128xf32>
    %275 = arith.subf %258, %274 : vector<8x128xf32>
    %cst_109 = arith.constant 9.99999974E-6 : f32
    %276 = vector.broadcast %cst_109 : f32 to vector<8x1xf32>
    %277 = arith.addf %273, %276 : vector<8x1xf32>
    %278 = math.rsqrt %277 : vector<8x1xf32>
    %279 = vector.broadcast %278 : vector<8x1xf32> to vector<8x128xf32>
    %280 = arith.mulf %275, %279 : vector<8x128xf32>
    %281 = vector.broadcast %260 : vector<1x128xf32> to vector<8x128xf32>
    %282 = arith.mulf %280, %281 : vector<8x128xf32>
    %283 = vector.broadcast %262 : vector<1x128xf32> to vector<8x128xf32>
    %284 = arith.addf %282, %283 : vector<8x128xf32>
    %c1_110 = arith.constant 1 : index
    %c0_111 = arith.constant 0 : index
    %c0_112 = arith.constant 0 : index
    %285 = vector.load %arg6[%c1_110, %c0_111, %c0_112] : memref<3x128x512xf32, #tpu.memory_space<vmem>>, vector<1x128x512xf32>
    %286 = vector.shape_cast %285 : vector<1x128x512xf32> to vector<128x512xf32>
    %cst_113 = arith.constant dense<0.000000e+00> : vector<8x512xf32>
    %287 = tpu.matmul %284, %286, %cst_113 {dimension_numbers = #tpu.dot_dimension_numbers<[1], [0], [0], [1], [0, 0, 1, 1], [], []>} : vector<8x128xf32>, vector<128x512xf32>, vector<8x512xf32> -> vector<8x512xf32>
    %c1_114 = arith.constant 1 : index
    %c0_115 = arith.constant 0 : index
    %c0_116 = arith.constant 0 : index
    %288 = vector.load %arg7[%c1_114, %c0_115, %c0_116] : memref<3x1x512xf32, #tpu.memory_space<vmem>>, vector<1x1x512xf32>
    %289 = vector.shape_cast %288 : vector<1x1x512xf32> to vector<1x512xf32>
    %290 = vector.broadcast %289 : vector<1x512xf32> to vector<8x512xf32>
    %291 = arith.addf %287, %290 : vector<8x512xf32>
    %cst_117 = arith.constant 0.000000e+00 : f32
    %292 = vector.broadcast %cst_117 : f32 to vector<8x512xf32>
    %293 = arith.maximumf %291, %292 : vector<8x512xf32>
    %c1_118 = arith.constant 1 : index
    %c0_119 = arith.constant 0 : index
    %c0_120 = arith.constant 0 : index
    %294 = vector.load %arg8[%c1_118, %c0_119, %c0_120] : memref<3x512x128xf32, #tpu.memory_space<vmem>>, vector<1x512x128xf32>
    %295 = vector.shape_cast %294 : vector<1x512x128xf32> to vector<512x128xf32>
    %cst_121 = arith.constant dense<0.000000e+00> : vector<8x128xf32>
    %296 = tpu.matmul %293, %295, %cst_121 {dimension_numbers = #tpu.dot_dimension_numbers<[1], [0], [0], [1], [0, 0, 1, 1], [], []>} : vector<8x512xf32>, vector<512x128xf32>, vector<8x128xf32> -> vector<8x128xf32>
    %c1_122 = arith.constant 1 : index
    %c0_123 = arith.constant 0 : index
    %c0_124 = arith.constant 0 : index
    %297 = vector.load %arg9[%c1_122, %c0_123, %c0_124] : memref<3x1x128xf32, #tpu.memory_space<vmem>>, vector<1x1x128xf32>
    %298 = vector.shape_cast %297 : vector<1x1x128xf32> to vector<1x128xf32>
    %299 = vector.broadcast %298 : vector<1x128xf32> to vector<8x128xf32>
    %300 = arith.addf %296, %299 : vector<8x128xf32>
    %301 = arith.addf %284, %300 : vector<8x128xf32>
    %302 = vector.extract_strided_slice %166 {offsets = [1, 0, 0], sizes = [1, 1, 128], strides = [1, 1, 1]} : vector<2x1x128xf32> to vector<1x1x128xf32>
    %303 = vector.shape_cast %302 : vector<1x1x128xf32> to vector<1x128xf32>
    %304 = vector.extract_strided_slice %168 {offsets = [1, 0, 0], sizes = [1, 1, 128], strides = [1, 1, 1]} : vector<2x1x128xf32> to vector<1x1x128xf32>
    %305 = vector.shape_cast %304 : vector<1x1x128xf32> to vector<1x128xf32>
    %cst_125 = arith.constant dense<0.000000e+00> : vector<8xf32>
    %306 = vector.multi_reduction <add>, %301, %cst_125 [1] : vector<8x128xf32> to vector<8xf32>
    %307 = vector.shape_cast %306 : vector<8xf32> to vector<8x1xf32>
    %cst_126 = arith.constant 1.280000e+02 : f32
    %308 = vector.broadcast %cst_126 : f32 to vector<8x1xf32>
    %309 = arith.divf %307, %308 : vector<8x1xf32>
    %310 = vector.broadcast %309 : vector<8x1xf32> to vector<8x128xf32>
    %311 = arith.subf %301, %310 : vector<8x128xf32>
    %312 = arith.mulf %311, %311 : vector<8x128xf32>
    %cst_127 = arith.constant dense<0.000000e+00> : vector<8xf32>
    %313 = vector.multi_reduction <add>, %312, %cst_127 [1] : vector<8x128xf32> to vector<8xf32>
    %314 = vector.shape_cast %313 : vector<8xf32> to vector<8x1xf32>
    %cst_128 = arith.constant 1.280000e+02 : f32
    %315 = vector.broadcast %cst_128 : f32 to vector<8x1xf32>
    %316 = arith.divf %314, %315 : vector<8x1xf32>
    %317 = vector.broadcast %309 : vector<8x1xf32> to vector<8x128xf32>
    %318 = arith.subf %301, %317 : vector<8x128xf32>
    %cst_129 = arith.constant 9.99999974E-6 : f32
    %319 = vector.broadcast %cst_129 : f32 to vector<8x1xf32>
    %320 = arith.addf %316, %319 : vector<8x1xf32>
    %321 = math.rsqrt %320 : vector<8x1xf32>
    %322 = vector.broadcast %321 : vector<8x1xf32> to vector<8x128xf32>
    %323 = arith.mulf %318, %322 : vector<8x128xf32>
    %324 = vector.broadcast %303 : vector<1x128xf32> to vector<8x128xf32>
    %325 = arith.mulf %323, %324 : vector<8x128xf32>
    %326 = vector.broadcast %305 : vector<1x128xf32> to vector<8x128xf32>
    %327 = arith.addf %325, %326 : vector<8x128xf32>
    %c2 = arith.constant 2 : index
    %c0_130 = arith.constant 0 : index
    %c0_131 = arith.constant 0 : index
    %c0_132 = arith.constant 0 : index
    %328 = vector.load %arg10[%c2, %c0_130, %c0_131, %c0_132] : memref<3x2x1x128xf32, #tpu.memory_space<vmem>>, vector<1x2x1x128xf32>
    %329 = vector.shape_cast %328 : vector<1x2x1x128xf32> to vector<2x1x128xf32>
    %c2_133 = arith.constant 2 : index
    %c0_134 = arith.constant 0 : index
    %c0_135 = arith.constant 0 : index
    %c0_136 = arith.constant 0 : index
    %330 = vector.load %arg11[%c2_133, %c0_134, %c0_135, %c0_136] : memref<3x2x1x128xf32, #tpu.memory_space<vmem>>, vector<1x2x1x128xf32>
    %331 = vector.shape_cast %330 : vector<1x2x1x128xf32> to vector<2x1x128xf32>
    %c2_137 = arith.constant 2 : index
    %c0_138 = arith.constant 0 : index
    %c0_139 = arith.constant 0 : index
    %332 = vector.load %arg2[%c2_137, %c0_138, %c0_139] : memref<3x128x384xf32, #tpu.memory_space<vmem>>, vector<1x128x384xf32>
    %333 = vector.shape_cast %332 : vector<1x128x384xf32> to vector<128x384xf32>
    %cst_140 = arith.constant dense<0.000000e+00> : vector<8x384xf32>
    %334 = tpu.matmul %327, %333, %cst_140 {dimension_numbers = #tpu.dot_dimension_numbers<[1], [0], [0], [1], [0, 0, 1, 1], [], []>} : vector<8x128xf32>, vector<128x384xf32>, vector<8x384xf32> -> vector<8x384xf32>
    %c2_141 = arith.constant 2 : index
    %c0_142 = arith.constant 0 : index
    %c0_143 = arith.constant 0 : index
    %335 = vector.load %arg3[%c2_141, %c0_142, %c0_143] : memref<3x1x384xf32, #tpu.memory_space<vmem>>, vector<1x1x384xf32>
    %336 = vector.shape_cast %335 : vector<1x1x384xf32> to vector<1x384xf32>
    %337 = vector.broadcast %336 : vector<1x384xf32> to vector<8x384xf32>
    %338 = arith.addf %334, %337 : vector<8x384xf32>
    %339 = vector.extract_strided_slice %338 {offsets = [0, 0], sizes = [8, 16], strides = [1, 1]} : vector<8x384xf32> to vector<8x16xf32>
    %340 = vector.extract_strided_slice %338 {offsets = [0, 128], sizes = [8, 16], strides = [1, 1]} : vector<8x384xf32> to vector<8x16xf32>
    %cst_144 = arith.constant dense<0.000000e+00> : vector<8x8xf32>
    %341 = tpu.matmul %339, %340, %cst_144 {dimension_numbers = #tpu.dot_dimension_numbers<[1], [1], [0], [0], [0, 0, 1, 0], [], []>} : vector<8x16xf32>, vector<8x16xf32>, vector<8x8xf32> -> vector<8x8xf32>
    %342 = vector.extract_strided_slice %338 {offsets = [0, 16], sizes = [8, 16], strides = [1, 1]} : vector<8x384xf32> to vector<8x16xf32>
    %343 = vector.extract_strided_slice %338 {offsets = [0, 144], sizes = [8, 16], strides = [1, 1]} : vector<8x384xf32> to vector<8x16xf32>
    %cst_145 = arith.constant dense<0.000000e+00> : vector<8x8xf32>
    %344 = tpu.matmul %342, %343, %cst_145 {dimension_numbers = #tpu.dot_dimension_numbers<[1], [1], [0], [0], [0, 0, 1, 0], [], []>} : vector<8x16xf32>, vector<8x16xf32>, vector<8x8xf32> -> vector<8x8xf32>
    %345 = vector.extract_strided_slice %338 {offsets = [0, 32], sizes = [8, 16], strides = [1, 1]} : vector<8x384xf32> to vector<8x16xf32>
    %346 = vector.extract_strided_slice %338 {offsets = [0, 160], sizes = [8, 16], strides = [1, 1]} : vector<8x384xf32> to vector<8x16xf32>
    %cst_146 = arith.constant dense<0.000000e+00> : vector<8x8xf32>
    %347 = tpu.matmul %345, %346, %cst_146 {dimension_numbers = #tpu.dot_dimension_numbers<[1], [1], [0], [0], [0, 0, 1, 0], [], []>} : vector<8x16xf32>, vector<8x16xf32>, vector<8x8xf32> -> vector<8x8xf32>
    %348 = vector.extract_strided_slice %338 {offsets = [0, 48], sizes = [8, 16], strides = [1, 1]} : vector<8x384xf32> to vector<8x16xf32>
    %349 = vector.extract_strided_slice %338 {offsets = [0, 176], sizes = [8, 16], strides = [1, 1]} : vector<8x384xf32> to vector<8x16xf32>
    %cst_147 = arith.constant dense<0.000000e+00> : vector<8x8xf32>
    %350 = tpu.matmul %348, %349, %cst_147 {dimension_numbers = #tpu.dot_dimension_numbers<[1], [1], [0], [0], [0, 0, 1, 0], [], []>} : vector<8x16xf32>, vector<8x16xf32>, vector<8x8xf32> -> vector<8x8xf32>
    %351 = vector.extract_strided_slice %338 {offsets = [0, 64], sizes = [8, 16], strides = [1, 1]} : vector<8x384xf32> to vector<8x16xf32>
    %352 = vector.extract_strided_slice %338 {offsets = [0, 192], sizes = [8, 16], strides = [1, 1]} : vector<8x384xf32> to vector<8x16xf32>
    %cst_148 = arith.constant dense<0.000000e+00> : vector<8x8xf32>
    %353 = tpu.matmul %351, %352, %cst_148 {dimension_numbers = #tpu.dot_dimension_numbers<[1], [1], [0], [0], [0, 0, 1, 0], [], []>} : vector<8x16xf32>, vector<8x16xf32>, vector<8x8xf32> -> vector<8x8xf32>
    %354 = vector.extract_strided_slice %338 {offsets = [0, 80], sizes = [8, 16], strides = [1, 1]} : vector<8x384xf32> to vector<8x16xf32>
    %355 = vector.extract_strided_slice %338 {offsets = [0, 208], sizes = [8, 16], strides = [1, 1]} : vector<8x384xf32> to vector<8x16xf32>
    %cst_149 = arith.constant dense<0.000000e+00> : vector<8x8xf32>
    %356 = tpu.matmul %354, %355, %cst_149 {dimension_numbers = #tpu.dot_dimension_numbers<[1], [1], [0], [0], [0, 0, 1, 0], [], []>} : vector<8x16xf32>, vector<8x16xf32>, vector<8x8xf32> -> vector<8x8xf32>
    %357 = vector.extract_strided_slice %338 {offsets = [0, 96], sizes = [8, 16], strides = [1, 1]} : vector<8x384xf32> to vector<8x16xf32>
    %358 = vector.extract_strided_slice %338 {offsets = [0, 224], sizes = [8, 16], strides = [1, 1]} : vector<8x384xf32> to vector<8x16xf32>
    %cst_150 = arith.constant dense<0.000000e+00> : vector<8x8xf32>
    %359 = tpu.matmul %357, %358, %cst_150 {dimension_numbers = #tpu.dot_dimension_numbers<[1], [1], [0], [0], [0, 0, 1, 0], [], []>} : vector<8x16xf32>, vector<8x16xf32>, vector<8x8xf32> -> vector<8x8xf32>
    %360 = vector.extract_strided_slice %338 {offsets = [0, 112], sizes = [8, 16], strides = [1, 1]} : vector<8x384xf32> to vector<8x16xf32>
    %361 = vector.extract_strided_slice %338 {offsets = [0, 240], sizes = [8, 16], strides = [1, 1]} : vector<8x384xf32> to vector<8x16xf32>
    %cst_151 = arith.constant dense<0.000000e+00> : vector<8x8xf32>
    %362 = tpu.matmul %360, %361, %cst_151 {dimension_numbers = #tpu.dot_dimension_numbers<[1], [1], [0], [0], [0, 0, 1, 0], [], []>} : vector<8x16xf32>, vector<8x16xf32>, vector<8x8xf32> -> vector<8x8xf32>
    %363 = vector.shape_cast %341 : vector<8x8xf32> to vector<1x8x8xf32>
    %364 = vector.shape_cast %344 : vector<8x8xf32> to vector<1x8x8xf32>
    %365 = vector.shape_cast %347 : vector<8x8xf32> to vector<1x8x8xf32>
    %366 = vector.shape_cast %350 : vector<8x8xf32> to vector<1x8x8xf32>
    %367 = vector.shape_cast %353 : vector<8x8xf32> to vector<1x8x8xf32>
    %368 = vector.shape_cast %356 : vector<8x8xf32> to vector<1x8x8xf32>
    %369 = vector.shape_cast %359 : vector<8x8xf32> to vector<1x8x8xf32>
    %370 = vector.shape_cast %362 : vector<8x8xf32> to vector<1x8x8xf32>
    %371 = tpu.concatenate %363, %364, %365, %366, %367, %368, %369, %370 in 0 : vector<1x8x8xf32>, vector<1x8x8xf32>, vector<1x8x8xf32>, vector<1x8x8xf32>, vector<1x8x8xf32>, vector<1x8x8xf32>, vector<1x8x8xf32>, vector<1x8x8xf32> -> vector<8x8x8xf32>
    %cst_152 = arith.constant dense<0xFF800000> : vector<8x8xf32>
    %372 = vector.multi_reduction <maximumf>, %371, %cst_152 [2] : vector<8x8x8xf32> to vector<8x8xf32>
    %373 = vector.shape_cast %372 : vector<8x8xf32> to vector<8x8x1xf32>
    %374 = vector.broadcast %373 : vector<8x8x1xf32> to vector<8x8x8xf32>
    %375 = arith.subf %371, %374 : vector<8x8x8xf32>
    %376 = math.exp %375 : vector<8x8x8xf32>
    %cst_153 = arith.constant dense<0.000000e+00> : vector<8x8xf32>
    %377 = vector.multi_reduction <add>, %376, %cst_153 [2] : vector<8x8x8xf32> to vector<8x8xf32>
    %378 = vector.shape_cast %377 : vector<8x8xf32> to vector<8x8x1xf32>
    %379 = vector.broadcast %378 : vector<8x8x1xf32> to vector<8x8x8xf32>
    %380 = arith.divf %376, %379 : vector<8x8x8xf32>
    %381 = vector.extract_strided_slice %380 {offsets = [0, 0, 0], sizes = [1, 8, 8], strides = [1, 1, 1]} : vector<8x8x8xf32> to vector<1x8x8xf32>
    %382 = vector.shape_cast %381 : vector<1x8x8xf32> to vector<8x8xf32>
    %383 = vector.extract_strided_slice %338 {offsets = [0, 256], sizes = [8, 16], strides = [1, 1]} : vector<8x384xf32> to vector<8x16xf32>
    %cst_154 = arith.constant dense<0.000000e+00> : vector<8x16xf32>
    %384 = tpu.matmul %382, %383, %cst_154 {dimension_numbers = #tpu.dot_dimension_numbers<[1], [0], [0], [1], [0, 0, 1, 1], [], []>} : vector<8x8xf32>, vector<8x16xf32>, vector<8x16xf32> -> vector<8x16xf32>
    %385 = vector.extract_strided_slice %380 {offsets = [1, 0, 0], sizes = [1, 8, 8], strides = [1, 1, 1]} : vector<8x8x8xf32> to vector<1x8x8xf32>
    %386 = vector.shape_cast %385 : vector<1x8x8xf32> to vector<8x8xf32>
    %387 = vector.extract_strided_slice %338 {offsets = [0, 272], sizes = [8, 16], strides = [1, 1]} : vector<8x384xf32> to vector<8x16xf32>
    %cst_155 = arith.constant dense<0.000000e+00> : vector<8x16xf32>
    %388 = tpu.matmul %386, %387, %cst_155 {dimension_numbers = #tpu.dot_dimension_numbers<[1], [0], [0], [1], [0, 0, 1, 1], [], []>} : vector<8x8xf32>, vector<8x16xf32>, vector<8x16xf32> -> vector<8x16xf32>
    %389 = vector.extract_strided_slice %380 {offsets = [2, 0, 0], sizes = [1, 8, 8], strides = [1, 1, 1]} : vector<8x8x8xf32> to vector<1x8x8xf32>
    %390 = vector.shape_cast %389 : vector<1x8x8xf32> to vector<8x8xf32>
    %391 = vector.extract_strided_slice %338 {offsets = [0, 288], sizes = [8, 16], strides = [1, 1]} : vector<8x384xf32> to vector<8x16xf32>
    %cst_156 = arith.constant dense<0.000000e+00> : vector<8x16xf32>
    %392 = tpu.matmul %390, %391, %cst_156 {dimension_numbers = #tpu.dot_dimension_numbers<[1], [0], [0], [1], [0, 0, 1, 1], [], []>} : vector<8x8xf32>, vector<8x16xf32>, vector<8x16xf32> -> vector<8x16xf32>
    %393 = vector.extract_strided_slice %380 {offsets = [3, 0, 0], sizes = [1, 8, 8], strides = [1, 1, 1]} : vector<8x8x8xf32> to vector<1x8x8xf32>
    %394 = vector.shape_cast %393 : vector<1x8x8xf32> to vector<8x8xf32>
    %395 = vector.extract_strided_slice %338 {offsets = [0, 304], sizes = [8, 16], strides = [1, 1]} : vector<8x384xf32> to vector<8x16xf32>
    %cst_157 = arith.constant dense<0.000000e+00> : vector<8x16xf32>
    %396 = tpu.matmul %394, %395, %cst_157 {dimension_numbers = #tpu.dot_dimension_numbers<[1], [0], [0], [1], [0, 0, 1, 1], [], []>} : vector<8x8xf32>, vector<8x16xf32>, vector<8x16xf32> -> vector<8x16xf32>
    %397 = vector.extract_strided_slice %380 {offsets = [4, 0, 0], sizes = [1, 8, 8], strides = [1, 1, 1]} : vector<8x8x8xf32> to vector<1x8x8xf32>
    %398 = vector.shape_cast %397 : vector<1x8x8xf32> to vector<8x8xf32>
    %399 = vector.extract_strided_slice %338 {offsets = [0, 320], sizes = [8, 16], strides = [1, 1]} : vector<8x384xf32> to vector<8x16xf32>
    %cst_158 = arith.constant dense<0.000000e+00> : vector<8x16xf32>
    %400 = tpu.matmul %398, %399, %cst_158 {dimension_numbers = #tpu.dot_dimension_numbers<[1], [0], [0], [1], [0, 0, 1, 1], [], []>} : vector<8x8xf32>, vector<8x16xf32>, vector<8x16xf32> -> vector<8x16xf32>
    %401 = vector.extract_strided_slice %380 {offsets = [5, 0, 0], sizes = [1, 8, 8], strides = [1, 1, 1]} : vector<8x8x8xf32> to vector<1x8x8xf32>
    %402 = vector.shape_cast %401 : vector<1x8x8xf32> to vector<8x8xf32>
    %403 = vector.extract_strided_slice %338 {offsets = [0, 336], sizes = [8, 16], strides = [1, 1]} : vector<8x384xf32> to vector<8x16xf32>
    %cst_159 = arith.constant dense<0.000000e+00> : vector<8x16xf32>
    %404 = tpu.matmul %402, %403, %cst_159 {dimension_numbers = #tpu.dot_dimension_numbers<[1], [0], [0], [1], [0, 0, 1, 1], [], []>} : vector<8x8xf32>, vector<8x16xf32>, vector<8x16xf32> -> vector<8x16xf32>
    %405 = vector.extract_strided_slice %380 {offsets = [6, 0, 0], sizes = [1, 8, 8], strides = [1, 1, 1]} : vector<8x8x8xf32> to vector<1x8x8xf32>
    %406 = vector.shape_cast %405 : vector<1x8x8xf32> to vector<8x8xf32>
    %407 = vector.extract_strided_slice %338 {offsets = [0, 352], sizes = [8, 16], strides = [1, 1]} : vector<8x384xf32> to vector<8x16xf32>
    %cst_160 = arith.constant dense<0.000000e+00> : vector<8x16xf32>
    %408 = tpu.matmul %406, %407, %cst_160 {dimension_numbers = #tpu.dot_dimension_numbers<[1], [0], [0], [1], [0, 0, 1, 1], [], []>} : vector<8x8xf32>, vector<8x16xf32>, vector<8x16xf32> -> vector<8x16xf32>
    %409 = vector.extract_strided_slice %380 {offsets = [7, 0, 0], sizes = [1, 8, 8], strides = [1, 1, 1]} : vector<8x8x8xf32> to vector<1x8x8xf32>
    %410 = vector.shape_cast %409 : vector<1x8x8xf32> to vector<8x8xf32>
    %411 = vector.extract_strided_slice %338 {offsets = [0, 368], sizes = [8, 16], strides = [1, 1]} : vector<8x384xf32> to vector<8x16xf32>
    %cst_161 = arith.constant dense<0.000000e+00> : vector<8x16xf32>
    %412 = tpu.matmul %410, %411, %cst_161 {dimension_numbers = #tpu.dot_dimension_numbers<[1], [0], [0], [1], [0, 0, 1, 1], [], []>} : vector<8x8xf32>, vector<8x16xf32>, vector<8x16xf32> -> vector<8x16xf32>
    %413 = tpu.concatenate %384, %388, %392, %396, %400, %404, %408, %412 in 1 : vector<8x16xf32>, vector<8x16xf32>, vector<8x16xf32>, vector<8x16xf32>, vector<8x16xf32>, vector<8x16xf32>, vector<8x16xf32>, vector<8x16xf32> -> vector<8x128xf32>
    %c2_162 = arith.constant 2 : index
    %c0_163 = arith.constant 0 : index
    %c0_164 = arith.constant 0 : index
    %414 = vector.load %arg4[%c2_162, %c0_163, %c0_164] : memref<3x128x128xf32, #tpu.memory_space<vmem>>, vector<1x128x128xf32>
    %415 = vector.shape_cast %414 : vector<1x128x128xf32> to vector<128x128xf32>
    %cst_165 = arith.constant dense<0.000000e+00> : vector<8x128xf32>
    %416 = tpu.matmul %413, %415, %cst_165 {dimension_numbers = #tpu.dot_dimension_numbers<[1], [0], [0], [1], [0, 0, 1, 1], [], []>} : vector<8x128xf32>, vector<128x128xf32>, vector<8x128xf32> -> vector<8x128xf32>
    %c2_166 = arith.constant 2 : index
    %c0_167 = arith.constant 0 : index
    %c0_168 = arith.constant 0 : index
    %417 = vector.load %arg5[%c2_166, %c0_167, %c0_168] : memref<3x1x128xf32, #tpu.memory_space<vmem>>, vector<1x1x128xf32>
    %418 = vector.shape_cast %417 : vector<1x1x128xf32> to vector<1x128xf32>
    %419 = vector.broadcast %418 : vector<1x128xf32> to vector<8x128xf32>
    %420 = arith.addf %416, %419 : vector<8x128xf32>
    %421 = arith.addf %327, %420 : vector<8x128xf32>
    %422 = vector.extract_strided_slice %329 {offsets = [0, 0, 0], sizes = [1, 1, 128], strides = [1, 1, 1]} : vector<2x1x128xf32> to vector<1x1x128xf32>
    %423 = vector.shape_cast %422 : vector<1x1x128xf32> to vector<1x128xf32>
    %424 = vector.extract_strided_slice %331 {offsets = [0, 0, 0], sizes = [1, 1, 128], strides = [1, 1, 1]} : vector<2x1x128xf32> to vector<1x1x128xf32>
    %425 = vector.shape_cast %424 : vector<1x1x128xf32> to vector<1x128xf32>
    %cst_169 = arith.constant dense<0.000000e+00> : vector<8xf32>
    %426 = vector.multi_reduction <add>, %421, %cst_169 [1] : vector<8x128xf32> to vector<8xf32>
    %427 = vector.shape_cast %426 : vector<8xf32> to vector<8x1xf32>
    %cst_170 = arith.constant 1.280000e+02 : f32
    %428 = vector.broadcast %cst_170 : f32 to vector<8x1xf32>
    %429 = arith.divf %427, %428 : vector<8x1xf32>
    %430 = vector.broadcast %429 : vector<8x1xf32> to vector<8x128xf32>
    %431 = arith.subf %421, %430 : vector<8x128xf32>
    %432 = arith.mulf %431, %431 : vector<8x128xf32>
    %cst_171 = arith.constant dense<0.000000e+00> : vector<8xf32>
    %433 = vector.multi_reduction <add>, %432, %cst_171 [1] : vector<8x128xf32> to vector<8xf32>
    %434 = vector.shape_cast %433 : vector<8xf32> to vector<8x1xf32>
    %cst_172 = arith.constant 1.280000e+02 : f32
    %435 = vector.broadcast %cst_172 : f32 to vector<8x1xf32>
    %436 = arith.divf %434, %435 : vector<8x1xf32>
    %437 = vector.broadcast %429 : vector<8x1xf32> to vector<8x128xf32>
    %438 = arith.subf %421, %437 : vector<8x128xf32>
    %cst_173 = arith.constant 9.99999974E-6 : f32
    %439 = vector.broadcast %cst_173 : f32 to vector<8x1xf32>
    %440 = arith.addf %436, %439 : vector<8x1xf32>
    %441 = math.rsqrt %440 : vector<8x1xf32>
    %442 = vector.broadcast %441 : vector<8x1xf32> to vector<8x128xf32>
    %443 = arith.mulf %438, %442 : vector<8x128xf32>
    %444 = vector.broadcast %423 : vector<1x128xf32> to vector<8x128xf32>
    %445 = arith.mulf %443, %444 : vector<8x128xf32>
    %446 = vector.broadcast %425 : vector<1x128xf32> to vector<8x128xf32>
    %447 = arith.addf %445, %446 : vector<8x128xf32>
    %c2_174 = arith.constant 2 : index
    %c0_175 = arith.constant 0 : index
    %c0_176 = arith.constant 0 : index
    %448 = vector.load %arg6[%c2_174, %c0_175, %c0_176] : memref<3x128x512xf32, #tpu.memory_space<vmem>>, vector<1x128x512xf32>
    %449 = vector.shape_cast %448 : vector<1x128x512xf32> to vector<128x512xf32>
    %cst_177 = arith.constant dense<0.000000e+00> : vector<8x512xf32>
    %450 = tpu.matmul %447, %449, %cst_177 {dimension_numbers = #tpu.dot_dimension_numbers<[1], [0], [0], [1], [0, 0, 1, 1], [], []>} : vector<8x128xf32>, vector<128x512xf32>, vector<8x512xf32> -> vector<8x512xf32>
    %c2_178 = arith.constant 2 : index
    %c0_179 = arith.constant 0 : index
    %c0_180 = arith.constant 0 : index
    %451 = vector.load %arg7[%c2_178, %c0_179, %c0_180] : memref<3x1x512xf32, #tpu.memory_space<vmem>>, vector<1x1x512xf32>
    %452 = vector.shape_cast %451 : vector<1x1x512xf32> to vector<1x512xf32>
    %453 = vector.broadcast %452 : vector<1x512xf32> to vector<8x512xf32>
    %454 = arith.addf %450, %453 : vector<8x512xf32>
    %cst_181 = arith.constant 0.000000e+00 : f32
    %455 = vector.broadcast %cst_181 : f32 to vector<8x512xf32>
    %456 = arith.maximumf %454, %455 : vector<8x512xf32>
    %c2_182 = arith.constant 2 : index
    %c0_183 = arith.constant 0 : index
    %c0_184 = arith.constant 0 : index
    %457 = vector.load %arg8[%c2_182, %c0_183, %c0_184] : memref<3x512x128xf32, #tpu.memory_space<vmem>>, vector<1x512x128xf32>
    %458 = vector.shape_cast %457 : vector<1x512x128xf32> to vector<512x128xf32>
    %cst_185 = arith.constant dense<0.000000e+00> : vector<8x128xf32>
    %459 = tpu.matmul %456, %458, %cst_185 {dimension_numbers = #tpu.dot_dimension_numbers<[1], [0], [0], [1], [0, 0, 1, 1], [], []>} : vector<8x512xf32>, vector<512x128xf32>, vector<8x128xf32> -> vector<8x128xf32>
    %c2_186 = arith.constant 2 : index
    %c0_187 = arith.constant 0 : index
    %c0_188 = arith.constant 0 : index
    %460 = vector.load %arg9[%c2_186, %c0_187, %c0_188] : memref<3x1x128xf32, #tpu.memory_space<vmem>>, vector<1x1x128xf32>
    %461 = vector.shape_cast %460 : vector<1x1x128xf32> to vector<1x128xf32>
    %462 = vector.broadcast %461 : vector<1x128xf32> to vector<8x128xf32>
    %463 = arith.addf %459, %462 : vector<8x128xf32>
    %464 = arith.addf %447, %463 : vector<8x128xf32>
    %465 = vector.extract_strided_slice %329 {offsets = [1, 0, 0], sizes = [1, 1, 128], strides = [1, 1, 1]} : vector<2x1x128xf32> to vector<1x1x128xf32>
    %466 = vector.shape_cast %465 : vector<1x1x128xf32> to vector<1x128xf32>
    %467 = vector.extract_strided_slice %331 {offsets = [1, 0, 0], sizes = [1, 1, 128], strides = [1, 1, 1]} : vector<2x1x128xf32> to vector<1x1x128xf32>
    %468 = vector.shape_cast %467 : vector<1x1x128xf32> to vector<1x128xf32>
    %cst_189 = arith.constant dense<0.000000e+00> : vector<8xf32>
    %469 = vector.multi_reduction <add>, %464, %cst_189 [1] : vector<8x128xf32> to vector<8xf32>
    %470 = vector.shape_cast %469 : vector<8xf32> to vector<8x1xf32>
    %cst_190 = arith.constant 1.280000e+02 : f32
    %471 = vector.broadcast %cst_190 : f32 to vector<8x1xf32>
    %472 = arith.divf %470, %471 : vector<8x1xf32>
    %473 = vector.broadcast %472 : vector<8x1xf32> to vector<8x128xf32>
    %474 = arith.subf %464, %473 : vector<8x128xf32>
    %475 = arith.mulf %474, %474 : vector<8x128xf32>
    %cst_191 = arith.constant dense<0.000000e+00> : vector<8xf32>
    %476 = vector.multi_reduction <add>, %475, %cst_191 [1] : vector<8x128xf32> to vector<8xf32>
    %477 = vector.shape_cast %476 : vector<8xf32> to vector<8x1xf32>
    %cst_192 = arith.constant 1.280000e+02 : f32
    %478 = vector.broadcast %cst_192 : f32 to vector<8x1xf32>
    %479 = arith.divf %477, %478 : vector<8x1xf32>
    %480 = vector.broadcast %472 : vector<8x1xf32> to vector<8x128xf32>
    %481 = arith.subf %464, %480 : vector<8x128xf32>
    %cst_193 = arith.constant 9.99999974E-6 : f32
    %482 = vector.broadcast %cst_193 : f32 to vector<8x1xf32>
    %483 = arith.addf %479, %482 : vector<8x1xf32>
    %484 = math.rsqrt %483 : vector<8x1xf32>
    %485 = vector.broadcast %484 : vector<8x1xf32> to vector<8x128xf32>
    %486 = arith.mulf %481, %485 : vector<8x128xf32>
    %487 = vector.broadcast %466 : vector<1x128xf32> to vector<8x128xf32>
    %488 = arith.mulf %486, %487 : vector<8x128xf32>
    %489 = vector.broadcast %468 : vector<1x128xf32> to vector<8x128xf32>
    %490 = arith.addf %488, %489 : vector<8x128xf32>
    %c0_194 = arith.constant 0 : index
    %c0_195 = arith.constant 0 : index
    %c0_196 = arith.constant 0 : index
    %491 = vector.load %arg12[%c0_194, %c0_195, %c0_196] : memref<1x8x128xf32, #tpu.memory_space<vmem>>, vector<1x8x128xf32>
    %492 = vector.shape_cast %491 : vector<1x8x128xf32> to vector<8x128xf32>
    %493 = vector.shape_cast %490 : vector<8x128xf32> to vector<1x8x128xf32>
    tpu.vector_store %arg12[%c0_194, %c0_195, %c0_196], %493 {strides = array<i32>} : memref<1x8x128xf32, #tpu.memory_space<vmem>>, vector<1x8x128xf32>,
    return
  }
  func.func @transform_0(%arg0: i32) -> (i32, i32, i32) {
    %c0_i32 = arith.constant 0 : i32
    %c0_i32_0 = arith.constant 0 : i32
    %c0_i32_1 = arith.constant 0 : i32
    return %arg0, %c0_i32, %c0_i32_0 : i32, i32, i32
  }
  func.func @transform_1(%arg0: i32) -> (i32, i32, i32) {
    %c0_i32 = arith.constant 0 : i32
    %c0_i32_0 = arith.constant 0 : i32
    %c0_i32_1 = arith.constant 0 : i32
    %c0_i32_2 = arith.constant 0 : i32
    return %c0_i32, %c0_i32_0, %c0_i32_1 : i32, i32, i32
  }
  func.func @transform_2(%arg0: i32) -> (i32, i32, i32) {
    %c0_i32 = arith.constant 0 : i32
    %c0_i32_0 = arith.constant 0 : i32
    %c0_i32_1 = arith.constant 0 : i32
    %c0_i32_2 = arith.constant 0 : i32
    return %c0_i32, %c0_i32_0, %c0_i32_1 : i32, i32, i32
  }
  func.func @transform_3(%arg0: i32) -> (i32, i32, i32) {
    %c0_i32 = arith.constant 0 : i32
    %c0_i32_0 = arith.constant 0 : i32
    %c0_i32_1 = arith.constant 0 : i32
    %c0_i32_2 = arith.constant 0 : i32
    return %c0_i32, %c0_i32_0, %c0_i32_1 : i32, i32, i32
  }
  func.func @transform_4(%arg0: i32) -> (i32, i32, i32) {
    %c0_i32 = arith.constant 0 : i32
    %c0_i32_0 = arith.constant 0 : i32
    %c0_i32_1 = arith.constant 0 : i32
    %c0_i32_2 = arith.constant 0 : i32
    return %c0_i32, %c0_i32_0, %c0_i32_1 : i32, i32, i32
  }
  func.func @transform_5(%arg0: i32) -> (i32, i32, i32) {
    %c0_i32 = arith.constant 0 : i32
    %c0_i32_0 = arith.constant 0 : i32
    %c0_i32_1 = arith.constant 0 : i32
    %c0_i32_2 = arith.constant 0 : i32
    return %c0_i32, %c0_i32_0, %c0_i32_1 : i32, i32, i32
  }
  func.func @transform_6(%arg0: i32) -> (i32, i32, i32) {
    %c0_i32 = arith.constant 0 : i32
    %c0_i32_0 = arith.constant 0 : i32
    %c0_i32_1 = arith.constant 0 : i32
    %c0_i32_2 = arith.constant 0 : i32
    return %c0_i32, %c0_i32_0, %c0_i32_1 : i32, i32, i32
  }
  func.func @transform_7(%arg0: i32) -> (i32, i32, i32) {
    %c0_i32 = arith.constant 0 : i32
    %c0_i32_0 = arith.constant 0 : i32
    %c0_i32_1 = arith.constant 0 : i32
    %c0_i32_2 = arith.constant 0 : i32
    return %c0_i32, %c0_i32_0, %c0_i32_1 : i32, i32, i32
  }
  func.func @transform_8(%arg0: i32) -> (i32, i32, i32) {
    %c0_i32 = arith.constant 0 : i32
    %c0_i32_0 = arith.constant 0 : i32
    %c0_i32_1 = arith.constant 0 : i32
    %c0_i32_2 = arith.constant 0 : i32
    return %c0_i32, %c0_i32_0, %c0_i32_1 : i32, i32, i32
  }
  func.func @transform_9(%arg0: i32) -> (i32, i32, i32, i32) {
    %c0_i32 = arith.constant 0 : i32
    %c0_i32_0 = arith.constant 0 : i32
    %c0_i32_1 = arith.constant 0 : i32
    %c0_i32_2 = arith.constant 0 : i32
    %c0_i32_3 = arith.constant 0 : i32
    return %c0_i32, %c0_i32_0, %c0_i32_1, %c0_i32_2 : i32, i32, i32, i32
  }
  func.func @transform_10(%arg0: i32) -> (i32, i32, i32, i32) {
    %c0_i32 = arith.constant 0 : i32
    %c0_i32_0 = arith.constant 0 : i32
    %c0_i32_1 = arith.constant 0 : i32
    %c0_i32_2 = arith.constant 0 : i32
    %c0_i32_3 = arith.constant 0 : i32
    return %c0_i32, %c0_i32_0, %c0_i32_1, %c0_i32_2 : i32, i32, i32, i32
  }
  func.func @transform_11(%arg0: i32) -> (i32, i32, i32) {
    %c0_i32 = arith.constant 0 : i32
    %c0_i32_0 = arith.constant 0 : i32
    %c0_i32_1 = arith.constant 0 : i32
    return %arg0, %c0_i32, %c0_i32_0 : i32, i32, i32
  }
}

</mosaic_0001>

<llo_original>
// kernel: source_encoder_forward.1
$region0: #{source_encoder_forward.1}
  #allocation0 [shape = 'u32[]', space=smem, size = 0x4, offset = 0x4, fixed_abs, tag = 'smem constant byte address 0x4 - core index']
  #allocation1 [shape = 'u32[72,128]{1,0:T(1,128)}', space=vmem, size = 0x9000, scoped, tag = 'internal scratch']
  %s0 = inlined_call_operand.vmem [shape: f32[2,8,128], index: 0, kind: input, shape index: {}]
  %s1 = inlined_call_operand.hbm [shape: f32[3,128,384], index: 1, kind: input, shape index: {}]
  %s2 = inlined_call_operand.vmem [shape: f32[3,1,384], index: 2, kind: input, shape index: {}]
  %s3 = inlined_call_operand.hbm [shape: f32[3,128,128], index: 3, kind: input, shape index: {}]
  %s4 = inlined_call_operand.vmem [shape: f32[3,1,128], index: 4, kind: input, shape index: {}]
  %s5 = inlined_call_operand.hbm [shape: f32[3,128,512], index: 5, kind: input, shape index: {}]
  %s6 = inlined_call_operand.vmem [shape: f32[3,1,512], index: 6, kind: input, shape index: {}]
  %s7 = inlined_call_operand.hbm [shape: f32[3,512,128], index: 7, kind: input, shape index: {}]
  %s8 = inlined_call_operand.vmem [shape: f32[3,1,128], index: 8, kind: input, shape index: {}]
  %s9 = inlined_call_operand.vmem [shape: f32[3,2,1,128], index: 9, kind: input, shape index: {}]
  %s10 = inlined_call_operand.vmem [shape: f32[3,2,1,128], index: 10, kind: input, shape index: {}]
  %s11 = inlined_call_operand.hbm [shape: f32[2,8,128], index: 11, kind: output, shape index: {}]
  %s12 = sld [smem:[#allocation0]]
  $region93: #{source_encoder_forward.1} parent=0
    _
  %s14 = ssub.s32 1, %s12
  %s15 = scalar_select 0, %s14, %s12
  $region1: #{source_encoder_forward.1} parent=0
    #allocation2 [shape = 'u8[589824]{0}', space=vmem, size = 0x90000, scoped, tag = 'input window, operand 1, single buffered']
    #allocation3 [shape = 's32[2]{0}', space=sflag, size = 0x8, scoped, tag = 'scoped memory for source_encoder_forward.1']
    #allocation4 [shape = 's32[2]{0}', space=sflag, size = 0x8, scoped, tag = 'scoped memory for source_encoder_forward.1']
    #allocation5 [shape = 'u8[196608]{0}', space=vmem, size = 0x30000, scoped, tag = 'input window, operand 3, single buffered']
    #allocation6 [shape = 's32[1]{0}', space=sflag, size = 0x4, scoped, tag = 'scoped memory for source_encoder_forward.1']
    #allocation7 [shape = 'u8[786432]{0}', space=vmem, size = 0xc0000, scoped, tag = 'input window, operand 5, single buffered']
    #allocation8 [shape = 'u8[786432]{0}', space=vmem, size = 0xc0000, scoped, tag = 'input window, operand 7, single buffered']
    #allocation9 [shape = 's32[1]{0}', space=sflag, size = 0x4, scoped, tag = 'scoped memory for source_encoder_forward.1']
    #allocation10 [shape = 'u8[8192]{0}', space=vmem, size = 0x2000, scoped, tag = 'output window, operand 0']
    %16 = vsyncpa [#allocation3], 0
    %17 = vsyncpa [#allocation6], 0
    %18 = vsyncpa [#allocation9], 0
    %19 = vsyncpa [#allocation4], 0
    %s20 = scalar_lea.sflag [#allocation4], 1
    %21 = vsyncpa %s20, 0
    loop: start=0, step=1, limit=4
    $region2: #{source_encoder_forward.1} parent=1 // loop_pre_header
      _
    $region3: #{source_encoder_forward.1} parent=1 // loop_header
      %s23 = sphi 0, %s27
      %p24 = scmp.ge.s32.totalorder %s23, 4
      %s33 = sphi 0, %s35
      %s36 = sphi 0, %s33
      %s37 = sphi 0, %s36
      %s53 = sphi 0, %s37
      %s57 = sphi 0, %s57
      %s59 = sphi 0, %s57
      %s60 = sphi 0, %s59
      %s74 = sphi 0, %s60
      %s78 = sphi 0, %s78
      %s80 = sphi 0, %s78
      %s81 = sphi 0, %s80
      %s95 = sphi 0, %s81
      %s99 = sphi 0, %s99
      %s101 = sphi 0, %s99
      %s102 = sphi 0, %s101
      %s116 = sphi 0, %s102
      %s120 = sphi 0, %s120
      %s122 = sphi 0, %s120
      %s123 = sphi 0, %s122
      %s137 = sphi 0, %s123
      %s141 = sphi 0, %s141
      %s143 = sphi 0, %s141
      %s144 = sphi 0, %s143
      %s158 = sphi 0, %s144
      %s162 = sphi 0, %s162
      %s164 = sphi 0, %s162
      %s165 = sphi 0, %s164
      %s179 = sphi 0, %s165
      %s183 = sphi 0, %s183
      %s185 = sphi 0, %s183
      %s186 = sphi 0, %s185
      %s200 = sphi 0, %s186
      %s204 = sphi 0, %s204
      %s206 = sphi 0, %s204
      %s207 = sphi 0, %s206
      %s221 = sphi 0, %s207
      %s225 = sphi 0, %s225
      %s227 = sphi 0, %s225
      %s228 = sphi 0, %s227
      %s242 = sphi 0, %s228
      %s246 = sphi 0, %s246
      %s248 = sphi 0, %s246
      %s249 = sphi 0, %s248
      %s263 = sphi 0, %s249
      %s269 = sphi 0, %s271
      %s272 = sphi 0, %s269
      %s273 = sphi 0, %s272
      %s289 = sphi 0, %s273
    $region4: #{source_encoder_forward.1} parent=1 // loop_header_branch
      %26 = sbr.rel (%p24) target = $region8
    $region5: #{source_encoder_forward.1} parent=1 // loop_body
      %s28 = ssub.s32 %s23, 1
      %s29 = ssub.s32 %s23, 2
      %s30 = sadd.s32 %s23, 1
      %s31 = ssub.s32 %s23, %s30
      %p32 = scmp.eq.s32.totalorder %s31, 0
      %s34 = sadd.s32 %s33, 1
      %s35 = scalar_select %p32, %s33, %s34
      %p38 = pneg %p32
      %p39 = scmp.eq.s32.totalorder %s23, 1
      %p40 = por %p38, %p39
      %p41 = scmp.ne.s32.totalorder %s33, %s36
      %p42 = scmp.eq.s32.totalorder %s23, 0
      %p43 = por %p41, %p42
      %p44 = scmp.ne.s32.totalorder %s33, %s36
      %p45 = scmp.eq.s32.totalorder %s28, 1
      %p46 = por %p44, %p45
      %p47 = scmp.ne.s32.totalorder %s36, %s37
      %p48 = scmp.eq.s32.totalorder %s28, 0
      %p49 = por %p47, %p48
      %p50 = scmp.ne.s32.totalorder %s36, %s37
      %p51 = scmp.eq.s32.totalorder %s29, 1
      %p52 = por %p50, %p51
      %p54 = scmp.ne.s32.totalorder %s37, %s53
      %p55 = scmp.eq.s32.totalorder %s29, 0
      %p56 = por %p54, %p55
      %s58 = sadd.s32 %s57, 1
      %p61 = scmp.eq.s32.totalorder %s23, 1
      %p62 = scmp.ne.s32.totalorder %s57, %s59
      %p63 = scmp.eq.s32.totalorder %s23, 0
      %p64 = por %p62, %p63
      %p65 = scmp.ne.s32.totalorder %s57, %s59
      %p66 = scmp.eq.s32.totalorder %s28, 1
      %p67 = por %p65, %p66
      %p68 = scmp.ne.s32.totalorder %s59, %s60
      %p69 = scmp.eq.s32.totalorder %s28, 0
      %p70 = por %p68, %p69
      %p71 = scmp.ne.s32.totalorder %s59, %s60
      %p72 = scmp.eq.s32.totalorder %s29, 1
      %p73 = por %p71, %p72
      %p75 = scmp.ne.s32.totalorder %s60, %s74
      %p76 = scmp.eq.s32.totalorder %s29, 0
      %p77 = por %p75, %p76
      %s79 = sadd.s32 %s78, 1
      %p82 = scmp.eq.s32.totalorder %s23, 1
      %p83 = scmp.ne.s32.totalorder %s78, %s80
      %p84 = scmp.eq.s32.totalorder %s23, 0
      %p85 = por %p83, %p84
      %p86 = scmp.ne.s32.totalorder %s78, %s80
      %p87 = scmp.eq.s32.totalorder %s28, 1
      %p88 = por %p86, %p87
      %p89 = scmp.ne.s32.totalorder %s80, %s81
      %p90 = scmp.eq.s32.totalorder %s28, 0
      %p91 = por %p89, %p90
      %p92 = scmp.ne.s32.totalorder %s80, %s81
      %p93 = scmp.eq.s32.totalorder %s29, 1
      %p94 = por %p92, %p93
      %p96 = scmp.ne.s32.totalorder %s81, %s95
      %p97 = scmp.eq.s32.totalorder %s29, 0
      %p98 = por %p96, %p97
      %s100 = sadd.s32 %s99, 1
      %p103 = scmp.eq.s32.totalorder %s23, 1
      %p104 = scmp.ne.s32.totalorder %s99, %s101
      %p105 = scmp.eq.s32.totalorder %s23, 0
      %p106 = por %p104, %p105
      %p107 = scmp.ne.s32.totalorder %s99, %s101
      %p108 = scmp.eq.s32.totalorder %s28, 1
      %p109 = por %p107, %p108
      %p110 = scmp.ne.s32.totalorder %s101, %s102
      %p111 = scmp.eq.s32.totalorder %s28, 0
      %p112 = por %p110, %p111
      %p113 = scmp.ne.s32.totalorder %s101, %s102
      %p114 = scmp.eq.s32.totalorder %s29, 1
      %p115 = por %p113, %p114
      %p117 = scmp.ne.s32.totalorder %s102, %s116
      %p118 = scmp.eq.s32.totalorder %s29, 0
      %p119 = por %p117, %p118
      %s121 = sadd.s32 %s120, 1
      %p124 = scmp.eq.s32.totalorder %s23, 1
      %p125 = scmp.ne.s32.totalorder %s120, %s122
      %p126 = scmp.eq.s32.totalorder %s23, 0
      %p127 = por %p125, %p126
      %p128 = scmp.ne.s32.totalorder %s120, %s122
      %p129 = scmp.eq.s32.totalorder %s28, 1
      %p130 = por %p128, %p129
      %p131 = scmp.ne.s32.totalorder %s122, %s123
      %p132 = scmp.eq.s32.totalorder %s28, 0
      %p133 = por %p131, %p132
      %p134 = scmp.ne.s32.totalorder %s122, %s123
      %p135 = scmp.eq.s32.totalorder %s29, 1
      %p136 = por %p134, %p135
      %p138 = scmp.ne.s32.totalorder %s123, %s137
      %p139 = scmp.eq.s32.totalorder %s29, 0
      %p140 = por %p138, %p139
      %s142 = sadd.s32 %s141, 1
      %p145 = scmp.eq.s32.totalorder %s23, 1
      %p146 = scmp.ne.s32.totalorder %s141, %s143
      %p147 = scmp.eq.s32.totalorder %s23, 0
      %p148 = por %p146, %p147
      %p149 = scmp.ne.s32.totalorder %s141, %s143
      %p150 = scmp.eq.s32.totalorder %s28, 1
      %p151 = por %p149, %p150
      %p152 = scmp.ne.s32.totalorder %s143, %s144
      %p153 = scmp.eq.s32.totalorder %s28, 0
      %p154 = por %p152, %p153
      %p155 = scmp.ne.s32.totalorder %s143, %s144
      %p156 = scmp.eq.s32.totalorder %s29, 1
      %p157 = por %p155, %p156
      %p159 = scmp.ne.s32.totalorder %s144, %s158
      %p160 = scmp.eq.s32.totalorder %s29, 0
      %p161 = por %p159, %p160
      %s163 = sadd.s32 %s162, 1
      %p166 = scmp.eq.s32.totalorder %s23, 1
      %p167 = scmp.ne.s32.totalorder %s162, %s164
      %p168 = scmp.eq.s32.totalorder %s23, 0
      %p169 = por %p167, %p168
      %p170 = scmp.ne.s32.totalorder %s162, %s164
      %p171 = scmp.eq.s32.totalorder %s28, 1
      %p172 = por %p170, %p171
      %p173 = scmp.ne.s32.totalorder %s164, %s165
      %p174 = scmp.eq.s32.totalorder %s28, 0
      %p175 = por %p173, %p174
      %p176 = scmp.ne.s32.totalorder %s164, %s165
      %p177 = scmp.eq.s32.totalorder %s29, 1
      %p178 = por %p176, %p177
      %p180 = scmp.ne.s32.totalorder %s165, %s179
      %p181 = scmp.eq.s32.totalorder %s29, 0
      %p182 = por %p180, %p181
      %s184 = sadd.s32 %s183, 1
      %p187 = scmp.eq.s32.totalorder %s23, 1
      %p188 = scmp.ne.s32.totalorder %s183, %s185
      %p189 = scmp.eq.s32.totalorder %s23, 0
      %p190 = por %p188, %p189
      %p191 = scmp.ne.s32.totalorder %s183, %s185
      %p192 = scmp.eq.s32.totalorder %s28, 1
      %p193 = por %p191, %p192
      %p194 = scmp.ne.s32.totalorder %s185, %s186
      %p195 = scmp.eq.s32.totalorder %s28, 0
      %p196 = por %p194, %p195
      %p197 = scmp.ne.s32.totalorder %s185, %s186
      %p198 = scmp.eq.s32.totalorder %s29, 1
      %p199 = por %p197, %p198
      %p201 = scmp.ne.s32.totalorder %s186, %s200
      %p202 = scmp.eq.s32.totalorder %s29, 0
      %p203 = por %p201, %p202
      %s205 = sadd.s32 %s204, 1
      %p208 = scmp.eq.s32.totalorder %s23, 1
      %p209 = scmp.ne.s32.totalorder %s204, %s206
      %p210 = scmp.eq.s32.totalorder %s23, 0
      %p211 = por %p209, %p210
      %p212 = scmp.ne.s32.totalorder %s204, %s206
      %p213 = scmp.eq.s32.totalorder %s28, 1
      %p214 = por %p212, %p213
      %p215 = scmp.ne.s32.totalorder %s206, %s207
      %p216 = scmp.eq.s32.totalorder %s28, 0
      %p217 = por %p215, %p216
      %p218 = scmp.ne.s32.totalorder %s206, %s207
      %p219 = scmp.eq.s32.totalorder %s29, 1
      %p220 = por %p218, %p219
      %p222 = scmp.ne.s32.totalorder %s207, %s221
      %p223 = scmp.eq.s32.totalorder %s29, 0
      %p224 = por %p222, %p223
      %s226 = sadd.s32 %s225, 1
      %p229 = scmp.eq.s32.totalorder %s23, 1
      %p230 = scmp.ne.s32.totalorder %s225, %s227
      %p231 = scmp.eq.s32.totalorder %s23, 0
      %p232 = por %p230, %p231
      %p233 = scmp.ne.s32.totalorder %s225, %s227
      %p234 = scmp.eq.s32.totalorder %s28, 1
      %p235 = por %p233, %p234
      %p236 = scmp.ne.s32.totalorder %s227, %s228
      %p237 = scmp.eq.s32.totalorder %s28, 0
      %p238 = por %p236, %p237
      %p239 = scmp.ne.s32.totalorder %s227, %s228
      %p240 = scmp.eq.s32.totalorder %s29, 1
      %p241 = por %p239, %p240
      %p243 = scmp.ne.s32.totalorder %s228, %s242
      %p244 = scmp.eq.s32.totalorder %s29, 0
      %p245 = por %p243, %p244
      %s247 = sadd.s32 %s246, 1
      %p250 = scmp.eq.s32.totalorder %s23, 1
      %p251 = scmp.ne.s32.totalorder %s246, %s248
      %p252 = scmp.eq.s32.totalorder %s23, 0
      %p253 = por %p251, %p252
      %p254 = scmp.ne.s32.totalorder %s246, %s248
      %p255 = scmp.eq.s32.totalorder %s28, 1
      %p256 = por %p254, %p255
      %p257 = scmp.ne.s32.totalorder %s248, %s249
      %p258 = scmp.eq.s32.totalorder %s28, 0
      %p259 = por %p257, %p258
      %p260 = scmp.ne.s32.totalorder %s248, %s249
      %p261 = scmp.eq.s32.totalorder %s29, 1
      %p262 = por %p260, %p261
      %p264 = scmp.ne.s32.totalorder %s249, %s263
      %p265 = scmp.eq.s32.totalorder %s29, 0
      %p266 = por %p264, %p265
      %s267 = ssub.s32 %s23, %s30
      %p268 = scmp.eq.s32.totalorder %s267, 0
      %s270 = sadd.s32 %s269, 1
      %s271 = scalar_select %p268, %s269, %s270
      %p274 = pneg %p268
      %p275 = scmp.eq.s32.totalorder %s23, 1
      %p276 = por %p274, %p275
      %p277 = scmp.ne.s32.totalorder %s269, %s272
      %p278 = scmp.eq.s32.totalorder %s23, 0
      %p279 = por %p277, %p278
      %p280 = scmp.ne.s32.totalorder %s269, %s272
      %p281 = scmp.eq.s32.totalorder %s28, 1
      %p282 = por %p280, %p281
      %p283 = scmp.ne.s32.totalorder %s272, %s273
      %p284 = scmp.eq.s32.totalorder %s28, 0
      %p285 = por %p283, %p284
      %p286 = scmp.ne.s32.totalorder %s272, %s273
      %p287 = scmp.eq.s32.totalorder %s29, 1
      %p288 = por %p286, %p287
      %p290 = scmp.ne.s32.totalorder %s273, %s289
      %p291 = scmp.eq.s32.totalorder %s29, 0
      %p292 = por %p290, %p291
      %p293 = scmp.le.s32.totalorder 1, %s23
      %p294 = scmp.lt.s32.totalorder %s23, 3
      %p295 = pnand %p293, %p294
      %p296 = pneg %p295
      // Predicated region
      $region9: #{source_encoder_forward.1} parent=5 // pred_check
        _
      $region10: #{source_encoder_forward.1} parent=5 // pred_check_branch
        %298 = sbr.rel (%p295) target = $region12
      $region11: #{source_encoder_forward.1} parent=5 // pred_region
        %s299 = ssub.s32 %s23, 1
        // Predicated region
        $region13: #{source_encoder_forward.1} parent=11 // pred_check
          %p300 = pneg %p70
        $region14: #{source_encoder_forward.1} parent=11 // pred_check_branch
          %302 = sbr.rel (%p300) target = $region16
        $region15: #{source_encoder_forward.1} parent=11 // pred_region
          %304 = vsyncadd [#allocation3], 0
          %s305 = sshll.u32 %s1, 4
          %s306 = int_to_ptr.hbm [resolvable:$true] %s305
          %s307 = sshll.u32 [#allocation2], 4
          %s308 = int_to_ptr.vmem [resolvable:$true] %s307
          %313 = dma.hbm_to_vmem [thread:$0]  %s306, 18432, %s308, [#allocation3], 384, 384, 24
        $region16: #{source_encoder_forward.1} parent=11 // pred_fallthru
          _
        // Predicated region
        $region17: #{source_encoder_forward.1} parent=11 // pred_check
          %p314 = pneg %p91
        $region18: #{source_encoder_forward.1} parent=11 // pred_check_branch
          %316 = sbr.rel (%p314) target = $region20
        $region19: #{source_encoder_forward.1} parent=11 // pred_region
          _
        $region20: #{source_encoder_forward.1} parent=11 // pred_fallthru
          _
        // Predicated region
        $region21: #{source_encoder_forward.1} parent=11 // pred_check
          %p317 = pneg %p112
        $region22: #{source_encoder_forward.1} parent=11 // pred_check_branch
          %319 = sbr.rel (%p317) target = $region24
        $region23: #{source_encoder_forward.1} parent=11 // pred_region
          %321 = vsyncadd [#allocation6], 0
          %s322 = sshll.u32 %s3, 4
          %s323 = int_to_ptr.hbm [resolvable:$true] %s322
          %s324 = sshll.u32 [#allocation5], 4
          %s325 = int_to_ptr.vmem [resolvable:$true] %s324
          %330 = dma.hbm_to_vmem [thread:$0]  %s323, 6144, %s325, [#allocation6], 128, 128, 8
        $region24: #{source_encoder_forward.1} parent=11 // pred_fallthru
          _
        // Predicated region
        $region25: #{source_encoder_forward.1} parent=11 // pred_check
          %p331 = pneg %p133
        $region26: #{source_encoder_forward.1} parent=11 // pred_check_branch
          %333 = sbr.rel (%p331) target = $region28
        $region27: #{source_encoder_forward.1} parent=11 // pred_region
          _
        $region28: #{source_encoder_forward.1} parent=11 // pred_fallthru
          _
        // Predicated region
        $region29: #{source_encoder_forward.1} parent=11 // pred_check
          %p334 = pneg %p154
        $region30: #{source_encoder_forward.1} parent=11 // pred_check_branch
          %336 = sbr.rel (%p334) target = $region32
        $region31: #{source_encoder_forward.1} parent=11 // pred_region
          %338 = vsyncadd [#allocation6], 0
          %s339 = sshll.u32 %s5, 4
          %s340 = int_to_ptr.hbm [resolvable:$true] %s339
          %s341 = sshll.u32 [#allocation7], 4
          %s342 = int_to_ptr.vmem [resolvable:$true] %s341
          %347 = dma.hbm_to_vmem [thread:$0]  %s340, 24576, %s342, [#allocation6], 512, 512, 32
        $region32: #{source_encoder_forward.1} parent=11 // pred_fallthru
          _
        // Predicated region
        $region33: #{source_encoder_forward.1} parent=11 // pred_check
          %p348 = pneg %p175
        $region34: #{source_encoder_forward.1} parent=11 // pred_check_branch
          %350 = sbr.rel (%p348) target = $region36
        $region35: #{source_encoder_forward.1} parent=11 // pred_region
          _
        $region36: #{source_encoder_forward.1} parent=11 // pred_fallthru
          _
        // Predicated region
        $region37: #{source_encoder_forward.1} parent=11 // pred_check
          %p351 = pneg %p196
        $region38: #{source_encoder_forward.1} parent=11 // pred_check_branch
          %353 = sbr.rel (%p351) target = $region40
        $region39: #{source_encoder_forward.1} parent=11 // pred_region
          %355 = vsyncadd [#allocation9], 0
          %s356 = sshll.u32 %s7, 4
          %s357 = int_to_ptr.hbm [resolvable:$true] %s356
          %s358 = sshll.u32 [#allocation8], 4
          %s359 = int_to_ptr.vmem [resolvable:$true] %s358
          %364 = dma.hbm_to_vmem [thread:$0]  %s357, 24576, %s359, [#allocation9], 128, 128, 8
        $region40: #{source_encoder_forward.1} parent=11 // pred_fallthru
          _
        // Predicated region
        $region41: #{source_encoder_forward.1} parent=11 // pred_check
          %p365 = pneg %p217
        $region42: #{source_encoder_forward.1} parent=11 // pred_check_branch
          %367 = sbr.rel (%p365) target = $region44
        $region43: #{source_encoder_forward.1} parent=11 // pred_region
          _
        $region44: #{source_encoder_forward.1} parent=11 // pred_fallthru
          _
        // Predicated region
        $region45: #{source_encoder_forward.1} parent=11 // pred_check
          %p368 = pneg %p238
        $region46: #{source_encoder_forward.1} parent=11 // pred_check_branch
          %370 = sbr.rel (%p368) target = $region48
        $region47: #{source_encoder_forward.1} parent=11 // pred_region
          _
        $region48: #{source_encoder_forward.1} parent=11 // pred_fallthru
          _
        // Predicated region
        $region49: #{source_encoder_forward.1} parent=11 // pred_check
          %p371 = pneg %p259
        $region50: #{source_encoder_forward.1} parent=11 // pred_check_branch
          %373 = sbr.rel (%p371) target = $region52
        $region51: #{source_encoder_forward.1} parent=11 // pred_region
          _
        $region52: #{source_encoder_forward.1} parent=11 // pred_fallthru
          _
      $region12: #{source_encoder_forward.1} parent=5 // pred_fallthru
        _
      %p374 = scmp.lt.s32.totalorder %s23, 2
      // Predicated region
      $region53: #{source_encoder_forward.1} parent=5 // pred_check
        %p375 = pneg %p374
      $region54: #{source_encoder_forward.1} parent=5 // pred_check_branch
        %377 = sbr.rel (%p375) target = $region56
      $region55: #{source_encoder_forward.1} parent=5 // pred_region
        // Predicated region
        $region57: #{source_encoder_forward.1} parent=55 // pred_check
          %p378 = pneg %p43
        $region58: #{source_encoder_forward.1} parent=55 // pred_check_branch
          %380 = sbr.rel (%p378) target = $region60
        $region59: #{source_encoder_forward.1} parent=55 // pred_region
          %p381 = scmp.lt.s32.totalorder %s23, 1
          %s382 = scalar_select %p381, %s23, 1
          %s383 = smul.addr %s382, 8
          %s384 = scalar_lea.vmem %s0, %s383
        $region60: #{source_encoder_forward.1} parent=55 // pred_fallthru
          _
      $region56: #{source_encoder_forward.1} parent=5 // pred_fallthru
        _
      %p385 = scmp.le.s32.totalorder 1, %s23
      %p386 = scmp.lt.s32.totalorder %s23, 3
      %p387 = pnand %p385, %p386
      %p388 = pneg %p387
      // Predicated region
      $region61: #{source_encoder_forward.1} parent=5 // pred_check
        _
      $region62: #{source_encoder_forward.1} parent=5 // pred_check_branch
        %390 = sbr.rel (%p387) target = $region64
      $region63: #{source_encoder_forward.1} parent=5 // pred_region
        %s391 = ssub.s32 %s23, 1
        // Predicated region
        $region65: #{source_encoder_forward.1} parent=63 // pred_check
          %p392 = pneg %p70
        $region66: #{source_encoder_forward.1} parent=63 // pred_check_branch
          %394 = sbr.rel (%p392) target = $region68
        $region67: #{source_encoder_forward.1} parent=63 // pred_region
          %396 = dma.done [#allocation3], 18432
        $region68: #{source_encoder_forward.1} parent=63 // pred_fallthru
          _
        // Predicated region
        $region69: #{source_encoder_forward.1} parent=63 // pred_check
          %p397 = pneg %p112
        $region70: #{source_encoder_forward.1} parent=63 // pred_check_branch
          %399 = sbr.rel (%p397) target = $region72
        $region71: #{source_encoder_forward.1} parent=63 // pred_region
          %401 = dma.done [#allocation6], 6144
        $region72: #{source_encoder_forward.1} parent=63 // pred_fallthru
          _
        // Predicated region
        $region73: #{source_encoder_forward.1} parent=63 // pred_check
          %p402 = pneg %p154
        $region74: #{source_encoder_forward.1} parent=63 // pred_check_branch
          %404 = sbr.rel (%p402) target = $region76
        $region75: #{source_encoder_forward.1} parent=63 // pred_region
          %406 = dma.done [#allocation6], 24576
        $region76: #{source_encoder_forward.1} parent=63 // pred_fallthru
          _
        // Predicated region
        $region77: #{source_encoder_forward.1} parent=63 // pred_check
          %p407 = pneg %p196
        $region78: #{source_encoder_forward.1} parent=63 // pred_check_branch
          %409 = sbr.rel (%p407) target = $region80
        $region79: #{source_encoder_forward.1} parent=63 // pred_region
          %411 = dma.done [#allocation9], 24576
        $region80: #{source_encoder_forward.1} parent=63 // pred_fallthru
          _
        %p412 = scmp.lt.s32.totalorder %s28, 1
        %s413 = scalar_select %p412, %s28, 1
        %s414 = smul.addr %s413, 8
        %s415 = scalar_lea.vmem %s0, %s414
        %p416 = pneg %p49
        %p417 = pneg %p46
        %p418 = pneg %p70
        %p419 = pneg %p67
        %p420 = pneg %p91
        %p421 = pneg %p88
        %p422 = pneg %p112
        %p423 = pneg %p109
        %p424 = pneg %p133
        %p425 = pneg %p130
        %p426 = pneg %p154
        %p427 = pneg %p151
        %p428 = pneg %p175
        %p429 = pneg %p172
        %p430 = pneg %p196
        %p431 = pneg %p193
        %p432 = pneg %p217
        %p433 = pneg %p214
        %p434 = pneg %p238
        %p435 = pneg %p235
        %p436 = pneg %p259
        %p437 = pneg %p256
        %p438 = pneg %p285
        %p439 = pneg %p282
        %s440 = sand.u32 %s272, 1
        %s441 = scalar_lea.sflag [#allocation4], %s440
        %s442 = sand.u32 %s272, 1
        %s443 = smul.addr %s442, 8
        %s444 = scalar_lea.vmem [#allocation10], %s443
        %p445 = scmp.lt.s32.totalorder %s28, 1
        %s446 = scalar_select %p445, %s28, 1
        %s447 = smul.addr %s446, 8
        %s448 = scalar_lea.vmem %s0, %s447
        %v449 = vld [vmem:[%s448] sm:$0xff]
        %v450 = vld [vmem:[%s9] sm:$0x1]
        %v451 = vld [vmem:[%s9 + $0x1] sm:$0x1]
        %v452 = vld [vmem:[%s10] sm:$0x1]
        %v453 = vld [vmem:[%s10 + $0x1] sm:$0x1]
        %v454 = vld [vmem:[#allocation2] sm:$0xff]
        %v455 = vld [vmem:[#allocation2 + $0x8] sm:$0xff]
        %v456 = vld [vmem:[#allocation2 + $0x10] sm:$0xff]
        %v457 = vld [vmem:[#allocation2 + $0x18] sm:$0xff]
        %v458 = vld [vmem:[#allocation2 + $0x20] sm:$0xff]
        %v459 = vld [vmem:[#allocation2 + $0x28] sm:$0xff]
        %v460 = vld [vmem:[#allocation2 + $0x30] sm:$0xff]
        %v461 = vld [vmem:[#allocation2 + $0x38] sm:$0xff]
        %v462 = vld [vmem:[#allocation2 + $0x40] sm:$0xff]
        %v463 = vld [vmem:[#allocation2 + $0x48] sm:$0xff]
        %v464 = vld [vmem:[#allocation2 + $0x50] sm:$0xff]
        %v465 = vld [vmem:[#allocation2 + $0x58] sm:$0xff]
        %v466 = vld [vmem:[#allocation2 + $0x60] sm:$0xff]
        %v467 = vld [vmem:[#allocation2 + $0x68] sm:$0xff]
        %v468 = vld [vmem:[#allocation2 + $0x70] sm:$0xff]
        %v469 = vld [vmem:[#allocation2 + $0x78] sm:$0xff]
        %v470 = vld [vmem:[#allocation2 + $0x80] sm:$0xff]
        %v471 = vld [vmem:[#allocation2 + $0x88] sm:$0xff]
        %v472 = vld [vmem:[#allocation2 + $0x90] sm:$0xff]
        %v473 = vld [vmem:[#allocation2 + $0x98] sm:$0xff]
        %v474 = vld [vmem:[#allocation2 + $0xa0] sm:$0xff]
        %v475 = vld [vmem:[#allocation2 + $0xa8] sm:$0xff]
        %v476 = vld [vmem:[#allocation2 + $0xb0] sm:$0xff]
        %v477 = vld [vmem:[#allocation2 + $0xb8] sm:$0xff]
        %v478 = vld [vmem:[#allocation2 + $0xc0] sm:$0xff]
        %v479 = vld [vmem:[#allocation2 + $0xc8] sm:$0xff]
        %v480 = vld [vmem:[#allocation2 + $0xd0] sm:$0xff]
        %v481 = vld [vmem:[#allocation2 + $0xd8] sm:$0xff]
        %v482 = vld [vmem:[#allocation2 + $0xe0] sm:$0xff]
        %v483 = vld [vmem:[#allocation2 + $0xe8] sm:$0xff]
        %v484 = vld [vmem:[#allocation2 + $0xf0] sm:$0xff]
        %v485 = vld [vmem:[#allocation2 + $0xf8] sm:$0xff]
        %v486 = vld [vmem:[#allocation2 + $0x100] sm:$0xff]
        %v487 = vld [vmem:[#allocation2 + $0x108] sm:$0xff]
        %v488 = vld [vmem:[#allocation2 + $0x110] sm:$0xff]
        %v489 = vld [vmem:[#allocation2 + $0x118] sm:$0xff]
        %v490 = vld [vmem:[#allocation2 + $0x120] sm:$0xff]
        %v491 = vld [vmem:[#allocation2 + $0x128] sm:$0xff]
        %v492 = vld [vmem:[#allocation2 + $0x130] sm:$0xff]
        %v493 = vld [vmem:[#allocation2 + $0x138] sm:$0xff]
        %v494 = vld [vmem:[#allocation2 + $0x140] sm:$0xff]
        %v495 = vld [vmem:[#allocation2 + $0x148] sm:$0xff]
        %v496 = vld [vmem:[#allocation2 + $0x150] sm:$0xff]
        %v497 = vld [vmem:[#allocation2 + $0x158] sm:$0xff]
        %v498 = vld [vmem:[#allocation2 + $0x160] sm:$0xff]
        %v499 = vld [vmem:[#allocation2 + $0x168] sm:$0xff]
        %v500 = vld [vmem:[#allocation2 + $0x170] sm:$0xff]
        %v501 = vld [vmem:[#allocation2 + $0x178] sm:$0xff]
        %v502 = vld [vmem:[%s2] sm:$0x7]
        %v504 = vperm.slane %v502, 0
        %v505 = vperm.slane %v502, 1
        %v506 = vperm.slane %v502, 2
        %510 = vmatpush.msra.mxu0 %v499
        %511 = vmatpush.msra.mxu0 %v496
        %512 = vmatpush.msra.mxu0 %v493
        %513 = vmatpush.msra.mxu0 %v490
        %514 = vmatpush.msra.mxu0 %v487
        %515 = vmatpush.msra.mxu0 %v484
        %516 = vmatpush.msra.mxu0 %v481
        %517 = vmatpush.msra.mxu0 %v478
        %518 = vmatpush.msra.mxu0 %v475
        %519 = vmatpush.msra.mxu0 %v472
        %520 = vmatpush.msra.mxu0 %v469
        %521 = vmatpush.msra.mxu0 %v466
        %522 = vmatpush.msra.mxu0 %v463
        %523 = vmatpush.msra.mxu0 %v460
        %524 = vmatpush.msra.mxu0 %v457
        %525 = vmatpush.msra.mxu0 %v454
        %526 = vmatmul.f32.gmra.mxu0 %v449
        %v527 = vpop.f32.mrf.mxu0
        %v528 = vadd.f32 %v504, %v527
        %529 = vdwg.mxu0
        %530 = vmatpush.msra.mxu0 %v500
        %531 = vmatpush.msra.mxu0 %v497
        %532 = vmatpush.msra.mxu0 %v494
        %533 = vmatpush.msra.mxu0 %v491
        %534 = vmatpush.msra.mxu0 %v488
        %535 = vmatpush.msra.mxu0 %v485
        %536 = vmatpush.msra.mxu0 %v482
        %537 = vmatpush.msra.mxu0 %v479
        %538 = vmatpush.msra.mxu0 %v476
        %539 = vmatpush.msra.mxu0 %v473
        %540 = vmatpush.msra.mxu0 %v470
        %541 = vmatpush.msra.mxu0 %v467
        %542 = vmatpush.msra.mxu0 %v464
        %543 = vmatpush.msra.mxu0 %v461
        %544 = vmatpush.msra.mxu0 %v458
        %545 = vmatpush.msra.mxu0 %v455
        %546 = vmatmul.f32.gmra.mxu0 %v449
        %v547 = vpop.f32.mrf.mxu0
        %v548 = vadd.f32 %v505, %v547
        %549 = vdwg.mxu0
        %550 = vmatpush.msra.mxu0 %v501
        %551 = vmatpush.msra.mxu0 %v498
        %552 = vmatpush.msra.mxu0 %v495
        %553 = vmatpush.msra.mxu0 %v492
        %554 = vmatpush.msra.mxu0 %v489
        %555 = vmatpush.msra.mxu0 %v486
        %556 = vmatpush.msra.mxu0 %v483
        %557 = vmatpush.msra.mxu0 %v480
        %558 = vmatpush.msra.mxu0 %v477
        %559 = vmatpush.msra.mxu0 %v474
        %560 = vmatpush.msra.mxu0 %v471
        %561 = vmatpush.msra.mxu0 %v468
        %562 = vmatpush.msra.mxu0 %v465
        %563 = vmatpush.msra.mxu0 %v462
        %564 = vmatpush.msra.mxu0 %v459
        %565 = vmatpush.msra.mxu0 %v456
        %566 = vmatmul.f32.gmra.mxu0 %v449
        %v567 = vpop.f32.mrf.mxu0
        %v568 = vadd.f32 %v506, %v567
        %569 = vdwg.mxu0
        %vm570 = vcmask 130048
        %v572 = vsel %vm570, %v528, 0
        %v575 = vsel %vm570, %v548, 0
        %577 = vmatpush.xpose.msra.mxu0 0.0
        %578 = vmatpush.xpose.msra.mxu0 0.0
        %579 = vmatpush.xpose.msra.mxu0 0.0
        %580 = vmatpush.xpose.msra.mxu0 0.0
        %581 = vmatpush.xpose.msra.mxu0 0.0
        %582 = vmatpush.xpose.msra.mxu0 0.0
        %583 = vmatpush.xpose.msra.mxu0 0.0
        %584 = vmatpush.xpose.msra.mxu0 0.0
        %585 = vmatpush.xpose.msra.mxu0 0.0
        %586 = vmatpush.xpose.msra.mxu0 0.0
        %587 = vmatpush.xpose.msra.mxu0 0.0
        %588 = vmatpush.xpose.msra.mxu0 0.0
        %589 = vmatpush.xpose.msra.mxu0 0.0
        %590 = vmatpush.xpose.msra.mxu0 0.0
        %591 = vmatpush.xpose.msra.mxu0 0.0
        %592 = vmatpush.xpose.msra.mxu0 %v575
        %593 = vmatmul.f32.gmra.mxu0 %v572
        %v594 = vpop.f32.mrf.mxu0
        %v595 = vadd.f32 0.0, %v594
        %596 = vdwg.mxu0
        %597 = vrot.lane.b32.xlu0 %v528, 112
        %v598 = vpop.permute.xlu0 %597
        %599 = vrot.lane.b32.xlu0 %v548, 112
        %v600 = vpop.permute.xlu0 %599
        %v601 = vsel %vm570, %v598, 0
        %v603 = vsel %vm570, %v600, 0
        %605 = vmatpush.xpose.msra.mxu0 0.0
        %606 = vmatpush.xpose.msra.mxu0 0.0
        %607 = vmatpush.xpose.msra.mxu0 0.0
        %608 = vmatpush.xpose.msra.mxu0 0.0
        %609 = vmatpush.xpose.msra.mxu0 0.0
        %610 = vmatpush.xpose.msra.mxu0 0.0
        %611 = vmatpush.xpose.msra.mxu0 0.0
        %612 = vmatpush.xpose.msra.mxu0 0.0
        %613 = vmatpush.xpose.msra.mxu0 0.0
        %614 = vmatpush.xpose.msra.mxu0 0.0
        %615 = vmatpush.xpose.msra.mxu0 0.0
        %616 = vmatpush.xpose.msra.mxu0 0.0
        %617 = vmatpush.xpose.msra.mxu0 0.0
        %618 = vmatpush.xpose.msra.mxu0 0.0
        %619 = vmatpush.xpose.msra.mxu0 0.0
        %620 = vmatpush.xpose.msra.mxu0 %v603
        %621 = vmatmul.f32.gmra.mxu0 %v601
        %v622 = vpop.f32.mrf.mxu0
        %v623 = vadd.f32 0.0, %v622
        %624 = vdwg.mxu0
        %625 = vrot.lane.b32.xlu0 %v528, 96
        %v626 = vpop.permute.xlu0 %625
        %627 = vrot.lane.b32.xlu0 %v548, 96
        %v628 = vpop.permute.xlu0 %627
        %v629 = vsel %vm570, %v626, 0
        %v631 = vsel %vm570, %v628, 0
        %633 = vmatpush.xpose.msra.mxu0 0.0
        %634 = vmatpush.xpose.msra.mxu0 0.0
        %635 = vmatpush.xpose.msra.mxu0 0.0
        %636 = vmatpush.xpose.msra.mxu0 0.0
        %637 = vmatpush.xpose.msra.mxu0 0.0
        %638 = vmatpush.xpose.msra.mxu0 0.0
        %639 = vmatpush.xpose.msra.mxu0 0.0
        %640 = vmatpush.xpose.msra.mxu0 0.0
        %641 = vmatpush.xpose.msra.mxu0 0.0
        %642 = vmatpush.xpose.msra.mxu0 0.0
        %643 = vmatpush.xpose.msra.mxu0 0.0
        %644 = vmatpush.xpose.msra.mxu0 0.0
        %645 = vmatpush.xpose.msra.mxu0 0.0
        %646 = vmatpush.xpose.msra.mxu0 0.0
        %647 = vmatpush.xpose.msra.mxu0 0.0
        %648 = vmatpush.xpose.msra.mxu0 %v631
        %649 = vmatmul.f32.gmra.mxu0 %v629
        %v650 = vpop.f32.mrf.mxu0
        %v651 = vadd.f32 0.0, %v650
        %652 = vdwg.mxu0
        %653 = vrot.lane.b32.xlu0 %v528, 80
        %v654 = vpop.permute.xlu0 %653
        %655 = vrot.lane.b32.xlu0 %v548, 80
        %v656 = vpop.permute.xlu0 %655
        %v657 = vsel %vm570, %v654, 0
        %v659 = vsel %vm570, %v656, 0
        %661 = vmatpush.xpose.msra.mxu0 0.0
        %662 = vmatpush.xpose.msra.mxu0 0.0
        %663 = vmatpush.xpose.msra.mxu0 0.0
        %664 = vmatpush.xpose.msra.mxu0 0.0
        %665 = vmatpush.xpose.msra.mxu0 0.0
        %666 = vmatpush.xpose.msra.mxu0 0.0
        %667 = vmatpush.xpose.msra.mxu0 0.0
        %668 = vmatpush.xpose.msra.mxu0 0.0
        %669 = vmatpush.xpose.msra.mxu0 0.0
        %670 = vmatpush.xpose.msra.mxu0 0.0
        %671 = vmatpush.xpose.msra.mxu0 0.0
        %672 = vmatpush.xpose.msra.mxu0 0.0
        %673 = vmatpush.xpose.msra.mxu0 0.0
        %674 = vmatpush.xpose.msra.mxu0 0.0
        %675 = vmatpush.xpose.msra.mxu0 0.0
        %676 = vmatpush.xpose.msra.mxu0 %v659
        %677 = vmatmul.f32.gmra.mxu0 %v657
        %v678 = vpop.f32.mrf.mxu0
        %v679 = vadd.f32 0.0, %v678
        %680 = vdwg.mxu0
        %681 = vrot.lane.b32.xlu0 %v528, 64
        %v682 = vpop.permute.xlu0 %681
        %683 = vrot.lane.b32.xlu0 %v548, 64
        %v684 = vpop.permute.xlu0 %683
        %v685 = vsel %vm570, %v682, 0
        %v687 = vsel %vm570, %v684, 0
        %689 = vmatpush.xpose.msra.mxu0 0.0
        %690 = vmatpush.xpose.msra.mxu0 0.0
        %691 = vmatpush.xpose.msra.mxu0 0.0
        %692 = vmatpush.xpose.msra.mxu0 0.0
        %693 = vmatpush.xpose.msra.mxu0 0.0
        %694 = vmatpush.xpose.msra.mxu0 0.0
        %695 = vmatpush.xpose.msra.mxu0 0.0
        %696 = vmatpush.xpose.msra.mxu0 0.0
        %697 = vmatpush.xpose.msra.mxu0 0.0
        %698 = vmatpush.xpose.msra.mxu0 0.0
        %699 = vmatpush.xpose.msra.mxu0 0.0
        %700 = vmatpush.xpose.msra.mxu0 0.0
        %701 = vmatpush.xpose.msra.mxu0 0.0
        %702 = vmatpush.xpose.msra.mxu0 0.0
        %703 = vmatpush.xpose.msra.mxu0 0.0
        %704 = vmatpush.xpose.msra.mxu0 %v687
        %705 = vmatmul.f32.gmra.mxu0 %v685
        %v706 = vpop.f32.mrf.mxu0
        %v707 = vadd.f32 0.0, %v706
        %708 = vdwg.mxu0
        %709 = vrot.lane.b32.xlu0 %v528, 48
        %v710 = vpop.permute.xlu0 %709
        %711 = vrot.lane.b32.xlu0 %v548, 48
        %v712 = vpop.permute.xlu0 %711
        %v713 = vsel %vm570, %v710, 0
        %v715 = vsel %vm570, %v712, 0
        %717 = vmatpush.xpose.msra.mxu0 0.0
        %718 = vmatpush.xpose.msra.mxu0 0.0
        %719 = vmatpush.xpose.msra.mxu0 0.0
        %720 = vmatpush.xpose.msra.mxu0 0.0
        %721 = vmatpush.xpose.msra.mxu0 0.0
        %722 = vmatpush.xpose.msra.mxu0 0.0
        %723 = vmatpush.xpose.msra.mxu0 0.0
        %724 = vmatpush.xpose.msra.mxu0 0.0
        %725 = vmatpush.xpose.msra.mxu0 0.0
        %726 = vmatpush.xpose.msra.mxu0 0.0
        %727 = vmatpush.xpose.msra.mxu0 0.0
        %728 = vmatpush.xpose.msra.mxu0 0.0
        %729 = vmatpush.xpose.msra.mxu0 0.0
        %730 = vmatpush.xpose.msra.mxu0 0.0
        %731 = vmatpush.xpose.msra.mxu0 0.0
        %732 = vmatpush.xpose.msra.mxu0 %v715
        %733 = vmatmul.f32.gmra.mxu0 %v713
        %v734 = vpop.f32.mrf.mxu0
        %v735 = vadd.f32 0.0, %v734
        %736 = vdwg.mxu0
        %737 = vrot.lane.b32.xlu0 %v528, 32
        %v738 = vpop.permute.xlu0 %737
        %739 = vrot.lane.b32.xlu0 %v548, 32
        %v740 = vpop.permute.xlu0 %739
        %v741 = vsel %vm570, %v738, 0
        %v743 = vsel %vm570, %v740, 0
        %745 = vmatpush.xpose.msra.mxu0 0.0
        %746 = vmatpush.xpose.msra.mxu0 0.0
        %747 = vmatpush.xpose.msra.mxu0 0.0
        %748 = vmatpush.xpose.msra.mxu0 0.0
        %749 = vmatpush.xpose.msra.mxu0 0.0
        %750 = vmatpush.xpose.msra.mxu0 0.0
        %751 = vmatpush.xpose.msra.mxu0 0.0
        %752 = vmatpush.xpose.msra.mxu0 0.0
        %753 = vmatpush.xpose.msra.mxu0 0.0
        %754 = vmatpush.xpose.msra.mxu0 0.0
        %755 = vmatpush.xpose.msra.mxu0 0.0
        %756 = vmatpush.xpose.msra.mxu0 0.0
        %757 = vmatpush.xpose.msra.mxu0 0.0
        %758 = vmatpush.xpose.msra.mxu0 0.0
        %759 = vmatpush.xpose.msra.mxu0 0.0
        %760 = vmatpush.xpose.msra.mxu0 %v743
        %761 = vmatmul.f32.gmra.mxu0 %v741
        %v762 = vpop.f32.mrf.mxu0
        %v763 = vadd.f32 0.0, %v762
        %764 = vdwg.mxu0
        %765 = vrot.lane.b32.xlu0 %v528, 16
        %v766 = vpop.permute.xlu0 %765
        %767 = vrot.lane.b32.xlu0 %v548, 16
        %v768 = vpop.permute.xlu0 %767
        %v769 = vsel %vm570, %v766, 0
        %v771 = vsel %vm570, %v768, 0
        %773 = vmatpush.xpose.msra.mxu0 0.0
        %774 = vmatpush.xpose.msra.mxu0 0.0
        %775 = vmatpush.xpose.msra.mxu0 0.0
        %776 = vmatpush.xpose.msra.mxu0 0.0
        %777 = vmatpush.xpose.msra.mxu0 0.0
        %778 = vmatpush.xpose.msra.mxu0 0.0
        %779 = vmatpush.xpose.msra.mxu0 0.0
        %780 = vmatpush.xpose.msra.mxu0 0.0
        %781 = vmatpush.xpose.msra.mxu0 0.0
        %782 = vmatpush.xpose.msra.mxu0 0.0
        %783 = vmatpush.xpose.msra.mxu0 0.0
        %784 = vmatpush.xpose.msra.mxu0 0.0
        %785 = vmatpush.xpose.msra.mxu0 0.0
        %786 = vmatpush.xpose.msra.mxu0 0.0
        %787 = vmatpush.xpose.msra.mxu0 0.0
        %788 = vmatpush.xpose.msra.mxu0 %v771
        %789 = vmatmul.f32.gmra.mxu0 %v769
        %v790 = vpop.f32.mrf.mxu0
        %v791 = vadd.f32 0.0, %v790
        %792 = vdwg.mxu0
        %vm793 = vcmask 64512
        %v794 = vsel %vm793, %v595, -inf
        %795 = vmax.xlane.f32.xlu0 %v794
        %v796 = vpop.xlane.xlu0 %795
        %v797 = vsel %vm793, %v623, -inf
        %798 = vmax.xlane.f32.xlu0 %v797
        %v799 = vpop.xlane.xlu0 %798
        %v800 = vsel %vm793, %v651, -inf
        %801 = vmax.xlane.f32.xlu0 %v800
        %v802 = vpop.xlane.xlu0 %801
        %v803 = vsel %vm793, %v679, -inf
        %804 = vmax.xlane.f32.xlu0 %v803
        %v805 = vpop.xlane.xlu0 %804
        %v806 = vsel %vm793, %v707, -inf
        %807 = vmax.xlane.f32.xlu0 %v806
        %v808 = vpop.xlane.xlu0 %807
        %v809 = vsel %vm793, %v735, -inf
        %810 = vmax.xlane.f32.xlu0 %v809
        %v811 = vpop.xlane.xlu0 %810
        %v812 = vsel %vm793, %v763, -inf
        %813 = vmax.xlane.f32.xlu0 %v812
        %v814 = vpop.xlane.xlu0 %813
        %v815 = vsel %vm793, %v791, -inf
        %816 = vmax.xlane.f32.xlu0 %v815
        %v817 = vpop.xlane.xlu0 %816
        %v818 = vsub.f32 %v595, %v796
        %v819 = vsub.f32 %v623, %v799
        %v820 = vsub.f32 %v651, %v802
        %v821 = vsub.f32 %v679, %v805
        %v822 = vsub.f32 %v707, %v808
        %v823 = vsub.f32 %v735, %v811
        %v824 = vsub.f32 %v763, %v814
        %v825 = vsub.f32 %v791, %v817
        %v826 = vmul.f32 %v818, 1.442695
        %v827 = vpow.pop %v826
        %v828 = vmul.f32 %v819, 1.442695
        %v829 = vpow.pop %v828
        %v830 = vmul.f32 %v820, 1.442695
        %v831 = vpow.pop %v830
        %v832 = vmul.f32 %v821, 1.442695
        %v833 = vpow.pop %v832
        %v834 = vmul.f32 %v822, 1.442695
        %v835 = vpow.pop %v834
        %v836 = vmul.f32 %v823, 1.442695
        %v837 = vpow.pop %v836
        %v838 = vmul.f32 %v824, 1.442695
        %v839 = vpow.pop %v838
        %v840 = vmul.f32 %v825, 1.442695
        %v841 = vpow.pop %v840
        %v842 = vsel %vm793, %v827, 0.0
        %843 = vadd.xlane.f32.xlu0 %v842
        %v844 = vpop.xlane.xlu0 %843
        %v845 = vsel %vm793, %v829, 0.0
        %846 = vadd.xlane.f32.xlu0 %v845
        %v847 = vpop.xlane.xlu0 %846
        %v848 = vsel %vm793, %v831, 0.0
        %849 = vadd.xlane.f32.xlu0 %v848
        %v850 = vpop.xlane.xlu0 %849
        %v851 = vsel %vm793, %v833, 0.0
        %852 = vadd.xlane.f32.xlu0 %v851
        %v853 = vpop.xlane.xlu0 %852
        %v854 = vsel %vm793, %v835, 0.0
        %855 = vadd.xlane.f32.xlu0 %v854
        %v856 = vpop.xlane.xlu0 %855
        %v857 = vsel %vm793, %v837, 0.0
        %858 = vadd.xlane.f32.xlu0 %v857
        %v859 = vpop.xlane.xlu0 %858
        %v860 = vsel %vm793, %v839, 0.0
        %861 = vadd.xlane.f32.xlu0 %v860
        %v862 = vpop.xlane.xlu0 %861
        %v863 = vsel %vm793, %v841, 0.0
        %864 = vadd.xlane.f32.xlu0 %v863
        %v865 = vpop.xlane.xlu0 %864
        %v866 = vrcp.pop %v844
        %v867 = vmul.f32 %v844, %v866
        %v868 = vsub.f32 1.0, %v867
        %v869 = vmul.f32 %v866, %v868
        %v870 = vadd.f32 %v866, %v869
        %vm871 = vweird.f32 %v844
        %vm872 = vweird.f32 %v866
        %vm873 = vmor %vm871, %vm872
        %v874 = vsel %vm873, %v866, %v870
        %v875 = vand.u32 2147483647, %v844
        %vm876 = vcmp.eq.f32.partialorder %v875, 8.507059e+37
        %v877 = vand.u32 %v844, 2147483648
        %v878 = vor.u32 1.1754944e-38, %v877
        %v879 = vsel %vm876, %v878, %v874
        %v880 = vmul.f32 %v827, %v879
        %v881 = vrcp.pop %v847
        %v882 = vmul.f32 %v847, %v881
        %v883 = vsub.f32 1.0, %v882
        %v884 = vmul.f32 %v881, %v883
        %v885 = vadd.f32 %v881, %v884
        %vm886 = vweird.f32 %v847
        %vm887 = vweird.f32 %v881
        %vm888 = vmor %vm886, %vm887
        %v889 = vsel %vm888, %v881, %v885
        %v890 = vand.u32 2147483647, %v847
        %vm891 = vcmp.eq.f32.partialorder %v890, 8.507059e+37
        %v892 = vand.u32 %v847, 2147483648
        %v893 = vor.u32 1.1754944e-38, %v892
        %v894 = vsel %vm891, %v893, %v889
        %v895 = vmul.f32 %v829, %v894
        %v896 = vrcp.pop %v850
        %v897 = vmul.f32 %v850, %v896
        %v898 = vsub.f32 1.0, %v897
        %v899 = vmul.f32 %v896, %v898
        %v900 = vadd.f32 %v896, %v899
        %vm901 = vweird.f32 %v850
        %vm902 = vweird.f32 %v896
        %vm903 = vmor %vm901, %vm902
        %v904 = vsel %vm903, %v896, %v900
        %v905 = vand.u32 2147483647, %v850
        %vm906 = vcmp.eq.f32.partialorder %v905, 8.507059e+37
        %v907 = vand.u32 %v850, 2147483648
        %v908 = vor.u32 1.1754944e-38, %v907
        %v909 = vsel %vm906, %v908, %v904
        %v910 = vmul.f32 %v831, %v909
        %v911 = vrcp.pop %v853
        %v912 = vmul.f32 %v853, %v911
        %v913 = vsub.f32 1.0, %v912
        %v914 = vmul.f32 %v911, %v913
        %v915 = vadd.f32 %v911, %v914
        %vm916 = vweird.f32 %v853
        %vm917 = vweird.f32 %v911
        %vm918 = vmor %vm916, %vm917
        %v919 = vsel %vm918, %v911, %v915
        %v920 = vand.u32 2147483647, %v853
        %vm921 = vcmp.eq.f32.partialorder %v920, 8.507059e+37
        %v922 = vand.u32 %v853, 2147483648
        %v923 = vor.u32 1.1754944e-38, %v922
        %v924 = vsel %vm921, %v923, %v919
        %v925 = vmul.f32 %v833, %v924
        %v926 = vrcp.pop %v856
        %v927 = vmul.f32 %v856, %v926
        %v928 = vsub.f32 1.0, %v927
        %v929 = vmul.f32 %v926, %v928
        %v930 = vadd.f32 %v926, %v929
        %vm931 = vweird.f32 %v856
        %vm932 = vweird.f32 %v926
        %vm933 = vmor %vm931, %vm932
        %v934 = vsel %vm933, %v926, %v930
        %v935 = vand.u32 2147483647, %v856
        %vm936 = vcmp.eq.f32.partialorder %v935, 8.507059e+37
        %v937 = vand.u32 %v856, 2147483648
        %v938 = vor.u32 1.1754944e-38, %v937
        %v939 = vsel %vm936, %v938, %v934
        %v940 = vmul.f32 %v835, %v939
        %v941 = vrcp.pop %v859
        %v942 = vmul.f32 %v859, %v941
        %v943 = vsub.f32 1.0, %v942
        %v944 = vmul.f32 %v941, %v943
        %v945 = vadd.f32 %v941, %v944
        %vm946 = vweird.f32 %v859
        %vm947 = vweird.f32 %v941
        %vm948 = vmor %vm946, %vm947
        %v949 = vsel %vm948, %v941, %v945
        %v950 = vand.u32 2147483647, %v859
        %vm951 = vcmp.eq.f32.partialorder %v950, 8.507059e+37
        %v952 = vand.u32 %v859, 2147483648
        %v953 = vor.u32 1.1754944e-38, %v952
        %v954 = vsel %vm951, %v953, %v949
        %v955 = vmul.f32 %v837, %v954
        %v956 = vrcp.pop %v862
        %v957 = vmul.f32 %v862, %v956
        %v958 = vsub.f32 1.0, %v957
        %v959 = vmul.f32 %v956, %v958
        %v960 = vadd.f32 %v956, %v959
        %vm961 = vweird.f32 %v862
        %vm962 = vweird.f32 %v956
        %vm963 = vmor %vm961, %vm962
        %v964 = vsel %vm963, %v956, %v960
        %v965 = vand.u32 2147483647, %v862
        %vm966 = vcmp.eq.f32.partialorder %v965, 8.507059e+37
        %v967 = vand.u32 %v862, 2147483648
        %v968 = vor.u32 1.1754944e-38, %v967
        %v969 = vsel %vm966, %v968, %v964
        %v970 = vmul.f32 %v839, %v969
        %v971 = vrcp.pop %v865
        %v972 = vmul.f32 %v865, %v971
        %v973 = vsub.f32 1.0, %v972
        %v974 = vmul.f32 %v971, %v973
        %v975 = vadd.f32 %v971, %v974
        %vm976 = vweird.f32 %v865
        %vm977 = vweird.f32 %v971
        %vm978 = vmor %vm976, %vm977
        %v979 = vsel %vm978, %v971, %v975
        %v980 = vand.u32 2147483647, %v865
        %vm981 = vcmp.eq.f32.partialorder %v980, 8.507059e+37
        %v982 = vand.u32 %v865, 2147483648
        %v983 = vor.u32 1.1754944e-38, %v982
        %v984 = vsel %vm981, %v983, %v979
        %v985 = vmul.f32 %v841, %v984
        %v987 = vsel %vm793, %v880, 0
        %989 = vmatpush.msra.mxu0 0.0
        %990 = vmatpush.msra.mxu0 0.0
        %991 = vmatpush.msra.mxu0 0.0
        %992 = vmatpush.msra.mxu0 0.0
        %993 = vmatpush.msra.mxu0 0.0
        %994 = vmatpush.msra.mxu0 0.0
        %995 = vmatpush.msra.mxu0 0.0
        %996 = vmatpush.msra.mxu0 0.0
        %997 = vmatpush.msra.mxu0 0.0
        %998 = vmatpush.msra.mxu0 0.0
        %999 = vmatpush.msra.mxu0 0.0
        %1000 = vmatpush.msra.mxu0 0.0
        %1001 = vmatpush.msra.mxu0 0.0
        %1002 = vmatpush.msra.mxu0 0.0
        %1003 = vmatpush.msra.mxu0 0.0
        %1004 = vmatpush.msra.mxu0 %v568
        %1005 = vmatmul.f32.gmra.mxu0 %v987
        %v1006 = vpop.f32.mrf.mxu0
        %v1007 = vadd.f32 0.0, %v1006
        %1008 = vdwg.mxu0
        %1010 = vrot.lane.b32.xlu0 %v568, 112
        %v1011 = vpop.permute.xlu0 %1010
        %v1014 = vsel %vm793, %v895, 0
        %1016 = vmatpush.msra.mxu0 0.0
        %1017 = vmatpush.msra.mxu0 0.0
        %1018 = vmatpush.msra.mxu0 0.0
        %1019 = vmatpush.msra.mxu0 0.0
        %1020 = vmatpush.msra.mxu0 0.0
        %1021 = vmatpush.msra.mxu0 0.0
        %1022 = vmatpush.msra.mxu0 0.0
        %1023 = vmatpush.msra.mxu0 0.0
        %1024 = vmatpush.msra.mxu0 0.0
        %1025 = vmatpush.msra.mxu0 0.0
        %1026 = vmatpush.msra.mxu0 0.0
        %1027 = vmatpush.msra.mxu0 0.0
        %1028 = vmatpush.msra.mxu0 0.0
        %1029 = vmatpush.msra.mxu0 0.0
        %1030 = vmatpush.msra.mxu0 0.0
        %1031 = vmatpush.msra.mxu0 %v1011
        %1032 = vmatmul.f32.gmra.mxu0 %v1014
        %v1033 = vpop.f32.mrf.mxu0
        %v1034 = vadd.f32 0.0, %v1033
        %1035 = vdwg.mxu0
        %1036 = vrot.lane.b32.xlu0 %v568, 96
        %v1037 = vpop.permute.xlu0 %1036
        %v1040 = vsel %vm793, %v910, 0
        %1042 = vmatpush.msra.mxu0 0.0
        %1043 = vmatpush.msra.mxu0 0.0
        %1044 = vmatpush.msra.mxu0 0.0
        %1045 = vmatpush.msra.mxu0 0.0
        %1046 = vmatpush.msra.mxu0 0.0
        %1047 = vmatpush.msra.mxu0 0.0
        %1048 = vmatpush.msra.mxu0 0.0
        %1049 = vmatpush.msra.mxu0 0.0
        %1050 = vmatpush.msra.mxu0 0.0
        %1051 = vmatpush.msra.mxu0 0.0
        %1052 = vmatpush.msra.mxu0 0.0
        %1053 = vmatpush.msra.mxu0 0.0
        %1054 = vmatpush.msra.mxu0 0.0
        %1055 = vmatpush.msra.mxu0 0.0
        %1056 = vmatpush.msra.mxu0 0.0
        %1057 = vmatpush.msra.mxu0 %v1037
        %1058 = vmatmul.f32.gmra.mxu0 %v1040
        %v1059 = vpop.f32.mrf.mxu0
        %v1060 = vadd.f32 0.0, %v1059
        %1061 = vdwg.mxu0
        %1062 = vrot.lane.b32.xlu0 %v568, 80
        %v1063 = vpop.permute.xlu0 %1062
        %v1066 = vsel %vm793, %v925, 0
        %1068 = vmatpush.msra.mxu0 0.0
        %1069 = vmatpush.msra.mxu0 0.0
        %1070 = vmatpush.msra.mxu0 0.0
        %1071 = vmatpush.msra.mxu0 0.0
        %1072 = vmatpush.msra.mxu0 0.0
        %1073 = vmatpush.msra.mxu0 0.0
        %1074 = vmatpush.msra.mxu0 0.0
        %1075 = vmatpush.msra.mxu0 0.0
        %1076 = vmatpush.msra.mxu0 0.0
        %1077 = vmatpush.msra.mxu0 0.0
        %1078 = vmatpush.msra.mxu0 0.0
        %1079 = vmatpush.msra.mxu0 0.0
        %1080 = vmatpush.msra.mxu0 0.0
        %1081 = vmatpush.msra.mxu0 0.0
        %1082 = vmatpush.msra.mxu0 0.0
        %1083 = vmatpush.msra.mxu0 %v1063
        %1084 = vmatmul.f32.gmra.mxu0 %v1066
        %v1085 = vpop.f32.mrf.mxu0
        %v1086 = vadd.f32 0.0, %v1085
        %1087 = vdwg.mxu0
        %1088 = vrot.lane.b32.xlu0 %v568, 64
        %v1089 = vpop.permute.xlu0 %1088
        %v1092 = vsel %vm793, %v940, 0
        %1094 = vmatpush.msra.mxu0 0.0
        %1095 = vmatpush.msra.mxu0 0.0
        %1096 = vmatpush.msra.mxu0 0.0
        %1097 = vmatpush.msra.mxu0 0.0
        %1098 = vmatpush.msra.mxu0 0.0
        %1099 = vmatpush.msra.mxu0 0.0
        %1100 = vmatpush.msra.mxu0 0.0
        %1101 = vmatpush.msra.mxu0 0.0
        %1102 = vmatpush.msra.mxu0 0.0
        %1103 = vmatpush.msra.mxu0 0.0
        %1104 = vmatpush.msra.mxu0 0.0
        %1105 = vmatpush.msra.mxu0 0.0
        %1106 = vmatpush.msra.mxu0 0.0
        %1107 = vmatpush.msra.mxu0 0.0
        %1108 = vmatpush.msra.mxu0 0.0
        %1109 = vmatpush.msra.mxu0 %v1089
        %1110 = vmatmul.f32.gmra.mxu0 %v1092
        %v1111 = vpop.f32.mrf.mxu0
        %v1112 = vadd.f32 0.0, %v1111
        %1113 = vdwg.mxu0
        %1114 = vrot.lane.b32.xlu0 %v568, 48
        %v1115 = vpop.permute.xlu0 %1114
        %v1118 = vsel %vm793, %v955, 0
        %1120 = vmatpush.msra.mxu0 0.0
        %1121 = vmatpush.msra.mxu0 0.0
        %1122 = vmatpush.msra.mxu0 0.0
        %1123 = vmatpush.msra.mxu0 0.0
        %1124 = vmatpush.msra.mxu0 0.0
        %1125 = vmatpush.msra.mxu0 0.0
        %1126 = vmatpush.msra.mxu0 0.0
        %1127 = vmatpush.msra.mxu0 0.0
        %1128 = vmatpush.msra.mxu0 0.0
        %1129 = vmatpush.msra.mxu0 0.0
        %1130 = vmatpush.msra.mxu0 0.0
        %1131 = vmatpush.msra.mxu0 0.0
        %1132 = vmatpush.msra.mxu0 0.0
        %1133 = vmatpush.msra.mxu0 0.0
        %1134 = vmatpush.msra.mxu0 0.0
        %1135 = vmatpush.msra.mxu0 %v1115
        %1136 = vmatmul.f32.gmra.mxu0 %v1118
        %v1137 = vpop.f32.mrf.mxu0
        %v1138 = vadd.f32 0.0, %v1137
        %1139 = vdwg.mxu0
        %1140 = vrot.lane.b32.xlu0 %v568, 32
        %v1141 = vpop.permute.xlu0 %1140
        %v1144 = vsel %vm793, %v970, 0
        %1146 = vmatpush.msra.mxu0 0.0
        %1147 = vmatpush.msra.mxu0 0.0
        %1148 = vmatpush.msra.mxu0 0.0
        %1149 = vmatpush.msra.mxu0 0.0
        %1150 = vmatpush.msra.mxu0 0.0
        %1151 = vmatpush.msra.mxu0 0.0
        %1152 = vmatpush.msra.mxu0 0.0
        %1153 = vmatpush.msra.mxu0 0.0
        %1154 = vmatpush.msra.mxu0 0.0
        %1155 = vmatpush.msra.mxu0 0.0
        %1156 = vmatpush.msra.mxu0 0.0
        %1157 = vmatpush.msra.mxu0 0.0
        %1158 = vmatpush.msra.mxu0 0.0
        %1159 = vmatpush.msra.mxu0 0.0
        %1160 = vmatpush.msra.mxu0 0.0
        %1161 = vmatpush.msra.mxu0 %v1141
        %1162 = vmatmul.f32.gmra.mxu0 %v1144
        %v1163 = vpop.f32.mrf.mxu0
        %v1164 = vadd.f32 0.0, %v1163
        %1165 = vdwg.mxu0
        %1166 = vrot.lane.b32.xlu0 %v568, 16
        %v1167 = vpop.permute.xlu0 %1166
        %v1170 = vsel %vm793, %v985, 0
        %1172 = vmatpush.msra.mxu0 0.0
        %1173 = vmatpush.msra.mxu0 0.0
        %1174 = vmatpush.msra.mxu0 0.0
        %1175 = vmatpush.msra.mxu0 0.0
        %1176 = vmatpush.msra.mxu0 0.0
        %1177 = vmatpush.msra.mxu0 0.0
        %1178 = vmatpush.msra.mxu0 0.0
        %1179 = vmatpush.msra.mxu0 0.0
        %1180 = vmatpush.msra.mxu0 0.0
        %1181 = vmatpush.msra.mxu0 0.0
        %1182 = vmatpush.msra.mxu0 0.0
        %1183 = vmatpush.msra.mxu0 0.0
        %1184 = vmatpush.msra.mxu0 0.0
        %1185 = vmatpush.msra.mxu0 0.0
        %1186 = vmatpush.msra.mxu0 0.0
        %1187 = vmatpush.msra.mxu0 %v1167
        %1188 = vmatmul.f32.gmra.mxu0 %v1170
        %v1189 = vpop.f32.mrf.mxu0
        %v1190 = vadd.f32 0.0, %v1189
        %1191 = vdwg.mxu0
        %1193 = vrot.lane.b32.xlu0 %v1034, 16
        %v1194 = vpop.permute.xlu0 %1193
        %1197 = vrot.lane.b32.xlu0 %v1060, 32
        %v1198 = vpop.permute.xlu0 %1197
        %1201 = vrot.lane.b32.xlu0 %v1086, 48
        %v1202 = vpop.permute.xlu0 %1201
        %1205 = vrot.lane.b32.xlu0 %v1112, 64
        %v1206 = vpop.permute.xlu0 %1205
        %1209 = vrot.lane.b32.xlu0 %v1138, 80
        %v1210 = vpop.permute.xlu0 %1209
        %1213 = vrot.lane.b32.xlu0 %v1164, 96
        %v1214 = vpop.permute.xlu0 %1213
        %1217 = vrot.lane.b32.xlu0 %v1190, 112
        %v1218 = vpop.permute.xlu0 %1217
        %v1220 = vsel %vm570, %v1007, %v1194
        %vm1221 = vcmask 261120
        %v1222 = vsel %vm1221, %v1220, %v1198
        %vm1223 = vcmask 392192
        %v1224 = vsel %vm1223, %v1222, %v1202
        %vm1225 = vcmask 523264
        %v1226 = vsel %vm1225, %v1224, %v1206
        %vm1227 = vcmask 654336
        %v1228 = vsel %vm1227, %v1226, %v1210
        %vm1229 = vcmask 785408
        %v1230 = vsel %vm1229, %v1228, %v1214
        %vm1231 = vcmask 916480
        %v1232 = vsel %vm1231, %v1230, %v1218
        %v1233 = vld [vmem:[#allocation5] sm:$0xff]
        %v1234 = vld [vmem:[#allocation5 + $0x8] sm:$0xff]
        %v1235 = vld [vmem:[#allocation5 + $0x10] sm:$0xff]
        %v1236 = vld [vmem:[#allocation5 + $0x18] sm:$0xff]
        %v1237 = vld [vmem:[#allocation5 + $0x20] sm:$0xff]
        %v1238 = vld [vmem:[#allocation5 + $0x28] sm:$0xff]
        %v1239 = vld [vmem:[#allocation5 + $0x30] sm:$0xff]
        %v1240 = vld [vmem:[#allocation5 + $0x38] sm:$0xff]
        %v1241 = vld [vmem:[#allocation5 + $0x40] sm:$0xff]
        %v1242 = vld [vmem:[#allocation5 + $0x48] sm:$0xff]
        %v1243 = vld [vmem:[#allocation5 + $0x50] sm:$0xff]
        %v1244 = vld [vmem:[#allocation5 + $0x58] sm:$0xff]
        %v1245 = vld [vmem:[#allocation5 + $0x60] sm:$0xff]
        %v1246 = vld [vmem:[#allocation5 + $0x68] sm:$0xff]
        %v1247 = vld [vmem:[#allocation5 + $0x70] sm:$0xff]
        %v1248 = vld [vmem:[#allocation5 + $0x78] sm:$0xff]
        %v1249 = vld [vmem:[%s4] sm:$0x1]
        %v1251 = vperm.slane %v1249, 0
        %1253 = vmatpush.msra.mxu0 %v1248
        %1254 = vmatpush.msra.mxu0 %v1247
        %1255 = vmatpush.msra.mxu0 %v1246
        %1256 = vmatpush.msra.mxu0 %v1245
        %1257 = vmatpush.msra.mxu0 %v1244
        %1258 = vmatpush.msra.mxu0 %v1243
        %1259 = vmatpush.msra.mxu0 %v1242
        %1260 = vmatpush.msra.mxu0 %v1241
        %1261 = vmatpush.msra.mxu0 %v1240
        %1262 = vmatpush.msra.mxu0 %v1239
        %1263 = vmatpush.msra.mxu0 %v1238
        %1264 = vmatpush.msra.mxu0 %v1237
        %1265 = vmatpush.msra.mxu0 %v1236
        %1266 = vmatpush.msra.mxu0 %v1235
        %1267 = vmatpush.msra.mxu0 %v1234
        %1268 = vmatpush.msra.mxu0 %v1233
        %1269 = vmatmul.f32.gmra.mxu0 %v1232
        %v1270 = vpop.f32.mrf.mxu0
        %v1271 = vadd.f32 %v1251, %v1270
        %1272 = vdwg.mxu0
        %v1273 = vadd.f32 %v449, %v1271
        %1274 = vadd.xlane.f32.xlu0 %v1273
        %v1275 = vpop.xlane.xlu0 %1274
        %v1276 = vrcp.pop 128.0
        %v1277 = vmul.f32 128.0, %v1276
        %v1278 = vsub.f32 1.0, %v1277
        %v1279 = vmul.f32 %v1276, %v1278
        %v1280 = vadd.f32 %v1276, %v1279
        %vm1281 = vweird.f32 %v1276
        %v1282 = vsel %vm1281, %v1276, %v1280
        %v1283 = vmul.f32 %v1275, %v1282
        %v1284 = vsub.f32 %v1273, %v1283
        %v1285 = vmul.f32 %v1284, %v1284
        %1286 = vadd.xlane.f32.xlu0 %v1285
        %v1287 = vpop.xlane.xlu0 %1286
        %v1288 = vmul.f32 %v1287, %v1282
        %v1289 = vadd.f32 %v1288, 1e-05
        %v1290 = vrsqrt.pop %v1289
        %v1291 = vmul.f32 %v1290, %v1289
        %v1292 = vmul.f32 %v1291, %v1290
        %v1293 = vmul.f32 0.5, %v1292
        %v1294 = vsub.f32 1.5, %v1293
        %v1295 = vmul.f32 %v1290, %v1294
        %vm1296 = vweird.f32 %v1289
        %vm1297 = vweird.f32 %v1290
        %vm1298 = vmor %vm1296, %vm1297
        %v1299 = vsel %vm1298, %v1290, %v1295
        %v1300 = vmul.f32 %v1284, %v1299
        %v1302 = vperm.slane %v450, 0
        %v1304 = vmul.f32 %v1300, %v1302
        %v1306 = vperm.slane %v452, 0
        %v1308 = vadd.f32 %v1304, %v1306
        %v1309 = vld [vmem:[#allocation7] sm:$0xff]
        %v1310 = vld [vmem:[#allocation7 + $0x8] sm:$0xff]
        %v1311 = vld [vmem:[#allocation7 + $0x10] sm:$0xff]
        %v1312 = vld [vmem:[#allocation7 + $0x18] sm:$0xff]
        %v1313 = vld [vmem:[#allocation7 + $0x20] sm:$0xff]
        %v1314 = vld [vmem:[#allocation7 + $0x28] sm:$0xff]
        %v1315 = vld [vmem:[#allocation7 + $0x30] sm:$0xff]
        %v1316 = vld [vmem:[#allocation7 + $0x38] sm:$0xff]
        %v1317 = vld [vmem:[#allocation7 + $0x40] sm:$0xff]
        %v1318 = vld [vmem:[#allocation7 + $0x48] sm:$0xff]
        %v1319 = vld [vmem:[#allocation7 + $0x50] sm:$0xff]
        %v1320 = vld [vmem:[#allocation7 + $0x58] sm:$0xff]
        %v1321 = vld [vmem:[#allocation7 + $0x60] sm:$0xff]
        %v1322 = vld [vmem:[#allocation7 + $0x68] sm:$0xff]
        %v1323 = vld [vmem:[#allocation7 + $0x70] sm:$0xff]
        %v1324 = vld [vmem:[#allocation7 + $0x78] sm:$0xff]
        %v1325 = vld [vmem:[#allocation7 + $0x80] sm:$0xff]
        %v1326 = vld [vmem:[#allocation7 + $0x88] sm:$0xff]
        %v1327 = vld [vmem:[#allocation7 + $0x90] sm:$0xff]
        %v1328 = vld [vmem:[#allocation7 + $0x98] sm:$0xff]
        %v1329 = vld [vmem:[#allocation7 + $0xa0] sm:$0xff]
        %v1330 = vld [vmem:[#allocation7 + $0xa8] sm:$0xff]
        %v1331 = vld [vmem:[#allocation7 + $0xb0] sm:$0xff]
        %v1332 = vld [vmem:[#allocation7 + $0xb8] sm:$0xff]
        %v1333 = vld [vmem:[#allocation7 + $0xc0] sm:$0xff]
        %v1334 = vld [vmem:[#allocation7 + $0xc8] sm:$0xff]
        %v1335 = vld [vmem:[#allocation7 + $0xd0] sm:$0xff]
        %v1336 = vld [vmem:[#allocation7 + $0xd8] sm:$0xff]
        %v1337 = vld [vmem:[#allocation7 + $0xe0] sm:$0xff]
        %v1338 = vld [vmem:[#allocation7 + $0xe8] sm:$0xff]
        %v1339 = vld [vmem:[#allocation7 + $0xf0] sm:$0xff]
        %v1340 = vld [vmem:[#allocation7 + $0xf8] sm:$0xff]
        %v1341 = vld [vmem:[#allocation7 + $0x100] sm:$0xff]
        %v1342 = vld [vmem:[#allocation7 + $0x108] sm:$0xff]
        %v1343 = vld [vmem:[#allocation7 + $0x110] sm:$0xff]
        %v1344 = vld [vmem:[#allocation7 + $0x118] sm:$0xff]
        %v1345 = vld [vmem:[#allocation7 + $0x120] sm:$0xff]
        %v1346 = vld [vmem:[#allocation7 + $0x128] sm:$0xff]
        %v1347 = vld [vmem:[#allocation7 + $0x130] sm:$0xff]
        %v1348 = vld [vmem:[#allocation7 + $0x138] sm:$0xff]
        %v1349 = vld [vmem:[#allocation7 + $0x140] sm:$0xff]
        %v1350 = vld [vmem:[#allocation7 + $0x148] sm:$0xff]
        %v1351 = vld [vmem:[#allocation7 + $0x150] sm:$0xff]
        %v1352 = vld [vmem:[#allocation7 + $0x158] sm:$0xff]
        %v1353 = vld [vmem:[#allocation7 + $0x160] sm:$0xff]
        %v1354 = vld [vmem:[#allocation7 + $0x168] sm:$0xff]
        %v1355 = vld [vmem:[#allocation7 + $0x170] sm:$0xff]
        %v1356 = vld [vmem:[#allocation7 + $0x178] sm:$0xff]
        %v1357 = vld [vmem:[#allocation7 + $0x180] sm:$0xff]
        %v1358 = vld [vmem:[#allocation7 + $0x188] sm:$0xff]
        %v1359 = vld [vmem:[#allocation7 + $0x190] sm:$0xff]
        %v1360 = vld [vmem:[#allocation7 + $0x198] sm:$0xff]
        %v1361 = vld [vmem:[#allocation7 + $0x1a0] sm:$0xff]
        %v1362 = vld [vmem:[#allocation7 + $0x1a8] sm:$0xff]
        %v1363 = vld [vmem:[#allocation7 + $0x1b0] sm:$0xff]
        %v1364 = vld [vmem:[#allocation7 + $0x1b8] sm:$0xff]
        %v1365 = vld [vmem:[#allocation7 + $0x1c0] sm:$0xff]
        %v1366 = vld [vmem:[#allocation7 + $0x1c8] sm:$0xff]
        %v1367 = vld [vmem:[#allocation7 + $0x1d0] sm:$0xff]
        %v1368 = vld [vmem:[#allocation7 + $0x1d8] sm:$0xff]
        %v1369 = vld [vmem:[#allocation7 + $0x1e0] sm:$0xff]
        %v1370 = vld [vmem:[#allocation7 + $0x1e8] sm:$0xff]
        %v1371 = vld [vmem:[#allocation7 + $0x1f0] sm:$0xff]
        %v1372 = vld [vmem:[#allocation7 + $0x1f8] sm:$0xff]
        %v1373 = vld [vmem:[%s6] sm:$0xf]
        %v1375 = vperm.slane %v1373, 0
        %v1376 = vperm.slane %v1373, 1
        %v1377 = vperm.slane %v1373, 2
        %v1378 = vperm.slane %v1373, 3
        %1383 = vmatpush.msra.mxu0 %v1369
        %1384 = vmatpush.msra.mxu0 %v1365
        %1385 = vmatpush.msra.mxu0 %v1361
        %1386 = vmatpush.msra.mxu0 %v1357
        %1387 = vmatpush.msra.mxu0 %v1353
        %1388 = vmatpush.msra.mxu0 %v1349
        %1389 = vmatpush.msra.mxu0 %v1345
        %1390 = vmatpush.msra.mxu0 %v1341
        %1391 = vmatpush.msra.mxu0 %v1337
        %1392 = vmatpush.msra.mxu0 %v1333
        %1393 = vmatpush.msra.mxu0 %v1329
        %1394 = vmatpush.msra.mxu0 %v1325
        %1395 = vmatpush.msra.mxu0 %v1321
        %1396 = vmatpush.msra.mxu0 %v1317
        %1397 = vmatpush.msra.mxu0 %v1313
        %1398 = vmatpush.msra.mxu0 %v1309
        %1399 = vmatmul.f32.gmra.mxu0 %v1308
        %v1400 = vpop.f32.mrf.mxu0
        %v1401 = vadd.f32 %v1375, %v1400
        %1402 = vdwg.mxu0
        %1403 = vmatpush.msra.mxu0 %v1370
        %1404 = vmatpush.msra.mxu0 %v1366
        %1405 = vmatpush.msra.mxu0 %v1362
        %1406 = vmatpush.msra.mxu0 %v1358
        %1407 = vmatpush.msra.mxu0 %v1354
        %1408 = vmatpush.msra.mxu0 %v1350
        %1409 = vmatpush.msra.mxu0 %v1346
        %1410 = vmatpush.msra.mxu0 %v1342
        %1411 = vmatpush.msra.mxu0 %v1338
        %1412 = vmatpush.msra.mxu0 %v1334
        %1413 = vmatpush.msra.mxu0 %v1330
        %1414 = vmatpush.msra.mxu0 %v1326
        %1415 = vmatpush.msra.mxu0 %v1322
        %1416 = vmatpush.msra.mxu0 %v1318
        %1417 = vmatpush.msra.mxu0 %v1314
        %1418 = vmatpush.msra.mxu0 %v1310
        %1419 = vmatmul.f32.gmra.mxu0 %v1308
        %v1420 = vpop.f32.mrf.mxu0
        %v1421 = vadd.f32 %v1376, %v1420
        %1422 = vdwg.mxu0
        %1423 = vmatpush.msra.mxu0 %v1371
        %1424 = vmatpush.msra.mxu0 %v1367
        %1425 = vmatpush.msra.mxu0 %v1363
        %1426 = vmatpush.msra.mxu0 %v1359
        %1427 = vmatpush.msra.mxu0 %v1355
        %1428 = vmatpush.msra.mxu0 %v1351
        %1429 = vmatpush.msra.mxu0 %v1347
        %1430 = vmatpush.msra.mxu0 %v1343
        %1431 = vmatpush.msra.mxu0 %v1339
        %1432 = vmatpush.msra.mxu0 %v1335
        %1433 = vmatpush.msra.mxu0 %v1331
        %1434 = vmatpush.msra.mxu0 %v1327
        %1435 = vmatpush.msra.mxu0 %v1323
        %1436 = vmatpush.msra.mxu0 %v1319
        %1437 = vmatpush.msra.mxu0 %v1315
        %1438 = vmatpush.msra.mxu0 %v1311
        %1439 = vmatmul.f32.gmra.mxu0 %v1308
        %v1440 = vpop.f32.mrf.mxu0
        %v1441 = vadd.f32 %v1377, %v1440
        %1442 = vdwg.mxu0
        %1443 = vmatpush.msra.mxu0 %v1372
        %1444 = vmatpush.msra.mxu0 %v1368
        %1445 = vmatpush.msra.mxu0 %v1364
        %1446 = vmatpush.msra.mxu0 %v1360
        %1447 = vmatpush.msra.mxu0 %v1356
        %1448 = vmatpush.msra.mxu0 %v1352
        %1449 = vmatpush.msra.mxu0 %v1348
        %1450 = vmatpush.msra.mxu0 %v1344
        %1451 = vmatpush.msra.mxu0 %v1340
        %1452 = vmatpush.msra.mxu0 %v1336
        %1453 = vmatpush.msra.mxu0 %v1332
        %1454 = vmatpush.msra.mxu0 %v1328
        %1455 = vmatpush.msra.mxu0 %v1324
        %1456 = vmatpush.msra.mxu0 %v1320
        %1457 = vmatpush.msra.mxu0 %v1316
        %1458 = vmatpush.msra.mxu0 %v1312
        %1459 = vmatmul.f32.gmra.mxu0 %v1308
        %v1460 = vpop.f32.mrf.mxu0
        %v1461 = vadd.f32 %v1378, %v1460
        %1462 = vdwg.mxu0
        %v1463 = vmax.f32 %v1401, 0.0
        %v1464 = vmax.f32 %v1421, 0.0
        %v1465 = vmax.f32 %v1441, 0.0
        %v1466 = vmax.f32 %v1461, 0.0
        %v1467 = vld [vmem:[#allocation8] sm:$0xff]
        %v1468 = vld [vmem:[#allocation8 + $0x8] sm:$0xff]
        %v1469 = vld [vmem:[#allocation8 + $0x10] sm:$0xff]
        %v1470 = vld [vmem:[#allocation8 + $0x18] sm:$0xff]
        %v1471 = vld [vmem:[#allocation8 + $0x20] sm:$0xff]
        %v1472 = vld [vmem:[#allocation8 + $0x28] sm:$0xff]
        %v1473 = vld [vmem:[#allocation8 + $0x30] sm:$0xff]
        %v1474 = vld [vmem:[#allocation8 + $0x38] sm:$0xff]
        %v1475 = vld [vmem:[#allocation8 + $0x40] sm:$0xff]
        %v1476 = vld [vmem:[#allocation8 + $0x48] sm:$0xff]
        %v1477 = vld [vmem:[#allocation8 + $0x50] sm:$0xff]
        %v1478 = vld [vmem:[#allocation8 + $0x58] sm:$0xff]
        %v1479 = vld [vmem:[#allocation8 + $0x60] sm:$0xff]
        %v1480 = vld [vmem:[#allocation8 + $0x68] sm:$0xff]
        %v1481 = vld [vmem:[#allocation8 + $0x70] sm:$0xff]
        %v1482 = vld [vmem:[#allocation8 + $0x78] sm:$0xff]
        %v1483 = vld [vmem:[#allocation8 + $0x80] sm:$0xff]
        %v1484 = vld [vmem:[#allocation8 + $0x88] sm:$0xff]
        %v1485 = vld [vmem:[#allocation8 + $0x90] sm:$0xff]
        %v1486 = vld [vmem:[#allocation8 + $0x98] sm:$0xff]
        %v1487 = vld [vmem:[#allocation8 + $0xa0] sm:$0xff]
        %v1488 = vld [vmem:[#allocation8 + $0xa8] sm:$0xff]
        %v1489 = vld [vmem:[#allocation8 + $0xb0] sm:$0xff]
        %v1490 = vld [vmem:[#allocation8 + $0xb8] sm:$0xff]
        %v1491 = vld [vmem:[#allocation8 + $0xc0] sm:$0xff]
        %v1492 = vld [vmem:[#allocation8 + $0xc8] sm:$0xff]
        %v1493 = vld [vmem:[#allocation8 + $0xd0] sm:$0xff]
        %v1494 = vld [vmem:[#allocation8 + $0xd8] sm:$0xff]
        %v1495 = vld [vmem:[#allocation8 + $0xe0] sm:$0xff]
        %v1496 = vld [vmem:[#allocation8 + $0xe8] sm:$0xff]
        %v1497 = vld [vmem:[#allocation8 + $0xf0] sm:$0xff]
        %v1498 = vld [vmem:[#allocation8 + $0xf8] sm:$0xff]
        %v1499 = vld [vmem:[#allocation8 + $0x100] sm:$0xff]
        %v1500 = vld [vmem:[#allocation8 + $0x108] sm:$0xff]
        %v1501 = vld [vmem:[#allocation8 + $0x110] sm:$0xff]
        %v1502 = vld [vmem:[#allocation8 + $0x118] sm:$0xff]
        %v1503 = vld [vmem:[#allocation8 + $0x120] sm:$0xff]
        %v1504 = vld [vmem:[#allocation8 + $0x128] sm:$0xff]
        %v1505 = vld [vmem:[#allocation8 + $0x130] sm:$0xff]
        %v1506 = vld [vmem:[#allocation8 + $0x138] sm:$0xff]
        %v1507 = vld [vmem:[#allocation8 + $0x140] sm:$0xff]
        %v1508 = vld [vmem:[#allocation8 + $0x148] sm:$0xff]
        %v1509 = vld [vmem:[#allocation8 + $0x150] sm:$0xff]
        %v1510 = vld [vmem:[#allocation8 + $0x158] sm:$0xff]
        %v1511 = vld [vmem:[#allocation8 + $0x160] sm:$0xff]
        %v1512 = vld [vmem:[#allocation8 + $0x168] sm:$0xff]
        %v1513 = vld [vmem:[#allocation8 + $0x170] sm:$0xff]
        %v1514 = vld [vmem:[#allocation8 + $0x178] sm:$0xff]
        %v1515 = vld [vmem:[#allocation8 + $0x180] sm:$0xff]
        %v1516 = vld [vmem:[#allocation8 + $0x188] sm:$0xff]
        %v1517 = vld [vmem:[#allocation8 + $0x190] sm:$0xff]
        %v1518 = vld [vmem:[#allocation8 + $0x198] sm:$0xff]
        %v1519 = vld [vmem:[#allocation8 + $0x1a0] sm:$0xff]
        %v1520 = vld [vmem:[#allocation8 + $0x1a8] sm:$0xff]
        %v1521 = vld [vmem:[#allocation8 + $0x1b0] sm:$0xff]
        %v1522 = vld [vmem:[#allocation8 + $0x1b8] sm:$0xff]
        %v1523 = vld [vmem:[#allocation8 + $0x1c0] sm:$0xff]
        %v1524 = vld [vmem:[#allocation8 + $0x1c8] sm:$0xff]
        %v1525 = vld [vmem:[#allocation8 + $0x1d0] sm:$0xff]
        %v1526 = vld [vmem:[#allocation8 + $0x1d8] sm:$0xff]
        %v1527 = vld [vmem:[#allocation8 + $0x1e0] sm:$0xff]
        %v1528 = vld [vmem:[#allocation8 + $0x1e8] sm:$0xff]
        %v1529 = vld [vmem:[#allocation8 + $0x1f0] sm:$0xff]
        %v1530 = vld [vmem:[#allocation8 + $0x1f8] sm:$0xff]
        %v1531 = vld [vmem:[%s8] sm:$0x1]
        %v1533 = vperm.slane %v1531, 0
        %1535 = vmatpush.msra.mxu0 %v1482
        %1536 = vmatpush.msra.mxu0 %v1481
        %1537 = vmatpush.msra.mxu0 %v1480
        %1538 = vmatpush.msra.mxu0 %v1479
        %1539 = vmatpush.msra.mxu0 %v1478
        %1540 = vmatpush.msra.mxu0 %v1477
        %1541 = vmatpush.msra.mxu0 %v1476
        %1542 = vmatpush.msra.mxu0 %v1475
        %1543 = vmatpush.msra.mxu0 %v1474
        %1544 = vmatpush.msra.mxu0 %v1473
        %1545 = vmatpush.msra.mxu0 %v1472
        %1546 = vmatpush.msra.mxu0 %v1471
        %1547 = vmatpush.msra.mxu0 %v1470
        %1548 = vmatpush.msra.mxu0 %v1469
        %1549 = vmatpush.msra.mxu0 %v1468
        %1550 = vmatpush.msra.mxu0 %v1467
        %1551 = vmatmul.f32.gmra.mxu0 %v1463
        %v1552 = vpop.f32.mrf.mxu0
        %v1553 = vadd.f32 %v1533, %v1552
        %1554 = vdwg.mxu0
        %1555 = vmatpush.msra.mxu0 %v1498
        %1556 = vmatpush.msra.mxu0 %v1497
        %1557 = vmatpush.msra.mxu0 %v1496
        %1558 = vmatpush.msra.mxu0 %v1495
        %1559 = vmatpush.msra.mxu0 %v1494
        %1560 = vmatpush.msra.mxu0 %v1493
        %1561 = vmatpush.msra.mxu0 %v1492
        %1562 = vmatpush.msra.mxu0 %v1491
        %1563 = vmatpush.msra.mxu0 %v1490
        %1564 = vmatpush.msra.mxu0 %v1489
        %1565 = vmatpush.msra.mxu0 %v1488
        %1566 = vmatpush.msra.mxu0 %v1487
        %1567 = vmatpush.msra.mxu0 %v1486
        %1568 = vmatpush.msra.mxu0 %v1485
        %1569 = vmatpush.msra.mxu0 %v1484
        %1570 = vmatpush.msra.mxu0 %v1483
        %1571 = vmatmul.f32.gmra.mxu0 %v1464
        %v1572 = vpop.f32.mrf.mxu0
        %v1573 = vadd.f32 %v1553, %v1572
        %1574 = vdwg.mxu0
        %1575 = vmatpush.msra.mxu0 %v1514
        %1576 = vmatpush.msra.mxu0 %v1513
        %1577 = vmatpush.msra.mxu0 %v1512
        %1578 = vmatpush.msra.mxu0 %v1511
        %1579 = vmatpush.msra.mxu0 %v1510
        %1580 = vmatpush.msra.mxu0 %v1509
        %1581 = vmatpush.msra.mxu0 %v1508
        %1582 = vmatpush.msra.mxu0 %v1507
        %1583 = vmatpush.msra.mxu0 %v1506
        %1584 = vmatpush.msra.mxu0 %v1505
        %1585 = vmatpush.msra.mxu0 %v1504
        %1586 = vmatpush.msra.mxu0 %v1503
        %1587 = vmatpush.msra.mxu0 %v1502
        %1588 = vmatpush.msra.mxu0 %v1501
        %1589 = vmatpush.msra.mxu0 %v1500
        %1590 = vmatpush.msra.mxu0 %v1499
        %1591 = vmatmul.f32.gmra.mxu0 %v1465
        %v1592 = vpop.f32.mrf.mxu0
        %v1593 = vadd.f32 %v1573, %v1592
        %1594 = vdwg.mxu0
        %1595 = vmatpush.msra.mxu0 %v1530
        %1596 = vmatpush.msra.mxu0 %v1529
        %1597 = vmatpush.msra.mxu0 %v1528
        %1598 = vmatpush.msra.mxu0 %v1527
        %1599 = vmatpush.msra.mxu0 %v1526
        %1600 = vmatpush.msra.mxu0 %v1525
        %1601 = vmatpush.msra.mxu0 %v1524
        %1602 = vmatpush.msra.mxu0 %v1523
        %1603 = vmatpush.msra.mxu0 %v1522
        %1604 = vmatpush.msra.mxu0 %v1521
        %1605 = vmatpush.msra.mxu0 %v1520
        %1606 = vmatpush.msra.mxu0 %v1519
        %1607 = vmatpush.msra.mxu0 %v1518
        %1608 = vmatpush.msra.mxu0 %v1517
        %1609 = vmatpush.msra.mxu0 %v1516
        %1610 = vmatpush.msra.mxu0 %v1515
        %1611 = vmatmul.f32.gmra.mxu0 %v1466
        %v1612 = vpop.f32.mrf.mxu0
        %v1613 = vadd.f32 %v1593, %v1612
        %1614 = vdwg.mxu0
        %v1615 = vadd.f32 %v1308, %v1613
        %1616 = vadd.xlane.f32.xlu0 %v1615
        %v1617 = vpop.xlane.xlu0 %1616
        %v1618 = vmul.f32 %v1617, %v1282
        %v1619 = vsub.f32 %v1615, %v1618
        %v1620 = vmul.f32 %v1619, %v1619
        %1621 = vadd.xlane.f32.xlu0 %v1620
        %v1622 = vpop.xlane.xlu0 %1621
        %v1623 = vmul.f32 %v1622, %v1282
        %v1624 = vadd.f32 %v1623, 1e-05
        %v1625 = vrsqrt.pop %v1624
        %v1626 = vmul.f32 %v1625, %v1624
        %v1627 = vmul.f32 %v1626, %v1625
        %v1628 = vmul.f32 0.5, %v1627
        %v1629 = vsub.f32 1.5, %v1628
        %v1630 = vmul.f32 %v1625, %v1629
        %vm1631 = vweird.f32 %v1624
        %vm1632 = vweird.f32 %v1625
        %vm1633 = vmor %vm1631, %vm1632
        %v1634 = vsel %vm1633, %v1625, %v1630
        %v1635 = vmul.f32 %v1619, %v1634
        %v1637 = vperm.slane %v451, 0
        %v1639 = vmul.f32 %v1635, %v1637
        %v1641 = vperm.slane %v453, 0
        %v1643 = vadd.f32 %v1639, %v1641
        %s1644 = scalar_lea.vmem %s9, 2
        %v1645 = vld [vmem:[%s1644] sm:$0x1]
        %v1646 = vld [vmem:[%s1644 + $0x1] sm:$0x1]
        %s1647 = scalar_lea.vmem %s10, 2
        %v1648 = vld [vmem:[%s1647] sm:$0x1]
        %v1649 = vld [vmem:[%s1647 + $0x1] sm:$0x1]
        %s1650 = scalar_lea.vmem [#allocation2], 384
        %v1651 = vld [vmem:[%s1650] sm:$0xff]
        %v1652 = vld [vmem:[%s1650 + $0x8] sm:$0xff]
        %v1653 = vld [vmem:[%s1650 + $0x10] sm:$0xff]
        %v1654 = vld [vmem:[%s1650 + $0x18] sm:$0xff]
        %v1655 = vld [vmem:[%s1650 + $0x20] sm:$0xff]
        %v1656 = vld [vmem:[%s1650 + $0x28] sm:$0xff]
        %v1657 = vld [vmem:[%s1650 + $0x30] sm:$0xff]
        %v1658 = vld [vmem:[%s1650 + $0x38] sm:$0xff]
        %v1659 = vld [vmem:[%s1650 + $0x40] sm:$0xff]
        %v1660 = vld [vmem:[%s1650 + $0x48] sm:$0xff]
        %v1661 = vld [vmem:[%s1650 + $0x50] sm:$0xff]
        %v1662 = vld [vmem:[%s1650 + $0x58] sm:$0xff]
        %v1663 = vld [vmem:[%s1650 + $0x60] sm:$0xff]
        %v1664 = vld [vmem:[%s1650 + $0x68] sm:$0xff]
        %v1665 = vld [vmem:[%s1650 + $0x70] sm:$0xff]
        %v1666 = vld [vmem:[%s1650 + $0x78] sm:$0xff]
        %v1667 = vld [vmem:[%s1650 + $0x80] sm:$0xff]
        %v1668 = vld [vmem:[%s1650 + $0x88] sm:$0xff]
        %v1669 = vld [vmem:[%s1650 + $0x90] sm:$0xff]
        %v1670 = vld [vmem:[%s1650 + $0x98] sm:$0xff]
        %v1671 = vld [vmem:[%s1650 + $0xa0] sm:$0xff]
        %v1672 = vld [vmem:[%s1650 + $0xa8] sm:$0xff]
        %v1673 = vld [vmem:[%s1650 + $0xb0] sm:$0xff]
        %v1674 = vld [vmem:[%s1650 + $0xb8] sm:$0xff]
        %v1675 = vld [vmem:[%s1650 + $0xc0] sm:$0xff]
        %v1676 = vld [vmem:[%s1650 + $0xc8] sm:$0xff]
        %v1677 = vld [vmem:[%s1650 + $0xd0] sm:$0xff]
        %v1678 = vld [vmem:[%s1650 + $0xd8] sm:$0xff]
        %v1679 = vld [vmem:[%s1650 + $0xe0] sm:$0xff]
        %v1680 = vld [vmem:[%s1650 + $0xe8] sm:$0xff]
        %v1681 = vld [vmem:[%s1650 + $0xf0] sm:$0xff]
        %v1682 = vld [vmem:[%s1650 + $0xf8] sm:$0xff]
        %v1683 = vld [vmem:[%s1650 + $0x100] sm:$0xff]
        %v1684 = vld [vmem:[%s1650 + $0x108] sm:$0xff]
        %v1685 = vld [vmem:[%s1650 + $0x110] sm:$0xff]
        %v1686 = vld [vmem:[%s1650 + $0x118] sm:$0xff]
        %v1687 = vld [vmem:[%s1650 + $0x120] sm:$0xff]
        %v1688 = vld [vmem:[%s1650 + $0x128] sm:$0xff]
        %v1689 = vld [vmem:[%s1650 + $0x130] sm:$0xff]
        %v1690 = vld [vmem:[%s1650 + $0x138] sm:$0xff]
        %v1691 = vld [vmem:[%s1650 + $0x140] sm:$0xff]
        %v1692 = vld [vmem:[%s1650 + $0x148] sm:$0xff]
        %v1693 = vld [vmem:[%s1650 + $0x150] sm:$0xff]
        %v1694 = vld [vmem:[%s1650 + $0x158] sm:$0xff]
        %v1695 = vld [vmem:[%s1650 + $0x160] sm:$0xff]
        %v1696 = vld [vmem:[%s1650 + $0x168] sm:$0xff]
        %v1697 = vld [vmem:[%s1650 + $0x170] sm:$0xff]
        %v1698 = vld [vmem:[%s1650 + $0x178] sm:$0xff]
        %s1699 = scalar_lea.vmem %s2, 3
        %v1700 = vld [vmem:[%s1699] sm:$0x7]
        %v1702 = vperm.slane %v1700, 0
        %v1703 = vperm.slane %v1700, 1
        %v1704 = vperm.slane %v1700, 2
        %1708 = vmatpush.msra.mxu0 %v1696
        %1709 = vmatpush.msra.mxu0 %v1693
        %1710 = vmatpush.msra.mxu0 %v1690
        %1711 = vmatpush.msra.mxu0 %v1687
        %1712 = vmatpush.msra.mxu0 %v1684
        %1713 = vmatpush.msra.mxu0 %v1681
        %1714 = vmatpush.msra.mxu0 %v1678
        %1715 = vmatpush.msra.mxu0 %v1675
        %1716 = vmatpush.msra.mxu0 %v1672
        %1717 = vmatpush.msra.mxu0 %v1669
        %1718 = vmatpush.msra.mxu0 %v1666
        %1719 = vmatpush.msra.mxu0 %v1663
        %1720 = vmatpush.msra.mxu0 %v1660
        %1721 = vmatpush.msra.mxu0 %v1657
        %1722 = vmatpush.msra.mxu0 %v1654
        %1723 = vmatpush.msra.mxu0 %v1651
        %1724 = vmatmul.f32.gmra.mxu0 %v1643
        %v1725 = vpop.f32.mrf.mxu0
        %v1726 = vadd.f32 %v1702, %v1725
        %1727 = vdwg.mxu0
        %1728 = vmatpush.msra.mxu0 %v1697
        %1729 = vmatpush.msra.mxu0 %v1694
        %1730 = vmatpush.msra.mxu0 %v1691
        %1731 = vmatpush.msra.mxu0 %v1688
        %1732 = vmatpush.msra.mxu0 %v1685
        %1733 = vmatpush.msra.mxu0 %v1682
        %1734 = vmatpush.msra.mxu0 %v1679
        %1735 = vmatpush.msra.mxu0 %v1676
        %1736 = vmatpush.msra.mxu0 %v1673
        %1737 = vmatpush.msra.mxu0 %v1670
        %1738 = vmatpush.msra.mxu0 %v1667
        %1739 = vmatpush.msra.mxu0 %v1664
        %1740 = vmatpush.msra.mxu0 %v1661
        %1741 = vmatpush.msra.mxu0 %v1658
        %1742 = vmatpush.msra.mxu0 %v1655
        %1743 = vmatpush.msra.mxu0 %v1652
        %1744 = vmatmul.f32.gmra.mxu0 %v1643
        %v1745 = vpop.f32.mrf.mxu0
        %v1746 = vadd.f32 %v1703, %v1745
        %1747 = vdwg.mxu0
        %1748 = vmatpush.msra.mxu0 %v1698
        %1749 = vmatpush.msra.mxu0 %v1695
        %1750 = vmatpush.msra.mxu0 %v1692
        %1751 = vmatpush.msra.mxu0 %v1689
        %1752 = vmatpush.msra.mxu0 %v1686
        %1753 = vmatpush.msra.mxu0 %v1683
        %1754 = vmatpush.msra.mxu0 %v1680
        %1755 = vmatpush.msra.mxu0 %v1677
        %1756 = vmatpush.msra.mxu0 %v1674
        %1757 = vmatpush.msra.mxu0 %v1671
        %1758 = vmatpush.msra.mxu0 %v1668
        %1759 = vmatpush.msra.mxu0 %v1665
        %1760 = vmatpush.msra.mxu0 %v1662
        %1761 = vmatpush.msra.mxu0 %v1659
        %1762 = vmatpush.msra.mxu0 %v1656
        %1763 = vmatpush.msra.mxu0 %v1653
        %1764 = vmatmul.f32.gmra.mxu0 %v1643
        %v1765 = vpop.f32.mrf.mxu0
        %v1766 = vadd.f32 %v1704, %v1765
        %1767 = vdwg.mxu0
        %v1769 = vsel %vm570, %v1726, 0
        %v1772 = vsel %vm570, %v1746, 0
        %1774 = vmatpush.xpose.msra.mxu0 0.0
        %1775 = vmatpush.xpose.msra.mxu0 0.0
        %1776 = vmatpush.xpose.msra.mxu0 0.0
        %1777 = vmatpush.xpose.msra.mxu0 0.0
        %1778 = vmatpush.xpose.msra.mxu0 0.0
        %1779 = vmatpush.xpose.msra.mxu0 0.0
        %1780 = vmatpush.xpose.msra.mxu0 0.0
        %1781 = vmatpush.xpose.msra.mxu0 0.0
        %1782 = vmatpush.xpose.msra.mxu0 0.0
        %1783 = vmatpush.xpose.msra.mxu0 0.0
        %1784 = vmatpush.xpose.msra.mxu0 0.0
        %1785 = vmatpush.xpose.msra.mxu0 0.0
        %1786 = vmatpush.xpose.msra.mxu0 0.0
        %1787 = vmatpush.xpose.msra.mxu0 0.0
        %1788 = vmatpush.xpose.msra.mxu0 0.0
        %1789 = vmatpush.xpose.msra.mxu0 %v1772
        %1790 = vmatmul.f32.gmra.mxu0 %v1769
        %v1791 = vpop.f32.mrf.mxu0
        %v1792 = vadd.f32 0.0, %v1791
        %1793 = vdwg.mxu0
        %1794 = vrot.lane.b32.xlu0 %v1726, 112
        %v1795 = vpop.permute.xlu0 %1794
        %1796 = vrot.lane.b32.xlu0 %v1746, 112
        %v1797 = vpop.permute.xlu0 %1796
        %v1798 = vsel %vm570, %v1795, 0
        %v1800 = vsel %vm570, %v1797, 0
        %1802 = vmatpush.xpose.msra.mxu0 0.0
        %1803 = vmatpush.xpose.msra.mxu0 0.0
        %1804 = vmatpush.xpose.msra.mxu0 0.0
        %1805 = vmatpush.xpose.msra.mxu0 0.0
        %1806 = vmatpush.xpose.msra.mxu0 0.0
        %1807 = vmatpush.xpose.msra.mxu0 0.0
        %1808 = vmatpush.xpose.msra.mxu0 0.0
        %1809 = vmatpush.xpose.msra.mxu0 0.0
        %1810 = vmatpush.xpose.msra.mxu0 0.0
        %1811 = vmatpush.xpose.msra.mxu0 0.0
        %1812 = vmatpush.xpose.msra.mxu0 0.0
        %1813 = vmatpush.xpose.msra.mxu0 0.0
        %1814 = vmatpush.xpose.msra.mxu0 0.0
        %1815 = vmatpush.xpose.msra.mxu0 0.0
        %1816 = vmatpush.xpose.msra.mxu0 0.0
        %1817 = vmatpush.xpose.msra.mxu0 %v1800
        %1818 = vmatmul.f32.gmra.mxu0 %v1798
        %v1819 = vpop.f32.mrf.mxu0
        %v1820 = vadd.f32 0.0, %v1819
        %1821 = vdwg.mxu0
        %1822 = vrot.lane.b32.xlu0 %v1726, 96
        %v1823 = vpop.permute.xlu0 %1822
        %1824 = vrot.lane.b32.xlu0 %v1746, 96
        %v1825 = vpop.permute.xlu0 %1824
        %v1826 = vsel %vm570, %v1823, 0
        %v1828 = vsel %vm570, %v1825, 0
        %1830 = vmatpush.xpose.msra.mxu0 0.0
        %1831 = vmatpush.xpose.msra.mxu0 0.0
        %1832 = vmatpush.xpose.msra.mxu0 0.0
        %1833 = vmatpush.xpose.msra.mxu0 0.0
        %1834 = vmatpush.xpose.msra.mxu0 0.0
        %1835 = vmatpush.xpose.msra.mxu0 0.0
        %1836 = vmatpush.xpose.msra.mxu0 0.0
        %1837 = vmatpush.xpose.msra.mxu0 0.0
        %1838 = vmatpush.xpose.msra.mxu0 0.0
        %1839 = vmatpush.xpose.msra.mxu0 0.0
        %1840 = vmatpush.xpose.msra.mxu0 0.0
        %1841 = vmatpush.xpose.msra.mxu0 0.0
        %1842 = vmatpush.xpose.msra.mxu0 0.0
        %1843 = vmatpush.xpose.msra.mxu0 0.0
        %1844 = vmatpush.xpose.msra.mxu0 0.0
        %1845 = vmatpush.xpose.msra.mxu0 %v1828
        %1846 = vmatmul.f32.gmra.mxu0 %v1826
        %v1847 = vpop.f32.mrf.mxu0
        %v1848 = vadd.f32 0.0, %v1847
        %1849 = vdwg.mxu0
        %1850 = vrot.lane.b32.xlu0 %v1726, 80
        %v1851 = vpop.permute.xlu0 %1850
        %1852 = vrot.lane.b32.xlu0 %v1746, 80
        %v1853 = vpop.permute.xlu0 %1852
        %v1854 = vsel %vm570, %v1851, 0
        %v1856 = vsel %vm570, %v1853, 0
        %1858 = vmatpush.xpose.msra.mxu0 0.0
        %1859 = vmatpush.xpose.msra.mxu0 0.0
        %1860 = vmatpush.xpose.msra.mxu0 0.0
        %1861 = vmatpush.xpose.msra.mxu0 0.0
        %1862 = vmatpush.xpose.msra.mxu0 0.0
        %1863 = vmatpush.xpose.msra.mxu0 0.0
        %1864 = vmatpush.xpose.msra.mxu0 0.0
        %1865 = vmatpush.xpose.msra.mxu0 0.0
        %1866 = vmatpush.xpose.msra.mxu0 0.0
        %1867 = vmatpush.xpose.msra.mxu0 0.0
        %1868 = vmatpush.xpose.msra.mxu0 0.0
        %1869 = vmatpush.xpose.msra.mxu0 0.0
        %1870 = vmatpush.xpose.msra.mxu0 0.0
        %1871 = vmatpush.xpose.msra.mxu0 0.0
        %1872 = vmatpush.xpose.msra.mxu0 0.0
        %1873 = vmatpush.xpose.msra.mxu0 %v1856
        %1874 = vmatmul.f32.gmra.mxu0 %v1854
        %v1875 = vpop.f32.mrf.mxu0
        %v1876 = vadd.f32 0.0, %v1875
        %1877 = vdwg.mxu0
        %1878 = vrot.lane.b32.xlu0 %v1726, 64
        %v1879 = vpop.permute.xlu0 %1878
        %1880 = vrot.lane.b32.xlu0 %v1746, 64
        %v1881 = vpop.permute.xlu0 %1880
        %v1882 = vsel %vm570, %v1879, 0
        %v1884 = vsel %vm570, %v1881, 0
        %1886 = vmatpush.xpose.msra.mxu0 0.0
        %1887 = vmatpush.xpose.msra.mxu0 0.0
        %1888 = vmatpush.xpose.msra.mxu0 0.0
        %1889 = vmatpush.xpose.msra.mxu0 0.0
        %1890 = vmatpush.xpose.msra.mxu0 0.0
        %1891 = vmatpush.xpose.msra.mxu0 0.0
        %1892 = vmatpush.xpose.msra.mxu0 0.0
        %1893 = vmatpush.xpose.msra.mxu0 0.0
        %1894 = vmatpush.xpose.msra.mxu0 0.0
        %1895 = vmatpush.xpose.msra.mxu0 0.0
        %1896 = vmatpush.xpose.msra.mxu0 0.0
        %1897 = vmatpush.xpose.msra.mxu0 0.0
        %1898 = vmatpush.xpose.msra.mxu0 0.0
        %1899 = vmatpush.xpose.msra.mxu0 0.0
        %1900 = vmatpush.xpose.msra.mxu0 0.0
        %1901 = vmatpush.xpose.msra.mxu0 %v1884
        %1902 = vmatmul.f32.gmra.mxu0 %v1882
        %v1903 = vpop.f32.mrf.mxu0
        %v1904 = vadd.f32 0.0, %v1903
        %1905 = vdwg.mxu0
        %1906 = vrot.lane.b32.xlu0 %v1726, 48
        %v1907 = vpop.permute.xlu0 %1906
        %1908 = vrot.lane.b32.xlu0 %v1746, 48
        %v1909 = vpop.permute.xlu0 %1908
        %v1910 = vsel %vm570, %v1907, 0
        %v1912 = vsel %vm570, %v1909, 0
        %1914 = vmatpush.xpose.msra.mxu0 0.0
        %1915 = vmatpush.xpose.msra.mxu0 0.0
        %1916 = vmatpush.xpose.msra.mxu0 0.0
        %1917 = vmatpush.xpose.msra.mxu0 0.0
        %1918 = vmatpush.xpose.msra.mxu0 0.0
        %1919 = vmatpush.xpose.msra.mxu0 0.0
        %1920 = vmatpush.xpose.msra.mxu0 0.0
        %1921 = vmatpush.xpose.msra.mxu0 0.0
        %1922 = vmatpush.xpose.msra.mxu0 0.0
        %1923 = vmatpush.xpose.msra.mxu0 0.0
        %1924 = vmatpush.xpose.msra.mxu0 0.0
        %1925 = vmatpush.xpose.msra.mxu0 0.0
        %1926 = vmatpush.xpose.msra.mxu0 0.0
        %1927 = vmatpush.xpose.msra.mxu0 0.0
        %1928 = vmatpush.xpose.msra.mxu0 0.0
        %1929 = vmatpush.xpose.msra.mxu0 %v1912
        %1930 = vmatmul.f32.gmra.mxu0 %v1910
        %v1931 = vpop.f32.mrf.mxu0
        %v1932 = vadd.f32 0.0, %v1931
        %1933 = vdwg.mxu0
        %1934 = vrot.lane.b32.xlu0 %v1726, 32
        %v1935 = vpop.permute.xlu0 %1934
        %1936 = vrot.lane.b32.xlu0 %v1746, 32
        %v1937 = vpop.permute.xlu0 %1936
        %v1938 = vsel %vm570, %v1935, 0
        %v1940 = vsel %vm570, %v1937, 0
        %1942 = vmatpush.xpose.msra.mxu0 0.0
        %1943 = vmatpush.xpose.msra.mxu0 0.0
        %1944 = vmatpush.xpose.msra.mxu0 0.0
        %1945 = vmatpush.xpose.msra.mxu0 0.0
        %1946 = vmatpush.xpose.msra.mxu0 0.0
        %1947 = vmatpush.xpose.msra.mxu0 0.0
        %1948 = vmatpush.xpose.msra.mxu0 0.0
        %1949 = vmatpush.xpose.msra.mxu0 0.0
        %1950 = vmatpush.xpose.msra.mxu0 0.0
        %1951 = vmatpush.xpose.msra.mxu0 0.0
        %1952 = vmatpush.xpose.msra.mxu0 0.0
        %1953 = vmatpush.xpose.msra.mxu0 0.0
        %1954 = vmatpush.xpose.msra.mxu0 0.0
        %1955 = vmatpush.xpose.msra.mxu0 0.0
        %1956 = vmatpush.xpose.msra.mxu0 0.0
        %1957 = vmatpush.xpose.msra.mxu0 %v1940
        %1958 = vmatmul.f32.gmra.mxu0 %v1938
        %v1959 = vpop.f32.mrf.mxu0
        %v1960 = vadd.f32 0.0, %v1959
        %1961 = vdwg.mxu0
        %1962 = vrot.lane.b32.xlu0 %v1726, 16
        %v1963 = vpop.permute.xlu0 %1962
        %1964 = vrot.lane.b32.xlu0 %v1746, 16
        %v1965 = vpop.permute.xlu0 %1964
        %v1966 = vsel %vm570, %v1963, 0
        %v1968 = vsel %vm570, %v1965, 0
        %1970 = vmatpush.xpose.msra.mxu0 0.0
        %1971 = vmatpush.xpose.msra.mxu0 0.0
        %1972 = vmatpush.xpose.msra.mxu0 0.0
        %1973 = vmatpush.xpose.msra.mxu0 0.0
        %1974 = vmatpush.xpose.msra.mxu0 0.0
        %1975 = vmatpush.xpose.msra.mxu0 0.0
        %1976 = vmatpush.xpose.msra.mxu0 0.0
        %1977 = vmatpush.xpose.msra.mxu0 0.0
        %1978 = vmatpush.xpose.msra.mxu0 0.0
        %1979 = vmatpush.xpose.msra.mxu0 0.0
        %1980 = vmatpush.xpose.msra.mxu0 0.0
        %1981 = vmatpush.xpose.msra.mxu0 0.0
        %1982 = vmatpush.xpose.msra.mxu0 0.0
        %1983 = vmatpush.xpose.msra.mxu0 0.0
        %1984 = vmatpush.xpose.msra.mxu0 0.0
        %1985 = vmatpush.xpose.msra.mxu0 %v1968
        %1986 = vmatmul.f32.gmra.mxu0 %v1966
        %v1987 = vpop.f32.mrf.mxu0
        %v1988 = vadd.f32 0.0, %v1987
        %1989 = vdwg.mxu0
        %v1990 = vsel %vm793, %v1792, -inf
        %1991 = vmax.xlane.f32.xlu0 %v1990
        %v1992 = vpop.xlane.xlu0 %1991
        %v1993 = vsel %vm793, %v1820, -inf
        %1994 = vmax.xlane.f32.xlu0 %v1993
        %v1995 = vpop.xlane.xlu0 %1994
        %v1996 = vsel %vm793, %v1848, -inf
        %1997 = vmax.xlane.f32.xlu0 %v1996
        %v1998 = vpop.xlane.xlu0 %1997
        %v1999 = vsel %vm793, %v1876, -inf
        %2000 = vmax.xlane.f32.xlu0 %v1999
        %v2001 = vpop.xlane.xlu0 %2000
        %v2002 = vsel %vm793, %v1904, -inf
        %2003 = vmax.xlane.f32.xlu0 %v2002
        %v2004 = vpop.xlane.xlu0 %2003
        %v2005 = vsel %vm793, %v1932, -inf
        %2006 = vmax.xlane.f32.xlu0 %v2005
        %v2007 = vpop.xlane.xlu0 %2006
        %v2008 = vsel %vm793, %v1960, -inf
        %2009 = vmax.xlane.f32.xlu0 %v2008
        %v2010 = vpop.xlane.xlu0 %2009
        %v2011 = vsel %vm793, %v1988, -inf
        %2012 = vmax.xlane.f32.xlu0 %v2011
        %v2013 = vpop.xlane.xlu0 %2012
        %v2014 = vsub.f32 %v1792, %v1992
        %v2015 = vsub.f32 %v1820, %v1995
        %v2016 = vsub.f32 %v1848, %v1998
        %v2017 = vsub.f32 %v1876, %v2001
        %v2018 = vsub.f32 %v1904, %v2004
        %v2019 = vsub.f32 %v1932, %v2007
        %v2020 = vsub.f32 %v1960, %v2010
        %v2021 = vsub.f32 %v1988, %v2013
        %v2022 = vmul.f32 %v2014, 1.442695
        %v2023 = vpow.pop %v2022
        %v2024 = vmul.f32 %v2015, 1.442695
        %v2025 = vpow.pop %v2024
        %v2026 = vmul.f32 %v2016, 1.442695
        %v2027 = vpow.pop %v2026
        %v2028 = vmul.f32 %v2017, 1.442695
        %v2029 = vpow.pop %v2028
        %v2030 = vmul.f32 %v2018, 1.442695
        %v2031 = vpow.pop %v2030
        %v2032 = vmul.f32 %v2019, 1.442695
        %v2033 = vpow.pop %v2032
        %v2034 = vmul.f32 %v2020, 1.442695
        %v2035 = vpow.pop %v2034
        %v2036 = vmul.f32 %v2021, 1.442695
        %v2037 = vpow.pop %v2036
        %v2038 = vsel %vm793, %v2023, 0.0
        %2039 = vadd.xlane.f32.xlu0 %v2038
        %v2040 = vpop.xlane.xlu0 %2039
        %v2041 = vsel %vm793, %v2025, 0.0
        %2042 = vadd.xlane.f32.xlu0 %v2041
        %v2043 = vpop.xlane.xlu0 %2042
        %v2044 = vsel %vm793, %v2027, 0.0
        %2045 = vadd.xlane.f32.xlu0 %v2044
        %v2046 = vpop.xlane.xlu0 %2045
        %v2047 = vsel %vm793, %v2029, 0.0
        %2048 = vadd.xlane.f32.xlu0 %v2047
        %v2049 = vpop.xlane.xlu0 %2048
        %v2050 = vsel %vm793, %v2031, 0.0
        %2051 = vadd.xlane.f32.xlu0 %v2050
        %v2052 = vpop.xlane.xlu0 %2051
        %v2053 = vsel %vm793, %v2033, 0.0
        %2054 = vadd.xlane.f32.xlu0 %v2053
        %v2055 = vpop.xlane.xlu0 %2054
        %v2056 = vsel %vm793, %v2035, 0.0
        %2057 = vadd.xlane.f32.xlu0 %v2056
        %v2058 = vpop.xlane.xlu0 %2057
        %v2059 = vsel %vm793, %v2037, 0.0
        %2060 = vadd.xlane.f32.xlu0 %v2059
        %v2061 = vpop.xlane.xlu0 %2060
        %v2062 = vrcp.pop %v2040
        %v2063 = vmul.f32 %v2040, %v2062
        %v2064 = vsub.f32 1.0, %v2063
        %v2065 = vmul.f32 %v2062, %v2064
        %v2066 = vadd.f32 %v2062, %v2065
        %vm2067 = vweird.f32 %v2040
        %vm2068 = vweird.f32 %v2062
        %vm2069 = vmor %vm2067, %vm2068
        %v2070 = vsel %vm2069, %v2062, %v2066
        %v2071 = vand.u32 2147483647, %v2040
        %vm2072 = vcmp.eq.f32.partialorder %v2071, 8.507059e+37
        %v2073 = vand.u32 %v2040, 2147483648
        %v2074 = vor.u32 1.1754944e-38, %v2073
        %v2075 = vsel %vm2072, %v2074, %v2070
        %v2076 = vmul.f32 %v2023, %v2075
        %v2077 = vrcp.pop %v2043
        %v2078 = vmul.f32 %v2043, %v2077
        %v2079 = vsub.f32 1.0, %v2078
        %v2080 = vmul.f32 %v2077, %v2079
        %v2081 = vadd.f32 %v2077, %v2080
        %vm2082 = vweird.f32 %v2043
        %vm2083 = vweird.f32 %v2077
        %vm2084 = vmor %vm2082, %vm2083
        %v2085 = vsel %vm2084, %v2077, %v2081
        %v2086 = vand.u32 2147483647, %v2043
        %vm2087 = vcmp.eq.f32.partialorder %v2086, 8.507059e+37
        %v2088 = vand.u32 %v2043, 2147483648
        %v2089 = vor.u32 1.1754944e-38, %v2088
        %v2090 = vsel %vm2087, %v2089, %v2085
        %v2091 = vmul.f32 %v2025, %v2090
        %v2092 = vrcp.pop %v2046
        %v2093 = vmul.f32 %v2046, %v2092
        %v2094 = vsub.f32 1.0, %v2093
        %v2095 = vmul.f32 %v2092, %v2094
        %v2096 = vadd.f32 %v2092, %v2095
        %vm2097 = vweird.f32 %v2046
        %vm2098 = vweird.f32 %v2092
        %vm2099 = vmor %vm2097, %vm2098
        %v2100 = vsel %vm2099, %v2092, %v2096
        %v2101 = vand.u32 2147483647, %v2046
        %vm2102 = vcmp.eq.f32.partialorder %v2101, 8.507059e+37
        %v2103 = vand.u32 %v2046, 2147483648
        %v2104 = vor.u32 1.1754944e-38, %v2103
        %v2105 = vsel %vm2102, %v2104, %v2100
        %v2106 = vmul.f32 %v2027, %v2105
        %v2107 = vrcp.pop %v2049
        %v2108 = vmul.f32 %v2049, %v2107
        %v2109 = vsub.f32 1.0, %v2108
        %v2110 = vmul.f32 %v2107, %v2109
        %v2111 = vadd.f32 %v2107, %v2110
        %vm2112 = vweird.f32 %v2049
        %vm2113 = vweird.f32 %v2107
        %vm2114 = vmor %vm2112, %vm2113
        %v2115 = vsel %vm2114, %v2107, %v2111
        %v2116 = vand.u32 2147483647, %v2049
        %vm2117 = vcmp.eq.f32.partialorder %v2116, 8.507059e+37
        %v2118 = vand.u32 %v2049, 2147483648
        %v2119 = vor.u32 1.1754944e-38, %v2118
        %v2120 = vsel %vm2117, %v2119, %v2115
        %v2121 = vmul.f32 %v2029, %v2120
        %v2122 = vrcp.pop %v2052
        %v2123 = vmul.f32 %v2052, %v2122
        %v2124 = vsub.f32 1.0, %v2123
        %v2125 = vmul.f32 %v2122, %v2124
        %v2126 = vadd.f32 %v2122, %v2125
        %vm2127 = vweird.f32 %v2052
        %vm2128 = vweird.f32 %v2122
        %vm2129 = vmor %vm2127, %vm2128
        %v2130 = vsel %vm2129, %v2122, %v2126
        %v2131 = vand.u32 2147483647, %v2052
        %vm2132 = vcmp.eq.f32.partialorder %v2131, 8.507059e+37
        %v2133 = vand.u32 %v2052, 2147483648
        %v2134 = vor.u32 1.1754944e-38, %v2133
        %v2135 = vsel %vm2132, %v2134, %v2130
        %v2136 = vmul.f32 %v2031, %v2135
        %v2137 = vrcp.pop %v2055
        %v2138 = vmul.f32 %v2055, %v2137
        %v2139 = vsub.f32 1.0, %v2138
        %v2140 = vmul.f32 %v2137, %v2139
        %v2141 = vadd.f32 %v2137, %v2140
        %vm2142 = vweird.f32 %v2055
        %vm2143 = vweird.f32 %v2137
        %vm2144 = vmor %vm2142, %vm2143
        %v2145 = vsel %vm2144, %v2137, %v2141
        %v2146 = vand.u32 2147483647, %v2055
        %vm2147 = vcmp.eq.f32.partialorder %v2146, 8.507059e+37
        %v2148 = vand.u32 %v2055, 2147483648
        %v2149 = vor.u32 1.1754944e-38, %v2148
        %v2150 = vsel %vm2147, %v2149, %v2145
        %v2151 = vmul.f32 %v2033, %v2150
        %v2152 = vrcp.pop %v2058
        %v2153 = vmul.f32 %v2058, %v2152
        %v2154 = vsub.f32 1.0, %v2153
        %v2155 = vmul.f32 %v2152, %v2154
        %v2156 = vadd.f32 %v2152, %v2155
        %vm2157 = vweird.f32 %v2058
        %vm2158 = vweird.f32 %v2152
        %vm2159 = vmor %vm2157, %vm2158
        %v2160 = vsel %vm2159, %v2152, %v2156
        %v2161 = vand.u32 2147483647, %v2058
        %vm2162 = vcmp.eq.f32.partialorder %v2161, 8.507059e+37
        %v2163 = vand.u32 %v2058, 2147483648
        %v2164 = vor.u32 1.1754944e-38, %v2163
        %v2165 = vsel %vm2162, %v2164, %v2160
        %v2166 = vmul.f32 %v2035, %v2165
        %v2167 = vrcp.pop %v2061
        %v2168 = vmul.f32 %v2061, %v2167
        %v2169 = vsub.f32 1.0, %v2168
        %v2170 = vmul.f32 %v2167, %v2169
        %v2171 = vadd.f32 %v2167, %v2170
        %vm2172 = vweird.f32 %v2061
        %vm2173 = vweird.f32 %v2167
        %vm2174 = vmor %vm2172, %vm2173
        %v2175 = vsel %vm2174, %v2167, %v2171
        %v2176 = vand.u32 2147483647, %v2061
        %vm2177 = vcmp.eq.f32.partialorder %v2176, 8.507059e+37
        %v2178 = vand.u32 %v2061, 2147483648
        %v2179 = vor.u32 1.1754944e-38, %v2178
        %v2180 = vsel %vm2177, %v2179, %v2175
        %v2181 = vmul.f32 %v2037, %v2180
        %v2183 = vsel %vm793, %v2076, 0
        %2185 = vmatpush.msra.mxu0 0.0
        %2186 = vmatpush.msra.mxu0 0.0
        %2187 = vmatpush.msra.mxu0 0.0
        %2188 = vmatpush.msra.mxu0 0.0
        %2189 = vmatpush.msra.mxu0 0.0
        %2190 = vmatpush.msra.mxu0 0.0
        %2191 = vmatpush.msra.mxu0 0.0
        %2192 = vmatpush.msra.mxu0 0.0
        %2193 = vmatpush.msra.mxu0 0.0
        %2194 = vmatpush.msra.mxu0 0.0
        %2195 = vmatpush.msra.mxu0 0.0
        %2196 = vmatpush.msra.mxu0 0.0
        %2197 = vmatpush.msra.mxu0 0.0
        %2198 = vmatpush.msra.mxu0 0.0
        %2199 = vmatpush.msra.mxu0 0.0
        %2200 = vmatpush.msra.mxu0 %v1766
        %2201 = vmatmul.f32.gmra.mxu0 %v2183
        %v2202 = vpop.f32.mrf.mxu0
        %v2203 = vadd.f32 0.0, %v2202
        %2204 = vdwg.mxu0
        %2206 = vrot.lane.b32.xlu0 %v1766, 112
        %v2207 = vpop.permute.xlu0 %2206
        %v2210 = vsel %vm793, %v2091, 0
        %2212 = vmatpush.msra.mxu0 0.0
        %2213 = vmatpush.msra.mxu0 0.0
        %2214 = vmatpush.msra.mxu0 0.0
        %2215 = vmatpush.msra.mxu0 0.0
        %2216 = vmatpush.msra.mxu0 0.0
        %2217 = vmatpush.msra.mxu0 0.0
        %2218 = vmatpush.msra.mxu0 0.0
        %2219 = vmatpush.msra.mxu0 0.0
        %2220 = vmatpush.msra.mxu0 0.0
        %2221 = vmatpush.msra.mxu0 0.0
        %2222 = vmatpush.msra.mxu0 0.0
        %2223 = vmatpush.msra.mxu0 0.0
        %2224 = vmatpush.msra.mxu0 0.0
        %2225 = vmatpush.msra.mxu0 0.0
        %2226 = vmatpush.msra.mxu0 0.0
        %2227 = vmatpush.msra.mxu0 %v2207
        %2228 = vmatmul.f32.gmra.mxu0 %v2210
        %v2229 = vpop.f32.mrf.mxu0
        %v2230 = vadd.f32 0.0, %v2229
        %2231 = vdwg.mxu0
        %2232 = vrot.lane.b32.xlu0 %v1766, 96
        %v2233 = vpop.permute.xlu0 %2232
        %v2236 = vsel %vm793, %v2106, 0
        %2238 = vmatpush.msra.mxu0 0.0
        %2239 = vmatpush.msra.mxu0 0.0
        %2240 = vmatpush.msra.mxu0 0.0
        %2241 = vmatpush.msra.mxu0 0.0
        %2242 = vmatpush.msra.mxu0 0.0
        %2243 = vmatpush.msra.mxu0 0.0
        %2244 = vmatpush.msra.mxu0 0.0
        %2245 = vmatpush.msra.mxu0 0.0
        %2246 = vmatpush.msra.mxu0 0.0
        %2247 = vmatpush.msra.mxu0 0.0
        %2248 = vmatpush.msra.mxu0 0.0
        %2249 = vmatpush.msra.mxu0 0.0
        %2250 = vmatpush.msra.mxu0 0.0
        %2251 = vmatpush.msra.mxu0 0.0
        %2252 = vmatpush.msra.mxu0 0.0
        %2253 = vmatpush.msra.mxu0 %v2233
        %2254 = vmatmul.f32.gmra.mxu0 %v2236
        %v2255 = vpop.f32.mrf.mxu0
        %v2256 = vadd.f32 0.0, %v2255
        %2257 = vdwg.mxu0
        %2258 = vrot.lane.b32.xlu0 %v1766, 80
        %v2259 = vpop.permute.xlu0 %2258
        %v2262 = vsel %vm793, %v2121, 0
        %2264 = vmatpush.msra.mxu0 0.0
        %2265 = vmatpush.msra.mxu0 0.0
        %2266 = vmatpush.msra.mxu0 0.0
        %2267 = vmatpush.msra.mxu0 0.0
        %2268 = vmatpush.msra.mxu0 0.0
        %2269 = vmatpush.msra.mxu0 0.0
        %2270 = vmatpush.msra.mxu0 0.0
        %2271 = vmatpush.msra.mxu0 0.0
        %2272 = vmatpush.msra.mxu0 0.0
        %2273 = vmatpush.msra.mxu0 0.0
        %2274 = vmatpush.msra.mxu0 0.0
        %2275 = vmatpush.msra.mxu0 0.0
        %2276 = vmatpush.msra.mxu0 0.0
        %2277 = vmatpush.msra.mxu0 0.0
        %2278 = vmatpush.msra.mxu0 0.0
        %2279 = vmatpush.msra.mxu0 %v2259
        %2280 = vmatmul.f32.gmra.mxu0 %v2262
        %v2281 = vpop.f32.mrf.mxu0
        %v2282 = vadd.f32 0.0, %v2281
        %2283 = vdwg.mxu0
        %2284 = vrot.lane.b32.xlu0 %v1766, 64
        %v2285 = vpop.permute.xlu0 %2284
        %v2288 = vsel %vm793, %v2136, 0
        %2290 = vmatpush.msra.mxu0 0.0
        %2291 = vmatpush.msra.mxu0 0.0
        %2292 = vmatpush.msra.mxu0 0.0
        %2293 = vmatpush.msra.mxu0 0.0
        %2294 = vmatpush.msra.mxu0 0.0
        %2295 = vmatpush.msra.mxu0 0.0
        %2296 = vmatpush.msra.mxu0 0.0
        %2297 = vmatpush.msra.mxu0 0.0
        %2298 = vmatpush.msra.mxu0 0.0
        %2299 = vmatpush.msra.mxu0 0.0
        %2300 = vmatpush.msra.mxu0 0.0
        %2301 = vmatpush.msra.mxu0 0.0
        %2302 = vmatpush.msra.mxu0 0.0
        %2303 = vmatpush.msra.mxu0 0.0
        %2304 = vmatpush.msra.mxu0 0.0
        %2305 = vmatpush.msra.mxu0 %v2285
        %2306 = vmatmul.f32.gmra.mxu0 %v2288
        %v2307 = vpop.f32.mrf.mxu0
        %v2308 = vadd.f32 0.0, %v2307
        %2309 = vdwg.mxu0
        %2310 = vrot.lane.b32.xlu0 %v1766, 48
        %v2311 = vpop.permute.xlu0 %2310
        %v2314 = vsel %vm793, %v2151, 0
        %2316 = vmatpush.msra.mxu0 0.0
        %2317 = vmatpush.msra.mxu0 0.0
        %2318 = vmatpush.msra.mxu0 0.0
        %2319 = vmatpush.msra.mxu0 0.0
        %2320 = vmatpush.msra.mxu0 0.0
        %2321 = vmatpush.msra.mxu0 0.0
        %2322 = vmatpush.msra.mxu0 0.0
        %2323 = vmatpush.msra.mxu0 0.0
        %2324 = vmatpush.msra.mxu0 0.0
        %2325 = vmatpush.msra.mxu0 0.0
        %2326 = vmatpush.msra.mxu0 0.0
        %2327 = vmatpush.msra.mxu0 0.0
        %2328 = vmatpush.msra.mxu0 0.0
        %2329 = vmatpush.msra.mxu0 0.0
        %2330 = vmatpush.msra.mxu0 0.0
        %2331 = vmatpush.msra.mxu0 %v2311
        %2332 = vmatmul.f32.gmra.mxu0 %v2314
        %v2333 = vpop.f32.mrf.mxu0
        %v2334 = vadd.f32 0.0, %v2333
        %2335 = vdwg.mxu0
        %2336 = vrot.lane.b32.xlu0 %v1766, 32
        %v2337 = vpop.permute.xlu0 %2336
        %v2340 = vsel %vm793, %v2166, 0
        %2342 = vmatpush.msra.mxu0 0.0
        %2343 = vmatpush.msra.mxu0 0.0
        %2344 = vmatpush.msra.mxu0 0.0
        %2345 = vmatpush.msra.mxu0 0.0
        %2346 = vmatpush.msra.mxu0 0.0
        %2347 = vmatpush.msra.mxu0 0.0
        %2348 = vmatpush.msra.mxu0 0.0
        %2349 = vmatpush.msra.mxu0 0.0
        %2350 = vmatpush.msra.mxu0 0.0
        %2351 = vmatpush.msra.mxu0 0.0
        %2352 = vmatpush.msra.mxu0 0.0
        %2353 = vmatpush.msra.mxu0 0.0
        %2354 = vmatpush.msra.mxu0 0.0
        %2355 = vmatpush.msra.mxu0 0.0
        %2356 = vmatpush.msra.mxu0 0.0
        %2357 = vmatpush.msra.mxu0 %v2337
        %2358 = vmatmul.f32.gmra.mxu0 %v2340
        %v2359 = vpop.f32.mrf.mxu0
        %v2360 = vadd.f32 0.0, %v2359
        %2361 = vdwg.mxu0
        %2362 = vrot.lane.b32.xlu0 %v1766, 16
        %v2363 = vpop.permute.xlu0 %2362
        %v2366 = vsel %vm793, %v2181, 0
        %2368 = vmatpush.msra.mxu0 0.0
        %2369 = vmatpush.msra.mxu0 0.0
        %2370 = vmatpush.msra.mxu0 0.0
        %2371 = vmatpush.msra.mxu0 0.0
        %2372 = vmatpush.msra.mxu0 0.0
        %2373 = vmatpush.msra.mxu0 0.0
        %2374 = vmatpush.msra.mxu0 0.0
        %2375 = vmatpush.msra.mxu0 0.0
        %2376 = vmatpush.msra.mxu0 0.0
        %2377 = vmatpush.msra.mxu0 0.0
        %2378 = vmatpush.msra.mxu0 0.0
        %2379 = vmatpush.msra.mxu0 0.0
        %2380 = vmatpush.msra.mxu0 0.0
        %2381 = vmatpush.msra.mxu0 0.0
        %2382 = vmatpush.msra.mxu0 0.0
        %2383 = vmatpush.msra.mxu0 %v2363
        %2384 = vmatmul.f32.gmra.mxu0 %v2366
        %v2385 = vpop.f32.mrf.mxu0
        %v2386 = vadd.f32 0.0, %v2385
        %2387 = vdwg.mxu0
        %2389 = vrot.lane.b32.xlu0 %v2230, 16
        %v2390 = vpop.permute.xlu0 %2389
        %2393 = vrot.lane.b32.xlu0 %v2256, 32
        %v2394 = vpop.permute.xlu0 %2393
        %2397 = vrot.lane.b32.xlu0 %v2282, 48
        %v2398 = vpop.permute.xlu0 %2397
        %2401 = vrot.lane.b32.xlu0 %v2308, 64
        %v2402 = vpop.permute.xlu0 %2401
        %2405 = vrot.lane.b32.xlu0 %v2334, 80
        %v2406 = vpop.permute.xlu0 %2405
        %2409 = vrot.lane.b32.xlu0 %v2360, 96
        %v2410 = vpop.permute.xlu0 %2409
        %2413 = vrot.lane.b32.xlu0 %v2386, 112
        %v2414 = vpop.permute.xlu0 %2413
        %v2416 = vsel %vm570, %v2203, %v2390
        %v2417 = vsel %vm1221, %v2416, %v2394
        %v2418 = vsel %vm1223, %v2417, %v2398
        %v2419 = vsel %vm1225, %v2418, %v2402
        %v2420 = vsel %vm1227, %v2419, %v2406
        %v2421 = vsel %vm1229, %v2420, %v2410
        %v2422 = vsel %vm1231, %v2421, %v2414
        %s2423 = scalar_lea.vmem [#allocation5], 128
        %v2424 = vld [vmem:[%s2423] sm:$0xff]
        %v2425 = vld [vmem:[%s2423 + $0x8] sm:$0xff]
        %v2426 = vld [vmem:[%s2423 + $0x10] sm:$0xff]
        %v2427 = vld [vmem:[%s2423 + $0x18] sm:$0xff]
        %v2428 = vld [vmem:[%s2423 + $0x20] sm:$0xff]
        %v2429 = vld [vmem:[%s2423 + $0x28] sm:$0xff]
        %v2430 = vld [vmem:[%s2423 + $0x30] sm:$0xff]
        %v2431 = vld [vmem:[%s2423 + $0x38] sm:$0xff]
        %v2432 = vld [vmem:[%s2423 + $0x40] sm:$0xff]
        %v2433 = vld [vmem:[%s2423 + $0x48] sm:$0xff]
        %v2434 = vld [vmem:[%s2423 + $0x50] sm:$0xff]
        %v2435 = vld [vmem:[%s2423 + $0x58] sm:$0xff]
        %v2436 = vld [vmem:[%s2423 + $0x60] sm:$0xff]
        %v2437 = vld [vmem:[%s2423 + $0x68] sm:$0xff]
        %v2438 = vld [vmem:[%s2423 + $0x70] sm:$0xff]
        %v2439 = vld [vmem:[%s2423 + $0x78] sm:$0xff]
        %s2440 = scalar_lea.vmem %s4, 1
        %v2441 = vld [vmem:[%s2440] sm:$0x1]
        %v2443 = vperm.slane %v2441, 0
        %2445 = vmatpush.msra.mxu0 %v2439
        %2446 = vmatpush.msra.mxu0 %v2438
        %2447 = vmatpush.msra.mxu0 %v2437
        %2448 = vmatpush.msra.mxu0 %v2436
        %2449 = vmatpush.msra.mxu0 %v2435
        %2450 = vmatpush.msra.mxu0 %v2434
        %2451 = vmatpush.msra.mxu0 %v2433
        %2452 = vmatpush.msra.mxu0 %v2432
        %2453 = vmatpush.msra.mxu0 %v2431
        %2454 = vmatpush.msra.mxu0 %v2430
        %2455 = vmatpush.msra.mxu0 %v2429
        %2456 = vmatpush.msra.mxu0 %v2428
        %2457 = vmatpush.msra.mxu0 %v2427
        %2458 = vmatpush.msra.mxu0 %v2426
        %2459 = vmatpush.msra.mxu0 %v2425
        %2460 = vmatpush.msra.mxu0 %v2424
        %2461 = vmatmul.f32.gmra.mxu0 %v2422
        %v2462 = vpop.f32.mrf.mxu0
        %v2463 = vadd.f32 %v2443, %v2462
        %2464 = vdwg.mxu0
        %v2465 = vadd.f32 %v1643, %v2463
        %2466 = vadd.xlane.f32.xlu0 %v2465
        %v2467 = vpop.xlane.xlu0 %2466
        %v2468 = vmul.f32 %v2467, %v1282
        %v2469 = vsub.f32 %v2465, %v2468
        %v2470 = vmul.f32 %v2469, %v2469
        %2471 = vadd.xlane.f32.xlu0 %v2470
        %v2472 = vpop.xlane.xlu0 %2471
        %v2473 = vmul.f32 %v2472, %v1282
        %v2474 = vadd.f32 %v2473, 1e-05
        %v2475 = vrsqrt.pop %v2474
        %v2476 = vmul.f32 %v2475, %v2474
        %v2477 = vmul.f32 %v2476, %v2475
        %v2478 = vmul.f32 0.5, %v2477
        %v2479 = vsub.f32 1.5, %v2478
        %v2480 = vmul.f32 %v2475, %v2479
        %vm2481 = vweird.f32 %v2474
        %vm2482 = vweird.f32 %v2475
        %vm2483 = vmor %vm2481, %vm2482
        %v2484 = vsel %vm2483, %v2475, %v2480
        %v2485 = vmul.f32 %v2469, %v2484
        %v2487 = vperm.slane %v1645, 0
        %v2489 = vmul.f32 %v2485, %v2487
        %v2491 = vperm.slane %v1648, 0
        %v2493 = vadd.f32 %v2489, %v2491
        %s2494 = scalar_lea.vmem [#allocation7], 512
        %v2495 = vld [vmem:[%s2494] sm:$0xff]
        %v2496 = vld [vmem:[%s2494 + $0x8] sm:$0xff]
        %v2497 = vld [vmem:[%s2494 + $0x10] sm:$0xff]
        %v2498 = vld [vmem:[%s2494 + $0x18] sm:$0xff]
        %v2499 = vld [vmem:[%s2494 + $0x20] sm:$0xff]
        %v2500 = vld [vmem:[%s2494 + $0x28] sm:$0xff]
        %v2501 = vld [vmem:[%s2494 + $0x30] sm:$0xff]
        %v2502 = vld [vmem:[%s2494 + $0x38] sm:$0xff]
        %v2503 = vld [vmem:[%s2494 + $0x40] sm:$0xff]
        %v2504 = vld [vmem:[%s2494 + $0x48] sm:$0xff]
        %v2505 = vld [vmem:[%s2494 + $0x50] sm:$0xff]
        %v2506 = vld [vmem:[%s2494 + $0x58] sm:$0xff]
        %v2507 = vld [vmem:[%s2494 + $0x60] sm:$0xff]
        %v2508 = vld [vmem:[%s2494 + $0x68] sm:$0xff]
        %v2509 = vld [vmem:[%s2494 + $0x70] sm:$0xff]
        %v2510 = vld [vmem:[%s2494 + $0x78] sm:$0xff]
        %v2511 = vld [vmem:[%s2494 + $0x80] sm:$0xff]
        %v2512 = vld [vmem:[%s2494 + $0x88] sm:$0xff]
        %v2513 = vld [vmem:[%s2494 + $0x90] sm:$0xff]
        %v2514 = vld [vmem:[%s2494 + $0x98] sm:$0xff]
        %v2515 = vld [vmem:[%s2494 + $0xa0] sm:$0xff]
        %v2516 = vld [vmem:[%s2494 + $0xa8] sm:$0xff]
        %v2517 = vld [vmem:[%s2494 + $0xb0] sm:$0xff]
        %v2518 = vld [vmem:[%s2494 + $0xb8] sm:$0xff]
        %v2519 = vld [vmem:[%s2494 + $0xc0] sm:$0xff]
        %v2520 = vld [vmem:[%s2494 + $0xc8] sm:$0xff]
        %v2521 = vld [vmem:[%s2494 + $0xd0] sm:$0xff]
        %v2522 = vld [vmem:[%s2494 + $0xd8] sm:$0xff]
        %v2523 = vld [vmem:[%s2494 + $0xe0] sm:$0xff]
        %v2524 = vld [vmem:[%s2494 + $0xe8] sm:$0xff]
        %v2525 = vld [vmem:[%s2494 + $0xf0] sm:$0xff]
        %v2526 = vld [vmem:[%s2494 + $0xf8] sm:$0xff]
        %v2527 = vld [vmem:[%s2494 + $0x100] sm:$0xff]
        %v2528 = vld [vmem:[%s2494 + $0x108] sm:$0xff]
        %v2529 = vld [vmem:[%s2494 + $0x110] sm:$0xff]
        %v2530 = vld [vmem:[%s2494 + $0x118] sm:$0xff]
        %v2531 = vld [vmem:[%s2494 + $0x120] sm:$0xff]
        %v2532 = vld [vmem:[%s2494 + $0x128] sm:$0xff]
        %v2533 = vld [vmem:[%s2494 + $0x130] sm:$0xff]
        %v2534 = vld [vmem:[%s2494 + $0x138] sm:$0xff]
        %v2535 = vld [vmem:[%s2494 + $0x140] sm:$0xff]
        %v2536 = vld [vmem:[%s2494 + $0x148] sm:$0xff]
        %v2537 = vld [vmem:[%s2494 + $0x150] sm:$0xff]
        %v2538 = vld [vmem:[%s2494 + $0x158] sm:$0xff]
        %v2539 = vld [vmem:[%s2494 + $0x160] sm:$0xff]
        %v2540 = vld [vmem:[%s2494 + $0x168] sm:$0xff]
        %v2541 = vld [vmem:[%s2494 + $0x170] sm:$0xff]
        %v2542 = vld [vmem:[%s2494 + $0x178] sm:$0xff]
        %v2543 = vld [vmem:[%s2494 + $0x180] sm:$0xff]
        %v2544 = vld [vmem:[%s2494 + $0x188] sm:$0xff]
        %v2545 = vld [vmem:[%s2494 + $0x190] sm:$0xff]
        %v2546 = vld [vmem:[%s2494 + $0x198] sm:$0xff]
        %v2547 = vld [vmem:[%s2494 + $0x1a0] sm:$0xff]
        %v2548 = vld [vmem:[%s2494 + $0x1a8] sm:$0xff]
        %v2549 = vld [vmem:[%s2494 + $0x1b0] sm:$0xff]
        %v2550 = vld [vmem:[%s2494 + $0x1b8] sm:$0xff]
        %v2551 = vld [vmem:[%s2494 + $0x1c0] sm:$0xff]
        %v2552 = vld [vmem:[%s2494 + $0x1c8] sm:$0xff]
        %v2553 = vld [vmem:[%s2494 + $0x1d0] sm:$0xff]
        %v2554 = vld [vmem:[%s2494 + $0x1d8] sm:$0xff]
        %v2555 = vld [vmem:[%s2494 + $0x1e0] sm:$0xff]
        %v2556 = vld [vmem:[%s2494 + $0x1e8] sm:$0xff]
        %v2557 = vld [vmem:[%s2494 + $0x1f0] sm:$0xff]
        %v2558 = vld [vmem:[%s2494 + $0x1f8] sm:$0xff]
        %s2559 = scalar_lea.vmem %s6, 4
        %v2560 = vld [vmem:[%s2559] sm:$0xf]
        %v2562 = vperm.slane %v2560, 0
        %v2563 = vperm.slane %v2560, 1
        %v2564 = vperm.slane %v2560, 2
        %v2565 = vperm.slane %v2560, 3
        %2570 = vmatpush.msra.mxu0 %v2555
        %2571 = vmatpush.msra.mxu0 %v2551
        %2572 = vmatpush.msra.mxu0 %v2547
        %2573 = vmatpush.msra.mxu0 %v2543
        %2574 = vmatpush.msra.mxu0 %v2539
        %2575 = vmatpush.msra.mxu0 %v2535
        %2576 = vmatpush.msra.mxu0 %v2531
        %2577 = vmatpush.msra.mxu0 %v2527
        %2578 = vmatpush.msra.mxu0 %v2523
        %2579 = vmatpush.msra.mxu0 %v2519
        %2580 = vmatpush.msra.mxu0 %v2515
        %2581 = vmatpush.msra.mxu0 %v2511
        %2582 = vmatpush.msra.mxu0 %v2507
        %2583 = vmatpush.msra.mxu0 %v2503
        %2584 = vmatpush.msra.mxu0 %v2499
        %2585 = vmatpush.msra.mxu0 %v2495
        %2586 = vmatmul.f32.gmra.mxu0 %v2493
        %v2587 = vpop.f32.mrf.mxu0
        %v2588 = vadd.f32 %v2562, %v2587
        %2589 = vdwg.mxu0
        %2590 = vmatpush.msra.mxu0 %v2556
        %2591 = vmatpush.msra.mxu0 %v2552
        %2592 = vmatpush.msra.mxu0 %v2548
        %2593 = vmatpush.msra.mxu0 %v2544
        %2594 = vmatpush.msra.mxu0 %v2540
        %2595 = vmatpush.msra.mxu0 %v2536
        %2596 = vmatpush.msra.mxu0 %v2532
        %2597 = vmatpush.msra.mxu0 %v2528
        %2598 = vmatpush.msra.mxu0 %v2524
        %2599 = vmatpush.msra.mxu0 %v2520
        %2600 = vmatpush.msra.mxu0 %v2516
        %2601 = vmatpush.msra.mxu0 %v2512
        %2602 = vmatpush.msra.mxu0 %v2508
        %2603 = vmatpush.msra.mxu0 %v2504
        %2604 = vmatpush.msra.mxu0 %v2500
        %2605 = vmatpush.msra.mxu0 %v2496
        %2606 = vmatmul.f32.gmra.mxu0 %v2493
        %v2607 = vpop.f32.mrf.mxu0
        %v2608 = vadd.f32 %v2563, %v2607
        %2609 = vdwg.mxu0
        %2610 = vmatpush.msra.mxu0 %v2557
        %2611 = vmatpush.msra.mxu0 %v2553
        %2612 = vmatpush.msra.mxu0 %v2549
        %2613 = vmatpush.msra.mxu0 %v2545
        %2614 = vmatpush.msra.mxu0 %v2541
        %2615 = vmatpush.msra.mxu0 %v2537
        %2616 = vmatpush.msra.mxu0 %v2533
        %2617 = vmatpush.msra.mxu0 %v2529
        %2618 = vmatpush.msra.mxu0 %v2525
        %2619 = vmatpush.msra.mxu0 %v2521
        %2620 = vmatpush.msra.mxu0 %v2517
        %2621 = vmatpush.msra.mxu0 %v2513
        %2622 = vmatpush.msra.mxu0 %v2509
        %2623 = vmatpush.msra.mxu0 %v2505
        %2624 = vmatpush.msra.mxu0 %v2501
        %2625 = vmatpush.msra.mxu0 %v2497
        %2626 = vmatmul.f32.gmra.mxu0 %v2493
        %v2627 = vpop.f32.mrf.mxu0
        %v2628 = vadd.f32 %v2564, %v2627
        %2629 = vdwg.mxu0
        %2630 = vmatpush.msra.mxu0 %v2558
        %2631 = vmatpush.msra.mxu0 %v2554
        %2632 = vmatpush.msra.mxu0 %v2550
        %2633 = vmatpush.msra.mxu0 %v2546
        %2634 = vmatpush.msra.mxu0 %v2542
        %2635 = vmatpush.msra.mxu0 %v2538
        %2636 = vmatpush.msra.mxu0 %v2534
        %2637 = vmatpush.msra.mxu0 %v2530
        %2638 = vmatpush.msra.mxu0 %v2526
        %2639 = vmatpush.msra.mxu0 %v2522
        %2640 = vmatpush.msra.mxu0 %v2518
        %2641 = vmatpush.msra.mxu0 %v2514
        %2642 = vmatpush.msra.mxu0 %v2510
        %2643 = vmatpush.msra.mxu0 %v2506
        %2644 = vmatpush.msra.mxu0 %v2502
        %2645 = vmatpush.msra.mxu0 %v2498
        %2646 = vmatmul.f32.gmra.mxu0 %v2493
        %v2647 = vpop.f32.mrf.mxu0
        %v2648 = vadd.f32 %v2565, %v2647
        %2649 = vdwg.mxu0
        %v2650 = vmax.f32 %v2588, 0.0
        %v2651 = vmax.f32 %v2608, 0.0
        %v2652 = vmax.f32 %v2628, 0.0
        %v2653 = vmax.f32 %v2648, 0.0
        %s2654 = scalar_lea.vmem [#allocation8], 512
        %v2655 = vld [vmem:[%s2654] sm:$0xff]
        %v2656 = vld [vmem:[%s2654 + $0x8] sm:$0xff]
        %v2657 = vld [vmem:[%s2654 + $0x10] sm:$0xff]
        %v2658 = vld [vmem:[%s2654 + $0x18] sm:$0xff]
        %v2659 = vld [vmem:[%s2654 + $0x20] sm:$0xff]
        %v2660 = vld [vmem:[%s2654 + $0x28] sm:$0xff]
        %v2661 = vld [vmem:[%s2654 + $0x30] sm:$0xff]
        %v2662 = vld [vmem:[%s2654 + $0x38] sm:$0xff]
        %v2663 = vld [vmem:[%s2654 + $0x40] sm:$0xff]
        %v2664 = vld [vmem:[%s2654 + $0x48] sm:$0xff]
        %v2665 = vld [vmem:[%s2654 + $0x50] sm:$0xff]
        %v2666 = vld [vmem:[%s2654 + $0x58] sm:$0xff]
        %v2667 = vld [vmem:[%s2654 + $0x60] sm:$0xff]
        %v2668 = vld [vmem:[%s2654 + $0x68] sm:$0xff]
        %v2669 = vld [vmem:[%s2654 + $0x70] sm:$0xff]
        %v2670 = vld [vmem:[%s2654 + $0x78] sm:$0xff]
        %v2671 = vld [vmem:[%s2654 + $0x80] sm:$0xff]
        %v2672 = vld [vmem:[%s2654 + $0x88] sm:$0xff]
        %v2673 = vld [vmem:[%s2654 + $0x90] sm:$0xff]
        %v2674 = vld [vmem:[%s2654 + $0x98] sm:$0xff]
        %v2675 = vld [vmem:[%s2654 + $0xa0] sm:$0xff]
        %v2676 = vld [vmem:[%s2654 + $0xa8] sm:$0xff]
        %v2677 = vld [vmem:[%s2654 + $0xb0] sm:$0xff]
        %v2678 = vld [vmem:[%s2654 + $0xb8] sm:$0xff]
        %v2679 = vld [vmem:[%s2654 + $0xc0] sm:$0xff]
        %v2680 = vld [vmem:[%s2654 + $0xc8] sm:$0xff]
        %v2681 = vld [vmem:[%s2654 + $0xd0] sm:$0xff]
        %v2682 = vld [vmem:[%s2654 + $0xd8] sm:$0xff]
        %v2683 = vld [vmem:[%s2654 + $0xe0] sm:$0xff]
        %v2684 = vld [vmem:[%s2654 + $0xe8] sm:$0xff]
        %v2685 = vld [vmem:[%s2654 + $0xf0] sm:$0xff]
        %v2686 = vld [vmem:[%s2654 + $0xf8] sm:$0xff]
        %v2687 = vld [vmem:[%s2654 + $0x100] sm:$0xff]
        %v2688 = vld [vmem:[%s2654 + $0x108] sm:$0xff]
        %v2689 = vld [vmem:[%s2654 + $0x110] sm:$0xff]
        %v2690 = vld [vmem:[%s2654 + $0x118] sm:$0xff]
        %v2691 = vld [vmem:[%s2654 + $0x120] sm:$0xff]
        %v2692 = vld [vmem:[%s2654 + $0x128] sm:$0xff]
        %v2693 = vld [vmem:[%s2654 + $0x130] sm:$0xff]
        %v2694 = vld [vmem:[%s2654 + $0x138] sm:$0xff]
        %v2695 = vld [vmem:[%s2654 + $0x140] sm:$0xff]
        %v2696 = vld [vmem:[%s2654 + $0x148] sm:$0xff]
        %v2697 = vld [vmem:[%s2654 + $0x150] sm:$0xff]
        %v2698 = vld [vmem:[%s2654 + $0x158] sm:$0xff]
        %v2699 = vld [vmem:[%s2654 + $0x160] sm:$0xff]
        %v2700 = vld [vmem:[%s2654 + $0x168] sm:$0xff]
        %v2701 = vld [vmem:[%s2654 + $0x170] sm:$0xff]
        %v2702 = vld [vmem:[%s2654 + $0x178] sm:$0xff]
        %v2703 = vld [vmem:[%s2654 + $0x180] sm:$0xff]
        %v2704 = vld [vmem:[%s2654 + $0x188] sm:$0xff]
        %v2705 = vld [vmem:[%s2654 + $0x190] sm:$0xff]
        %v2706 = vld [vmem:[%s2654 + $0x198] sm:$0xff]
        %v2707 = vld [vmem:[%s2654 + $0x1a0] sm:$0xff]
        %v2708 = vld [vmem:[%s2654 + $0x1a8] sm:$0xff]
        %v2709 = vld [vmem:[%s2654 + $0x1b0] sm:$0xff]
        %v2710 = vld [vmem:[%s2654 + $0x1b8] sm:$0xff]
        %v2711 = vld [vmem:[%s2654 + $0x1c0] sm:$0xff]
        %v2712 = vld [vmem:[%s2654 + $0x1c8] sm:$0xff]
        %v2713 = vld [vmem:[%s2654 + $0x1d0] sm:$0xff]
        %v2714 = vld [vmem:[%s2654 + $0x1d8] sm:$0xff]
        %v2715 = vld [vmem:[%s2654 + $0x1e0] sm:$0xff]
        %v2716 = vld [vmem:[%s2654 + $0x1e8] sm:$0xff]
        %v2717 = vld [vmem:[%s2654 + $0x1f0] sm:$0xff]
        %v2718 = vld [vmem:[%s2654 + $0x1f8] sm:$0xff]
        %s2719 = scalar_lea.vmem %s8, 1
        %v2720 = vld [vmem:[%s2719] sm:$0x1]
        %v2722 = vperm.slane %v2720, 0
        %2724 = vmatpush.msra.mxu0 %v2670
        %2725 = vmatpush.msra.mxu0 %v2669
        %2726 = vmatpush.msra.mxu0 %v2668
        %2727 = vmatpush.msra.mxu0 %v2667
        %2728 = vmatpush.msra.mxu0 %v2666
        %2729 = vmatpush.msra.mxu0 %v2665
        %2730 = vmatpush.msra.mxu0 %v2664
        %2731 = vmatpush.msra.mxu0 %v2663
        %2732 = vmatpush.msra.mxu0 %v2662
        %2733 = vmatpush.msra.mxu0 %v2661
        %2734 = vmatpush.msra.mxu0 %v2660
        %2735 = vmatpush.msra.mxu0 %v2659
        %2736 = vmatpush.msra.mxu0 %v2658
        %2737 = vmatpush.msra.mxu0 %v2657
        %2738 = vmatpush.msra.mxu0 %v2656
        %2739 = vmatpush.msra.mxu0 %v2655
        %2740 = vmatmul.f32.gmra.mxu0 %v2650
        %v2741 = vpop.f32.mrf.mxu0
        %v2742 = vadd.f32 %v2722, %v2741
        %2743 = vdwg.mxu0
        %2744 = vmatpush.msra.mxu0 %v2686
        %2745 = vmatpush.msra.mxu0 %v2685
        %2746 = vmatpush.msra.mxu0 %v2684
        %2747 = vmatpush.msra.mxu0 %v2683
        %2748 = vmatpush.msra.mxu0 %v2682
        %2749 = vmatpush.msra.mxu0 %v2681
        %2750 = vmatpush.msra.mxu0 %v2680
        %2751 = vmatpush.msra.mxu0 %v2679
        %2752 = vmatpush.msra.mxu0 %v2678
        %2753 = vmatpush.msra.mxu0 %v2677
        %2754 = vmatpush.msra.mxu0 %v2676
        %2755 = vmatpush.msra.mxu0 %v2675
        %2756 = vmatpush.msra.mxu0 %v2674
        %2757 = vmatpush.msra.mxu0 %v2673
        %2758 = vmatpush.msra.mxu0 %v2672
        %2759 = vmatpush.msra.mxu0 %v2671
        %2760 = vmatmul.f32.gmra.mxu0 %v2651
        %v2761 = vpop.f32.mrf.mxu0
        %v2762 = vadd.f32 %v2742, %v2761
        %2763 = vdwg.mxu0
        %2764 = vmatpush.msra.mxu0 %v2702
        %2765 = vmatpush.msra.mxu0 %v2701
        %2766 = vmatpush.msra.mxu0 %v2700
        %2767 = vmatpush.msra.mxu0 %v2699
        %2768 = vmatpush.msra.mxu0 %v2698
        %2769 = vmatpush.msra.mxu0 %v2697
        %2770 = vmatpush.msra.mxu0 %v2696
        %2771 = vmatpush.msra.mxu0 %v2695
        %2772 = vmatpush.msra.mxu0 %v2694
        %2773 = vmatpush.msra.mxu0 %v2693
        %2774 = vmatpush.msra.mxu0 %v2692
        %2775 = vmatpush.msra.mxu0 %v2691
        %2776 = vmatpush.msra.mxu0 %v2690
        %2777 = vmatpush.msra.mxu0 %v2689
        %2778 = vmatpush.msra.mxu0 %v2688
        %2779 = vmatpush.msra.mxu0 %v2687
        %2780 = vmatmul.f32.gmra.mxu0 %v2652
        %v2781 = vpop.f32.mrf.mxu0
        %v2782 = vadd.f32 %v2762, %v2781
        %2783 = vdwg.mxu0
        %2784 = vmatpush.msra.mxu0 %v2718
        %2785 = vmatpush.msra.mxu0 %v2717
        %2786 = vmatpush.msra.mxu0 %v2716
        %2787 = vmatpush.msra.mxu0 %v2715
        %2788 = vmatpush.msra.mxu0 %v2714
        %2789 = vmatpush.msra.mxu0 %v2713
        %2790 = vmatpush.msra.mxu0 %v2712
        %2791 = vmatpush.msra.mxu0 %v2711
        %2792 = vmatpush.msra.mxu0 %v2710
        %2793 = vmatpush.msra.mxu0 %v2709
        %2794 = vmatpush.msra.mxu0 %v2708
        %2795 = vmatpush.msra.mxu0 %v2707
        %2796 = vmatpush.msra.mxu0 %v2706
        %2797 = vmatpush.msra.mxu0 %v2705
        %2798 = vmatpush.msra.mxu0 %v2704
        %2799 = vmatpush.msra.mxu0 %v2703
        %2800 = vmatmul.f32.gmra.mxu0 %v2653
        %v2801 = vpop.f32.mrf.mxu0
        %v2802 = vadd.f32 %v2782, %v2801
        %2803 = vdwg.mxu0
        %v2804 = vadd.f32 %v2493, %v2802
        %2805 = vadd.xlane.f32.xlu0 %v2804
        %v2806 = vpop.xlane.xlu0 %2805
        %v2807 = vmul.f32 %v2806, %v1282
        %v2808 = vsub.f32 %v2804, %v2807
        %v2809 = vmul.f32 %v2808, %v2808
        %2810 = vadd.xlane.f32.xlu0 %v2809
        %v2811 = vpop.xlane.xlu0 %2810
        %v2812 = vmul.f32 %v2811, %v1282
        %v2813 = vadd.f32 %v2812, 1e-05
        %v2814 = vrsqrt.pop %v2813
        %v2815 = vmul.f32 %v2814, %v2813
        %v2816 = vmul.f32 %v2815, %v2814
        %v2817 = vmul.f32 0.5, %v2816
        %v2818 = vsub.f32 1.5, %v2817
        %v2819 = vmul.f32 %v2814, %v2818
        %vm2820 = vweird.f32 %v2813
        %vm2821 = vweird.f32 %v2814
        %vm2822 = vmor %vm2820, %vm2821
        %v2823 = vsel %vm2822, %v2814, %v2819
        %v2824 = vmul.f32 %v2808, %v2823
        %v2826 = vperm.slane %v1646, 0
        %v2828 = vmul.f32 %v2824, %v2826
        %v2830 = vperm.slane %v1649, 0
        %v2832 = vadd.f32 %v2828, %v2830
        %s2833 = scalar_lea.vmem %s9, 4
        %v2834 = vld [vmem:[%s2833] sm:$0x1]
        %v2835 = vld [vmem:[%s2833 + $0x1] sm:$0x1]
        %s2836 = scalar_lea.vmem %s10, 4
        %v2837 = vld [vmem:[%s2836] sm:$0x1]
        %v2838 = vld [vmem:[%s2836 + $0x1] sm:$0x1]
        %s2839 = scalar_lea.vmem [#allocation2], 768
        %v2840 = vld [vmem:[%s2839] sm:$0xff]
        %v2841 = vld [vmem:[%s2839 + $0x8] sm:$0xff]
        %v2842 = vld [vmem:[%s2839 + $0x10] sm:$0xff]
        %v2843 = vld [vmem:[%s2839 + $0x18] sm:$0xff]
        %v2844 = vld [vmem:[%s2839 + $0x20] sm:$0xff]
        %v2845 = vld [vmem:[%s2839 + $0x28] sm:$0xff]
        %v2846 = vld [vmem:[%s2839 + $0x30] sm:$0xff]
        %v2847 = vld [vmem:[%s2839 + $0x38] sm:$0xff]
        %v2848 = vld [vmem:[%s2839 + $0x40] sm:$0xff]
        %v2849 = vld [vmem:[%s2839 + $0x48] sm:$0xff]
        %v2850 = vld [vmem:[%s2839 + $0x50] sm:$0xff]
        %v2851 = vld [vmem:[%s2839 + $0x58] sm:$0xff]
        %v2852 = vld [vmem:[%s2839 + $0x60] sm:$0xff]
        %v2853 = vld [vmem:[%s2839 + $0x68] sm:$0xff]
        %v2854 = vld [vmem:[%s2839 + $0x70] sm:$0xff]
        %v2855 = vld [vmem:[%s2839 + $0x78] sm:$0xff]
        %v2856 = vld [vmem:[%s2839 + $0x80] sm:$0xff]
        %v2857 = vld [vmem:[%s2839 + $0x88] sm:$0xff]
        %v2858 = vld [vmem:[%s2839 + $0x90] sm:$0xff]
        %v2859 = vld [vmem:[%s2839 + $0x98] sm:$0xff]
        %v2860 = vld [vmem:[%s2839 + $0xa0] sm:$0xff]
        %v2861 = vld [vmem:[%s2839 + $0xa8] sm:$0xff]
        %v2862 = vld [vmem:[%s2839 + $0xb0] sm:$0xff]
        %v2863 = vld [vmem:[%s2839 + $0xb8] sm:$0xff]
        %v2864 = vld [vmem:[%s2839 + $0xc0] sm:$0xff]
        %v2865 = vld [vmem:[%s2839 + $0xc8] sm:$0xff]
        %v2866 = vld [vmem:[%s2839 + $0xd0] sm:$0xff]
        %v2867 = vld [vmem:[%s2839 + $0xd8] sm:$0xff]
        %v2868 = vld [vmem:[%s2839 + $0xe0] sm:$0xff]
        %v2869 = vld [vmem:[%s2839 + $0xe8] sm:$0xff]
        %v2870 = vld [vmem:[%s2839 + $0xf0] sm:$0xff]
        %v2871 = vld [vmem:[%s2839 + $0xf8] sm:$0xff]
        %v2872 = vld [vmem:[%s2839 + $0x100] sm:$0xff]
        %v2873 = vld [vmem:[%s2839 + $0x108] sm:$0xff]
        %v2874 = vld [vmem:[%s2839 + $0x110] sm:$0xff]
        %v2875 = vld [vmem:[%s2839 + $0x118] sm:$0xff]
        %v2876 = vld [vmem:[%s2839 + $0x120] sm:$0xff]
        %v2877 = vld [vmem:[%s2839 + $0x128] sm:$0xff]
        %v2878 = vld [vmem:[%s2839 + $0x130] sm:$0xff]
        %v2879 = vld [vmem:[%s2839 + $0x138] sm:$0xff]
        %v2880 = vld [vmem:[%s2839 + $0x140] sm:$0xff]
        %v2881 = vld [vmem:[%s2839 + $0x148] sm:$0xff]
        %v2882 = vld [vmem:[%s2839 + $0x150] sm:$0xff]
        %v2883 = vld [vmem:[%s2839 + $0x158] sm:$0xff]
        %v2884 = vld [vmem:[%s2839 + $0x160] sm:$0xff]
        %v2885 = vld [vmem:[%s2839 + $0x168] sm:$0xff]
        %v2886 = vld [vmem:[%s2839 + $0x170] sm:$0xff]
        %v2887 = vld [vmem:[%s2839 + $0x178] sm:$0xff]
        %s2888 = scalar_lea.vmem %s2, 6
        %v2889 = vld [vmem:[%s2888] sm:$0x7]
        %v2891 = vperm.slane %v2889, 0
        %v2892 = vperm.slane %v2889, 1
        %v2893 = vperm.slane %v2889, 2
        %2897 = vmatpush.msra.mxu0 %v2885
        %2898 = vmatpush.msra.mxu0 %v2882
        %2899 = vmatpush.msra.mxu0 %v2879
        %2900 = vmatpush.msra.mxu0 %v2876
        %2901 = vmatpush.msra.mxu0 %v2873
        %2902 = vmatpush.msra.mxu0 %v2870
        %2903 = vmatpush.msra.mxu0 %v2867
        %2904 = vmatpush.msra.mxu0 %v2864
        %2905 = vmatpush.msra.mxu0 %v2861
        %2906 = vmatpush.msra.mxu0 %v2858
        %2907 = vmatpush.msra.mxu0 %v2855
        %2908 = vmatpush.msra.mxu0 %v2852
        %2909 = vmatpush.msra.mxu0 %v2849
        %2910 = vmatpush.msra.mxu0 %v2846
        %2911 = vmatpush.msra.mxu0 %v2843
        %2912 = vmatpush.msra.mxu0 %v2840
        %2913 = vmatmul.f32.gmra.mxu0 %v2832
        %v2914 = vpop.f32.mrf.mxu0
        %v2915 = vadd.f32 %v2891, %v2914
        %2916 = vdwg.mxu0
        %2917 = vmatpush.msra.mxu0 %v2886
        %2918 = vmatpush.msra.mxu0 %v2883
        %2919 = vmatpush.msra.mxu0 %v2880
        %2920 = vmatpush.msra.mxu0 %v2877
        %2921 = vmatpush.msra.mxu0 %v2874
        %2922 = vmatpush.msra.mxu0 %v2871
        %2923 = vmatpush.msra.mxu0 %v2868
        %2924 = vmatpush.msra.mxu0 %v2865
        %2925 = vmatpush.msra.mxu0 %v2862
        %2926 = vmatpush.msra.mxu0 %v2859
        %2927 = vmatpush.msra.mxu0 %v2856
        %2928 = vmatpush.msra.mxu0 %v2853
        %2929 = vmatpush.msra.mxu0 %v2850
        %2930 = vmatpush.msra.mxu0 %v2847
        %2931 = vmatpush.msra.mxu0 %v2844
        %2932 = vmatpush.msra.mxu0 %v2841
        %2933 = vmatmul.f32.gmra.mxu0 %v2832
        %v2934 = vpop.f32.mrf.mxu0
        %v2935 = vadd.f32 %v2892, %v2934
        %2936 = vdwg.mxu0
        %2937 = vmatpush.msra.mxu0 %v2887
        %2938 = vmatpush.msra.mxu0 %v2884
        %2939 = vmatpush.msra.mxu0 %v2881
        %2940 = vmatpush.msra.mxu0 %v2878
        %2941 = vmatpush.msra.mxu0 %v2875
        %2942 = vmatpush.msra.mxu0 %v2872
        %2943 = vmatpush.msra.mxu0 %v2869
        %2944 = vmatpush.msra.mxu0 %v2866
        %2945 = vmatpush.msra.mxu0 %v2863
        %2946 = vmatpush.msra.mxu0 %v2860
        %2947 = vmatpush.msra.mxu0 %v2857
        %2948 = vmatpush.msra.mxu0 %v2854
        %2949 = vmatpush.msra.mxu0 %v2851
        %2950 = vmatpush.msra.mxu0 %v2848
        %2951 = vmatpush.msra.mxu0 %v2845
        %2952 = vmatpush.msra.mxu0 %v2842
        %2953 = vmatmul.f32.gmra.mxu0 %v2832
        %v2954 = vpop.f32.mrf.mxu0
        %v2955 = vadd.f32 %v2893, %v2954
        %2956 = vdwg.mxu0
        %v2958 = vsel %vm570, %v2915, 0
        %v2961 = vsel %vm570, %v2935, 0
        %2963 = vmatpush.xpose.msra.mxu0 0.0
        %2964 = vmatpush.xpose.msra.mxu0 0.0
        %2965 = vmatpush.xpose.msra.mxu0 0.0
        %2966 = vmatpush.xpose.msra.mxu0 0.0
        %2967 = vmatpush.xpose.msra.mxu0 0.0
        %2968 = vmatpush.xpose.msra.mxu0 0.0
        %2969 = vmatpush.xpose.msra.mxu0 0.0
        %2970 = vmatpush.xpose.msra.mxu0 0.0
        %2971 = vmatpush.xpose.msra.mxu0 0.0
        %2972 = vmatpush.xpose.msra.mxu0 0.0
        %2973 = vmatpush.xpose.msra.mxu0 0.0
        %2974 = vmatpush.xpose.msra.mxu0 0.0
        %2975 = vmatpush.xpose.msra.mxu0 0.0
        %2976 = vmatpush.xpose.msra.mxu0 0.0
        %2977 = vmatpush.xpose.msra.mxu0 0.0
        %2978 = vmatpush.xpose.msra.mxu0 %v2961
        %2979 = vmatmul.f32.gmra.mxu0 %v2958
        %v2980 = vpop.f32.mrf.mxu0
        %v2981 = vadd.f32 0.0, %v2980
        %2982 = vdwg.mxu0
        %2983 = vrot.lane.b32.xlu0 %v2915, 112
        %v2984 = vpop.permute.xlu0 %2983
        %2985 = vrot.lane.b32.xlu0 %v2935, 112
        %v2986 = vpop.permute.xlu0 %2985
        %v2987 = vsel %vm570, %v2984, 0
        %v2989 = vsel %vm570, %v2986, 0
        %2991 = vmatpush.xpose.msra.mxu0 0.0
        %2992 = vmatpush.xpose.msra.mxu0 0.0
        %2993 = vmatpush.xpose.msra.mxu0 0.0
        %2994 = vmatpush.xpose.msra.mxu0 0.0
        %2995 = vmatpush.xpose.msra.mxu0 0.0
        %2996 = vmatpush.xpose.msra.mxu0 0.0
        %2997 = vmatpush.xpose.msra.mxu0 0.0
        %2998 = vmatpush.xpose.msra.mxu0 0.0
        %2999 = vmatpush.xpose.msra.mxu0 0.0
        %3000 = vmatpush.xpose.msra.mxu0 0.0
        %3001 = vmatpush.xpose.msra.mxu0 0.0
        %3002 = vmatpush.xpose.msra.mxu0 0.0
        %3003 = vmatpush.xpose.msra.mxu0 0.0
        %3004 = vmatpush.xpose.msra.mxu0 0.0
        %3005 = vmatpush.xpose.msra.mxu0 0.0
        %3006 = vmatpush.xpose.msra.mxu0 %v2989
        %3007 = vmatmul.f32.gmra.mxu0 %v2987
        %v3008 = vpop.f32.mrf.mxu0
        %v3009 = vadd.f32 0.0, %v3008
        %3010 = vdwg.mxu0
        %3011 = vrot.lane.b32.xlu0 %v2915, 96
        %v3012 = vpop.permute.xlu0 %3011
        %3013 = vrot.lane.b32.xlu0 %v2935, 96
        %v3014 = vpop.permute.xlu0 %3013
        %v3015 = vsel %vm570, %v3012, 0
        %v3017 = vsel %vm570, %v3014, 0
        %3019 = vmatpush.xpose.msra.mxu0 0.0
        %3020 = vmatpush.xpose.msra.mxu0 0.0
        %3021 = vmatpush.xpose.msra.mxu0 0.0
        %3022 = vmatpush.xpose.msra.mxu0 0.0
        %3023 = vmatpush.xpose.msra.mxu0 0.0
        %3024 = vmatpush.xpose.msra.mxu0 0.0
        %3025 = vmatpush.xpose.msra.mxu0 0.0
        %3026 = vmatpush.xpose.msra.mxu0 0.0
        %3027 = vmatpush.xpose.msra.mxu0 0.0
        %3028 = vmatpush.xpose.msra.mxu0 0.0
        %3029 = vmatpush.xpose.msra.mxu0 0.0
        %3030 = vmatpush.xpose.msra.mxu0 0.0
        %3031 = vmatpush.xpose.msra.mxu0 0.0
        %3032 = vmatpush.xpose.msra.mxu0 0.0
        %3033 = vmatpush.xpose.msra.mxu0 0.0
        %3034 = vmatpush.xpose.msra.mxu0 %v3017
        %3035 = vmatmul.f32.gmra.mxu0 %v3015
        %v3036 = vpop.f32.mrf.mxu0
        %v3037 = vadd.f32 0.0, %v3036
        %3038 = vdwg.mxu0
        %3039 = vrot.lane.b32.xlu0 %v2915, 80
        %v3040 = vpop.permute.xlu0 %3039
        %3041 = vrot.lane.b32.xlu0 %v2935, 80
        %v3042 = vpop.permute.xlu0 %3041
        %v3043 = vsel %vm570, %v3040, 0
        %v3045 = vsel %vm570, %v3042, 0
        %3047 = vmatpush.xpose.msra.mxu0 0.0
        %3048 = vmatpush.xpose.msra.mxu0 0.0
        %3049 = vmatpush.xpose.msra.mxu0 0.0
        %3050 = vmatpush.xpose.msra.mxu0 0.0
        %3051 = vmatpush.xpose.msra.mxu0 0.0
        %3052 = vmatpush.xpose.msra.mxu0 0.0
        %3053 = vmatpush.xpose.msra.mxu0 0.0
        %3054 = vmatpush.xpose.msra.mxu0 0.0
        %3055 = vmatpush.xpose.msra.mxu0 0.0
        %3056 = vmatpush.xpose.msra.mxu0 0.0
        %3057 = vmatpush.xpose.msra.mxu0 0.0
        %3058 = vmatpush.xpose.msra.mxu0 0.0
        %3059 = vmatpush.xpose.msra.mxu0 0.0
        %3060 = vmatpush.xpose.msra.mxu0 0.0
        %3061 = vmatpush.xpose.msra.mxu0 0.0
        %3062 = vmatpush.xpose.msra.mxu0 %v3045
        %3063 = vmatmul.f32.gmra.mxu0 %v3043
        %v3064 = vpop.f32.mrf.mxu0
        %v3065 = vadd.f32 0.0, %v3064
        %3066 = vdwg.mxu0
        %3067 = vrot.lane.b32.xlu0 %v2915, 64
        %v3068 = vpop.permute.xlu0 %3067
        %3069 = vrot.lane.b32.xlu0 %v2935, 64
        %v3070 = vpop.permute.xlu0 %3069
        %v3071 = vsel %vm570, %v3068, 0
        %v3073 = vsel %vm570, %v3070, 0
        %3075 = vmatpush.xpose.msra.mxu0 0.0
        %3076 = vmatpush.xpose.msra.mxu0 0.0
        %3077 = vmatpush.xpose.msra.mxu0 0.0
        %3078 = vmatpush.xpose.msra.mxu0 0.0
        %3079 = vmatpush.xpose.msra.mxu0 0.0
        %3080 = vmatpush.xpose.msra.mxu0 0.0
        %3081 = vmatpush.xpose.msra.mxu0 0.0
        %3082 = vmatpush.xpose.msra.mxu0 0.0
        %3083 = vmatpush.xpose.msra.mxu0 0.0
        %3084 = vmatpush.xpose.msra.mxu0 0.0
        %3085 = vmatpush.xpose.msra.mxu0 0.0
        %3086 = vmatpush.xpose.msra.mxu0 0.0
        %3087 = vmatpush.xpose.msra.mxu0 0.0
        %3088 = vmatpush.xpose.msra.mxu0 0.0
        %3089 = vmatpush.xpose.msra.mxu0 0.0
        %3090 = vmatpush.xpose.msra.mxu0 %v3073
        %3091 = vmatmul.f32.gmra.mxu0 %v3071
        %v3092 = vpop.f32.mrf.mxu0
        %v3093 = vadd.f32 0.0, %v3092
        %3094 = vdwg.mxu0
        %3095 = vrot.lane.b32.xlu0 %v2915, 48
        %v3096 = vpop.permute.xlu0 %3095
        %3097 = vrot.lane.b32.xlu0 %v2935, 48
        %v3098 = vpop.permute.xlu0 %3097
        %v3099 = vsel %vm570, %v3096, 0
        %v3101 = vsel %vm570, %v3098, 0
        %3103 = vmatpush.xpose.msra.mxu0 0.0
        %3104 = vmatpush.xpose.msra.mxu0 0.0
        %3105 = vmatpush.xpose.msra.mxu0 0.0
        %3106 = vmatpush.xpose.msra.mxu0 0.0
        %3107 = vmatpush.xpose.msra.mxu0 0.0
        %3108 = vmatpush.xpose.msra.mxu0 0.0
        %3109 = vmatpush.xpose.msra.mxu0 0.0
        %3110 = vmatpush.xpose.msra.mxu0 0.0
        %3111 = vmatpush.xpose.msra.mxu0 0.0
        %3112 = vmatpush.xpose.msra.mxu0 0.0
        %3113 = vmatpush.xpose.msra.mxu0 0.0
        %3114 = vmatpush.xpose.msra.mxu0 0.0
        %3115 = vmatpush.xpose.msra.mxu0 0.0
        %3116 = vmatpush.xpose.msra.mxu0 0.0
        %3117 = vmatpush.xpose.msra.mxu0 0.0
        %3118 = vmatpush.xpose.msra.mxu0 %v3101
        %3119 = vmatmul.f32.gmra.mxu0 %v3099
        %v3120 = vpop.f32.mrf.mxu0
        %v3121 = vadd.f32 0.0, %v3120
        %3122 = vdwg.mxu0
        %3123 = vrot.lane.b32.xlu0 %v2915, 32
        %v3124 = vpop.permute.xlu0 %3123
        %3125 = vrot.lane.b32.xlu0 %v2935, 32
        %v3126 = vpop.permute.xlu0 %3125
        %v3127 = vsel %vm570, %v3124, 0
        %v3129 = vsel %vm570, %v3126, 0
        %3131 = vmatpush.xpose.msra.mxu0 0.0
        %3132 = vmatpush.xpose.msra.mxu0 0.0
        %3133 = vmatpush.xpose.msra.mxu0 0.0
        %3134 = vmatpush.xpose.msra.mxu0 0.0
        %3135 = vmatpush.xpose.msra.mxu0 0.0
        %3136 = vmatpush.xpose.msra.mxu0 0.0
        %3137 = vmatpush.xpose.msra.mxu0 0.0
        %3138 = vmatpush.xpose.msra.mxu0 0.0
        %3139 = vmatpush.xpose.msra.mxu0 0.0
        %3140 = vmatpush.xpose.msra.mxu0 0.0
        %3141 = vmatpush.xpose.msra.mxu0 0.0
        %3142 = vmatpush.xpose.msra.mxu0 0.0
        %3143 = vmatpush.xpose.msra.mxu0 0.0
        %3144 = vmatpush.xpose.msra.mxu0 0.0
        %3145 = vmatpush.xpose.msra.mxu0 0.0
        %3146 = vmatpush.xpose.msra.mxu0 %v3129
        %3147 = vmatmul.f32.gmra.mxu0 %v3127
        %v3148 = vpop.f32.mrf.mxu0
        %v3149 = vadd.f32 0.0, %v3148
        %3150 = vdwg.mxu0
        %3151 = vrot.lane.b32.xlu0 %v2915, 16
        %v3152 = vpop.permute.xlu0 %3151
        %3153 = vrot.lane.b32.xlu0 %v2935, 16
        %v3154 = vpop.permute.xlu0 %3153
        %v3155 = vsel %vm570, %v3152, 0
        %v3157 = vsel %vm570, %v3154, 0
        %3159 = vmatpush.xpose.msra.mxu0 0.0
        %3160 = vmatpush.xpose.msra.mxu0 0.0
        %3161 = vmatpush.xpose.msra.mxu0 0.0
        %3162 = vmatpush.xpose.msra.mxu0 0.0
        %3163 = vmatpush.xpose.msra.mxu0 0.0
        %3164 = vmatpush.xpose.msra.mxu0 0.0
        %3165 = vmatpush.xpose.msra.mxu0 0.0
        %3166 = vmatpush.xpose.msra.mxu0 0.0
        %3167 = vmatpush.xpose.msra.mxu0 0.0
        %3168 = vmatpush.xpose.msra.mxu0 0.0
        %3169 = vmatpush.xpose.msra.mxu0 0.0
        %3170 = vmatpush.xpose.msra.mxu0 0.0
        %3171 = vmatpush.xpose.msra.mxu0 0.0
        %3172 = vmatpush.xpose.msra.mxu0 0.0
        %3173 = vmatpush.xpose.msra.mxu0 0.0
        %3174 = vmatpush.xpose.msra.mxu0 %v3157
        %3175 = vmatmul.f32.gmra.mxu0 %v3155
        %v3176 = vpop.f32.mrf.mxu0
        %v3177 = vadd.f32 0.0, %v3176
        %3178 = vdwg.mxu0
        %v3179 = vsel %vm793, %v2981, -inf
        %3180 = vmax.xlane.f32.xlu0 %v3179
        %v3181 = vpop.xlane.xlu0 %3180
        %v3182 = vsel %vm793, %v3009, -inf
        %3183 = vmax.xlane.f32.xlu0 %v3182
        %v3184 = vpop.xlane.xlu0 %3183
        %v3185 = vsel %vm793, %v3037, -inf
        %3186 = vmax.xlane.f32.xlu0 %v3185
        %v3187 = vpop.xlane.xlu0 %3186
        %v3188 = vsel %vm793, %v3065, -inf
        %3189 = vmax.xlane.f32.xlu0 %v3188
        %v3190 = vpop.xlane.xlu0 %3189
        %v3191 = vsel %vm793, %v3093, -inf
        %3192 = vmax.xlane.f32.xlu0 %v3191
        %v3193 = vpop.xlane.xlu0 %3192
        %v3194 = vsel %vm793, %v3121, -inf
        %3195 = vmax.xlane.f32.xlu0 %v3194
        %v3196 = vpop.xlane.xlu0 %3195
        %v3197 = vsel %vm793, %v3149, -inf
        %3198 = vmax.xlane.f32.xlu0 %v3197
        %v3199 = vpop.xlane.xlu0 %3198
        %v3200 = vsel %vm793, %v3177, -inf
        %3201 = vmax.xlane.f32.xlu0 %v3200
        %v3202 = vpop.xlane.xlu0 %3201
        %v3203 = vsub.f32 %v2981, %v3181
        %v3204 = vsub.f32 %v3009, %v3184
        %v3205 = vsub.f32 %v3037, %v3187
        %v3206 = vsub.f32 %v3065, %v3190
        %v3207 = vsub.f32 %v3093, %v3193
        %v3208 = vsub.f32 %v3121, %v3196
        %v3209 = vsub.f32 %v3149, %v3199
        %v3210 = vsub.f32 %v3177, %v3202
        %v3211 = vmul.f32 %v3203, 1.442695
        %v3212 = vpow.pop %v3211
        %v3213 = vmul.f32 %v3204, 1.442695
        %v3214 = vpow.pop %v3213
        %v3215 = vmul.f32 %v3205, 1.442695
        %v3216 = vpow.pop %v3215
        %v3217 = vmul.f32 %v3206, 1.442695
        %v3218 = vpow.pop %v3217
        %v3219 = vmul.f32 %v3207, 1.442695
        %v3220 = vpow.pop %v3219
        %v3221 = vmul.f32 %v3208, 1.442695
        %v3222 = vpow.pop %v3221
        %v3223 = vmul.f32 %v3209, 1.442695
        %v3224 = vpow.pop %v3223
        %v3225 = vmul.f32 %v3210, 1.442695
        %v3226 = vpow.pop %v3225
        %v3227 = vsel %vm793, %v3212, 0.0
        %3228 = vadd.xlane.f32.xlu0 %v3227
        %v3229 = vpop.xlane.xlu0 %3228
        %v3230 = vsel %vm793, %v3214, 0.0
        %3231 = vadd.xlane.f32.xlu0 %v3230
        %v3232 = vpop.xlane.xlu0 %3231
        %v3233 = vsel %vm793, %v3216, 0.0
        %3234 = vadd.xlane.f32.xlu0 %v3233
        %v3235 = vpop.xlane.xlu0 %3234
        %v3236 = vsel %vm793, %v3218, 0.0
        %3237 = vadd.xlane.f32.xlu0 %v3236
        %v3238 = vpop.xlane.xlu0 %3237
        %v3239 = vsel %vm793, %v3220, 0.0
        %3240 = vadd.xlane.f32.xlu0 %v3239
        %v3241 = vpop.xlane.xlu0 %3240
        %v3242 = vsel %vm793, %v3222, 0.0
        %3243 = vadd.xlane.f32.xlu0 %v3242
        %v3244 = vpop.xlane.xlu0 %3243
        %v3245 = vsel %vm793, %v3224, 0.0
        %3246 = vadd.xlane.f32.xlu0 %v3245
        %v3247 = vpop.xlane.xlu0 %3246
        %v3248 = vsel %vm793, %v3226, 0.0
        %3249 = vadd.xlane.f32.xlu0 %v3248
        %v3250 = vpop.xlane.xlu0 %3249
        %v3251 = vrcp.pop %v3229
        %v3252 = vmul.f32 %v3229, %v3251
        %v3253 = vsub.f32 1.0, %v3252
        %v3254 = vmul.f32 %v3251, %v3253
        %v3255 = vadd.f32 %v3251, %v3254
        %vm3256 = vweird.f32 %v3229
        %vm3257 = vweird.f32 %v3251
        %vm3258 = vmor %vm3256, %vm3257
        %v3259 = vsel %vm3258, %v3251, %v3255
        %v3260 = vand.u32 2147483647, %v3229
        %vm3261 = vcmp.eq.f32.partialorder %v3260, 8.507059e+37
        %v3262 = vand.u32 %v3229, 2147483648
        %v3263 = vor.u32 1.1754944e-38, %v3262
        %v3264 = vsel %vm3261, %v3263, %v3259
        %v3265 = vmul.f32 %v3212, %v3264
        %v3266 = vrcp.pop %v3232
        %v3267 = vmul.f32 %v3232, %v3266
        %v3268 = vsub.f32 1.0, %v3267
        %v3269 = vmul.f32 %v3266, %v3268
        %v3270 = vadd.f32 %v3266, %v3269
        %vm3271 = vweird.f32 %v3232
        %vm3272 = vweird.f32 %v3266
        %vm3273 = vmor %vm3271, %vm3272
        %v3274 = vsel %vm3273, %v3266, %v3270
        %v3275 = vand.u32 2147483647, %v3232
        %vm3276 = vcmp.eq.f32.partialorder %v3275, 8.507059e+37
        %v3277 = vand.u32 %v3232, 2147483648
        %v3278 = vor.u32 1.1754944e-38, %v3277
        %v3279 = vsel %vm3276, %v3278, %v3274
        %v3280 = vmul.f32 %v3214, %v3279
        %v3281 = vrcp.pop %v3235
        %v3282 = vmul.f32 %v3235, %v3281
        %v3283 = vsub.f32 1.0, %v3282
        %v3284 = vmul.f32 %v3281, %v3283
        %v3285 = vadd.f32 %v3281, %v3284
        %vm3286 = vweird.f32 %v3235
        %vm3287 = vweird.f32 %v3281
        %vm3288 = vmor %vm3286, %vm3287
        %v3289 = vsel %vm3288, %v3281, %v3285
        %v3290 = vand.u32 2147483647, %v3235
        %vm3291 = vcmp.eq.f32.partialorder %v3290, 8.507059e+37
        %v3292 = vand.u32 %v3235, 2147483648
        %v3293 = vor.u32 1.1754944e-38, %v3292
        %v3294 = vsel %vm3291, %v3293, %v3289
        %v3295 = vmul.f32 %v3216, %v3294
        %v3296 = vrcp.pop %v3238
        %v3297 = vmul.f32 %v3238, %v3296
        %v3298 = vsub.f32 1.0, %v3297
        %v3299 = vmul.f32 %v3296, %v3298
        %v3300 = vadd.f32 %v3296, %v3299
        %vm3301 = vweird.f32 %v3238
        %vm3302 = vweird.f32 %v3296
        %vm3303 = vmor %vm3301, %vm3302
        %v3304 = vsel %vm3303, %v3296, %v3300
        %v3305 = vand.u32 2147483647, %v3238
        %vm3306 = vcmp.eq.f32.partialorder %v3305, 8.507059e+37
        %v3307 = vand.u32 %v3238, 2147483648
        %v3308 = vor.u32 1.1754944e-38, %v3307
        %v3309 = vsel %vm3306, %v3308, %v3304
        %v3310 = vmul.f32 %v3218, %v3309
        %v3311 = vrcp.pop %v3241
        %v3312 = vmul.f32 %v3241, %v3311
        %v3313 = vsub.f32 1.0, %v3312
        %v3314 = vmul.f32 %v3311, %v3313
        %v3315 = vadd.f32 %v3311, %v3314
        %vm3316 = vweird.f32 %v3241
        %vm3317 = vweird.f32 %v3311
        %vm3318 = vmor %vm3316, %vm3317
        %v3319 = vsel %vm3318, %v3311, %v3315
        %v3320 = vand.u32 2147483647, %v3241
        %vm3321 = vcmp.eq.f32.partialorder %v3320, 8.507059e+37
        %v3322 = vand.u32 %v3241, 2147483648
        %v3323 = vor.u32 1.1754944e-38, %v3322
        %v3324 = vsel %vm3321, %v3323, %v3319
        %v3325 = vmul.f32 %v3220, %v3324
        %v3326 = vrcp.pop %v3244
        %v3327 = vmul.f32 %v3244, %v3326
        %v3328 = vsub.f32 1.0, %v3327
        %v3329 = vmul.f32 %v3326, %v3328
        %v3330 = vadd.f32 %v3326, %v3329
        %vm3331 = vweird.f32 %v3244
        %vm3332 = vweird.f32 %v3326
        %vm3333 = vmor %vm3331, %vm3332
        %v3334 = vsel %vm3333, %v3326, %v3330
        %v3335 = vand.u32 2147483647, %v3244
        %vm3336 = vcmp.eq.f32.partialorder %v3335, 8.507059e+37
        %v3337 = vand.u32 %v3244, 2147483648
        %v3338 = vor.u32 1.1754944e-38, %v3337
        %v3339 = vsel %vm3336, %v3338, %v3334
        %v3340 = vmul.f32 %v3222, %v3339
        %v3341 = vrcp.pop %v3247
        %v3342 = vmul.f32 %v3247, %v3341
        %v3343 = vsub.f32 1.0, %v3342
        %v3344 = vmul.f32 %v3341, %v3343
        %v3345 = vadd.f32 %v3341, %v3344
        %vm3346 = vweird.f32 %v3247
        %vm3347 = vweird.f32 %v3341
        %vm3348 = vmor %vm3346, %vm3347
        %v3349 = vsel %vm3348, %v3341, %v3345
        %v3350 = vand.u32 2147483647, %v3247
        %vm3351 = vcmp.eq.f32.partialorder %v3350, 8.507059e+37
        %v3352 = vand.u32 %v3247, 2147483648
        %v3353 = vor.u32 1.1754944e-38, %v3352
        %v3354 = vsel %vm3351, %v3353, %v3349
        %v3355 = vmul.f32 %v3224, %v3354
        %v3356 = vrcp.pop %v3250
        %v3357 = vmul.f32 %v3250, %v3356
        %v3358 = vsub.f32 1.0, %v3357
        %v3359 = vmul.f32 %v3356, %v3358
        %v3360 = vadd.f32 %v3356, %v3359
        %vm3361 = vweird.f32 %v3250
        %vm3362 = vweird.f32 %v3356
        %vm3363 = vmor %vm3361, %vm3362
        %v3364 = vsel %vm3363, %v3356, %v3360
        %v3365 = vand.u32 2147483647, %v3250
        %vm3366 = vcmp.eq.f32.partialorder %v3365, 8.507059e+37
        %v3367 = vand.u32 %v3250, 2147483648
        %v3368 = vor.u32 1.1754944e-38, %v3367
        %v3369 = vsel %vm3366, %v3368, %v3364
        %v3370 = vmul.f32 %v3226, %v3369
        %v3372 = vsel %vm793, %v3265, 0
        %3374 = vmatpush.msra.mxu0 0.0
        %3375 = vmatpush.msra.mxu0 0.0
        %3376 = vmatpush.msra.mxu0 0.0
        %3377 = vmatpush.msra.mxu0 0.0
        %3378 = vmatpush.msra.mxu0 0.0
        %3379 = vmatpush.msra.mxu0 0.0
        %3380 = vmatpush.msra.mxu0 0.0
        %3381 = vmatpush.msra.mxu0 0.0
        %3382 = vmatpush.msra.mxu0 0.0
        %3383 = vmatpush.msra.mxu0 0.0
        %3384 = vmatpush.msra.mxu0 0.0
        %3385 = vmatpush.msra.mxu0 0.0
        %3386 = vmatpush.msra.mxu0 0.0
        %3387 = vmatpush.msra.mxu0 0.0
        %3388 = vmatpush.msra.mxu0 0.0
        %3389 = vmatpush.msra.mxu0 %v2955
        %3390 = vmatmul.f32.gmra.mxu0 %v3372
        %v3391 = vpop.f32.mrf.mxu0
        %v3392 = vadd.f32 0.0, %v3391
        %3393 = vdwg.mxu0
        %3395 = vrot.lane.b32.xlu0 %v2955, 112
        %v3396 = vpop.permute.xlu0 %3395
        %v3399 = vsel %vm793, %v3280, 0
        %3401 = vmatpush.msra.mxu0 0.0
        %3402 = vmatpush.msra.mxu0 0.0
        %3403 = vmatpush.msra.mxu0 0.0
        %3404 = vmatpush.msra.mxu0 0.0
        %3405 = vmatpush.msra.mxu0 0.0
        %3406 = vmatpush.msra.mxu0 0.0
        %3407 = vmatpush.msra.mxu0 0.0
        %3408 = vmatpush.msra.mxu0 0.0
        %3409 = vmatpush.msra.mxu0 0.0
        %3410 = vmatpush.msra.mxu0 0.0
        %3411 = vmatpush.msra.mxu0 0.0
        %3412 = vmatpush.msra.mxu0 0.0
        %3413 = vmatpush.msra.mxu0 0.0
        %3414 = vmatpush.msra.mxu0 0.0
        %3415 = vmatpush.msra.mxu0 0.0
        %3416 = vmatpush.msra.mxu0 %v3396
        %3417 = vmatmul.f32.gmra.mxu0 %v3399
        %v3418 = vpop.f32.mrf.mxu0
        %v3419 = vadd.f32 0.0, %v3418
        %3420 = vdwg.mxu0
        %3421 = vrot.lane.b32.xlu0 %v2955, 96
        %v3422 = vpop.permute.xlu0 %3421
        %v3425 = vsel %vm793, %v3295, 0
        %3427 = vmatpush.msra.mxu0 0.0
        %3428 = vmatpush.msra.mxu0 0.0
        %3429 = vmatpush.msra.mxu0 0.0
        %3430 = vmatpush.msra.mxu0 0.0
        %3431 = vmatpush.msra.mxu0 0.0
        %3432 = vmatpush.msra.mxu0 0.0
        %3433 = vmatpush.msra.mxu0 0.0
        %3434 = vmatpush.msra.mxu0 0.0
        %3435 = vmatpush.msra.mxu0 0.0
        %3436 = vmatpush.msra.mxu0 0.0
        %3437 = vmatpush.msra.mxu0 0.0
        %3438 = vmatpush.msra.mxu0 0.0
        %3439 = vmatpush.msra.mxu0 0.0
        %3440 = vmatpush.msra.mxu0 0.0
        %3441 = vmatpush.msra.mxu0 0.0
        %3442 = vmatpush.msra.mxu0 %v3422
        %3443 = vmatmul.f32.gmra.mxu0 %v3425
        %v3444 = vpop.f32.mrf.mxu0
        %v3445 = vadd.f32 0.0, %v3444
        %3446 = vdwg.mxu0
        %3447 = vrot.lane.b32.xlu0 %v2955, 80
        %v3448 = vpop.permute.xlu0 %3447
        %v3451 = vsel %vm793, %v3310, 0
        %3453 = vmatpush.msra.mxu0 0.0
        %3454 = vmatpush.msra.mxu0 0.0
        %3455 = vmatpush.msra.mxu0 0.0
        %3456 = vmatpush.msra.mxu0 0.0
        %3457 = vmatpush.msra.mxu0 0.0
        %3458 = vmatpush.msra.mxu0 0.0
        %3459 = vmatpush.msra.mxu0 0.0
        %3460 = vmatpush.msra.mxu0 0.0
        %3461 = vmatpush.msra.mxu0 0.0
        %3462 = vmatpush.msra.mxu0 0.0
        %3463 = vmatpush.msra.mxu0 0.0
        %3464 = vmatpush.msra.mxu0 0.0
        %3465 = vmatpush.msra.mxu0 0.0
        %3466 = vmatpush.msra.mxu0 0.0
        %3467 = vmatpush.msra.mxu0 0.0
        %3468 = vmatpush.msra.mxu0 %v3448
        %3469 = vmatmul.f32.gmra.mxu0 %v3451
        %v3470 = vpop.f32.mrf.mxu0
        %v3471 = vadd.f32 0.0, %v3470
        %3472 = vdwg.mxu0
        %3473 = vrot.lane.b32.xlu0 %v2955, 64
        %v3474 = vpop.permute.xlu0 %3473
        %v3477 = vsel %vm793, %v3325, 0
        %3479 = vmatpush.msra.mxu0 0.0
        %3480 = vmatpush.msra.mxu0 0.0
        %3481 = vmatpush.msra.mxu0 0.0
        %3482 = vmatpush.msra.mxu0 0.0
        %3483 = vmatpush.msra.mxu0 0.0
        %3484 = vmatpush.msra.mxu0 0.0
        %3485 = vmatpush.msra.mxu0 0.0
        %3486 = vmatpush.msra.mxu0 0.0
        %3487 = vmatpush.msra.mxu0 0.0
        %3488 = vmatpush.msra.mxu0 0.0
        %3489 = vmatpush.msra.mxu0 0.0
        %3490 = vmatpush.msra.mxu0 0.0
        %3491 = vmatpush.msra.mxu0 0.0
        %3492 = vmatpush.msra.mxu0 0.0
        %3493 = vmatpush.msra.mxu0 0.0
        %3494 = vmatpush.msra.mxu0 %v3474
        %3495 = vmatmul.f32.gmra.mxu0 %v3477
        %v3496 = vpop.f32.mrf.mxu0
        %v3497 = vadd.f32 0.0, %v3496
        %3498 = vdwg.mxu0
        %3499 = vrot.lane.b32.xlu0 %v2955, 48
        %v3500 = vpop.permute.xlu0 %3499
        %v3503 = vsel %vm793, %v3340, 0
        %3505 = vmatpush.msra.mxu0 0.0
        %3506 = vmatpush.msra.mxu0 0.0
        %3507 = vmatpush.msra.mxu0 0.0
        %3508 = vmatpush.msra.mxu0 0.0
        %3509 = vmatpush.msra.mxu0 0.0
        %3510 = vmatpush.msra.mxu0 0.0
        %3511 = vmatpush.msra.mxu0 0.0
        %3512 = vmatpush.msra.mxu0 0.0
        %3513 = vmatpush.msra.mxu0 0.0
        %3514 = vmatpush.msra.mxu0 0.0
        %3515 = vmatpush.msra.mxu0 0.0
        %3516 = vmatpush.msra.mxu0 0.0
        %3517 = vmatpush.msra.mxu0 0.0
        %3518 = vmatpush.msra.mxu0 0.0
        %3519 = vmatpush.msra.mxu0 0.0
        %3520 = vmatpush.msra.mxu0 %v3500
        %3521 = vmatmul.f32.gmra.mxu0 %v3503
        %v3522 = vpop.f32.mrf.mxu0
        %v3523 = vadd.f32 0.0, %v3522
        %3524 = vdwg.mxu0
        %3525 = vrot.lane.b32.xlu0 %v2955, 32
        %v3526 = vpop.permute.xlu0 %3525
        %v3529 = vsel %vm793, %v3355, 0
        %3531 = vmatpush.msra.mxu0 0.0
        %3532 = vmatpush.msra.mxu0 0.0
        %3533 = vmatpush.msra.mxu0 0.0
        %3534 = vmatpush.msra.mxu0 0.0
        %3535 = vmatpush.msra.mxu0 0.0
        %3536 = vmatpush.msra.mxu0 0.0
        %3537 = vmatpush.msra.mxu0 0.0
        %3538 = vmatpush.msra.mxu0 0.0
        %3539 = vmatpush.msra.mxu0 0.0
        %3540 = vmatpush.msra.mxu0 0.0
        %3541 = vmatpush.msra.mxu0 0.0
        %3542 = vmatpush.msra.mxu0 0.0
        %3543 = vmatpush.msra.mxu0 0.0
        %3544 = vmatpush.msra.mxu0 0.0
        %3545 = vmatpush.msra.mxu0 0.0
        %3546 = vmatpush.msra.mxu0 %v3526
        %3547 = vmatmul.f32.gmra.mxu0 %v3529
        %v3548 = vpop.f32.mrf.mxu0
        %v3549 = vadd.f32 0.0, %v3548
        %3550 = vdwg.mxu0
        %3551 = vrot.lane.b32.xlu0 %v2955, 16
        %v3552 = vpop.permute.xlu0 %3551
        %v3555 = vsel %vm793, %v3370, 0
        %3557 = vmatpush.msra.mxu0 0.0
        %3558 = vmatpush.msra.mxu0 0.0
        %3559 = vmatpush.msra.mxu0 0.0
        %3560 = vmatpush.msra.mxu0 0.0
        %3561 = vmatpush.msra.mxu0 0.0
        %3562 = vmatpush.msra.mxu0 0.0
        %3563 = vmatpush.msra.mxu0 0.0
        %3564 = vmatpush.msra.mxu0 0.0
        %3565 = vmatpush.msra.mxu0 0.0
        %3566 = vmatpush.msra.mxu0 0.0
        %3567 = vmatpush.msra.mxu0 0.0
        %3568 = vmatpush.msra.mxu0 0.0
        %3569 = vmatpush.msra.mxu0 0.0
        %3570 = vmatpush.msra.mxu0 0.0
        %3571 = vmatpush.msra.mxu0 0.0
        %3572 = vmatpush.msra.mxu0 %v3552
        %3573 = vmatmul.f32.gmra.mxu0 %v3555
        %v3574 = vpop.f32.mrf.mxu0
        %v3575 = vadd.f32 0.0, %v3574
        %3576 = vdwg.mxu0
        %3578 = vrot.lane.b32.xlu0 %v3419, 16
        %v3579 = vpop.permute.xlu0 %3578
        %3582 = vrot.lane.b32.xlu0 %v3445, 32
        %v3583 = vpop.permute.xlu0 %3582
        %3586 = vrot.lane.b32.xlu0 %v3471, 48
        %v3587 = vpop.permute.xlu0 %3586
        %3590 = vrot.lane.b32.xlu0 %v3497, 64
        %v3591 = vpop.permute.xlu0 %3590
        %3594 = vrot.lane.b32.xlu0 %v3523, 80
        %v3595 = vpop.permute.xlu0 %3594
        %3598 = vrot.lane.b32.xlu0 %v3549, 96
        %v3599 = vpop.permute.xlu0 %3598
        %3602 = vrot.lane.b32.xlu0 %v3575, 112
        %v3603 = vpop.permute.xlu0 %3602
        %v3605 = vsel %vm570, %v3392, %v3579
        %v3606 = vsel %vm1221, %v3605, %v3583
        %v3607 = vsel %vm1223, %v3606, %v3587
        %v3608 = vsel %vm1225, %v3607, %v3591
        %v3609 = vsel %vm1227, %v3608, %v3595
        %v3610 = vsel %vm1229, %v3609, %v3599
        %v3611 = vsel %vm1231, %v3610, %v3603
        %s3612 = scalar_lea.vmem [#allocation5], 256
        %v3613 = vld [vmem:[%s3612] sm:$0xff]
        %v3614 = vld [vmem:[%s3612 + $0x8] sm:$0xff]
        %v3615 = vld [vmem:[%s3612 + $0x10] sm:$0xff]
        %v3616 = vld [vmem:[%s3612 + $0x18] sm:$0xff]
        %v3617 = vld [vmem:[%s3612 + $0x20] sm:$0xff]
        %v3618 = vld [vmem:[%s3612 + $0x28] sm:$0xff]
        %v3619 = vld [vmem:[%s3612 + $0x30] sm:$0xff]
        %v3620 = vld [vmem:[%s3612 + $0x38] sm:$0xff]
        %v3621 = vld [vmem:[%s3612 + $0x40] sm:$0xff]
        %v3622 = vld [vmem:[%s3612 + $0x48] sm:$0xff]
        %v3623 = vld [vmem:[%s3612 + $0x50] sm:$0xff]
        %v3624 = vld [vmem:[%s3612 + $0x58] sm:$0xff]
        %v3625 = vld [vmem:[%s3612 + $0x60] sm:$0xff]
        %v3626 = vld [vmem:[%s3612 + $0x68] sm:$0xff]
        %v3627 = vld [vmem:[%s3612 + $0x70] sm:$0xff]
        %v3628 = vld [vmem:[%s3612 + $0x78] sm:$0xff]
        %s3629 = scalar_lea.vmem %s4, 2
        %v3630 = vld [vmem:[%s3629] sm:$0x1]
        %v3632 = vperm.slane %v3630, 0
        %3634 = vmatpush.msra.mxu0 %v3628
        %3635 = vmatpush.msra.mxu0 %v3627
        %3636 = vmatpush.msra.mxu0 %v3626
        %3637 = vmatpush.msra.mxu0 %v3625
        %3638 = vmatpush.msra.mxu0 %v3624
        %3639 = vmatpush.msra.mxu0 %v3623
        %3640 = vmatpush.msra.mxu0 %v3622
        %3641 = vmatpush.msra.mxu0 %v3621
        %3642 = vmatpush.msra.mxu0 %v3620
        %3643 = vmatpush.msra.mxu0 %v3619
        %3644 = vmatpush.msra.mxu0 %v3618
        %3645 = vmatpush.msra.mxu0 %v3617
        %3646 = vmatpush.msra.mxu0 %v3616
        %3647 = vmatpush.msra.mxu0 %v3615
        %3648 = vmatpush.msra.mxu0 %v3614
        %3649 = vmatpush.msra.mxu0 %v3613
        %3650 = vmatmul.f32.gmra.mxu0 %v3611
        %v3651 = vpop.f32.mrf.mxu0
        %v3652 = vadd.f32 %v3632, %v3651
        %3653 = vdwg.mxu0
        %v3654 = vadd.f32 %v2832, %v3652
        %3655 = vadd.xlane.f32.xlu0 %v3654
        %v3656 = vpop.xlane.xlu0 %3655
        %v3657 = vmul.f32 %v3656, %v1282
        %v3658 = vsub.f32 %v3654, %v3657
        %v3659 = vmul.f32 %v3658, %v3658
        %3660 = vadd.xlane.f32.xlu0 %v3659
        %v3661 = vpop.xlane.xlu0 %3660
        %v3662 = vmul.f32 %v3661, %v1282
        %v3663 = vadd.f32 %v3662, 1e-05
        %v3664 = vrsqrt.pop %v3663
        %v3665 = vmul.f32 %v3664, %v3663
        %v3666 = vmul.f32 %v3665, %v3664
        %v3667 = vmul.f32 0.5, %v3666
        %v3668 = vsub.f32 1.5, %v3667
        %v3669 = vmul.f32 %v3664, %v3668
        %vm3670 = vweird.f32 %v3663
        %vm3671 = vweird.f32 %v3664
        %vm3672 = vmor %vm3670, %vm3671
        %v3673 = vsel %vm3672, %v3664, %v3669
        %v3674 = vmul.f32 %v3658, %v3673
        %v3676 = vperm.slane %v2834, 0
        %v3678 = vmul.f32 %v3674, %v3676
        %v3680 = vperm.slane %v2837, 0
        %v3682 = vadd.f32 %v3678, %v3680
        %s3683 = scalar_lea.vmem [#allocation7], 1024
        %v3684 = vld [vmem:[%s3683] sm:$0xff]
        %v3685 = vld [vmem:[%s3683 + $0x8] sm:$0xff]
        %v3686 = vld [vmem:[%s3683 + $0x10] sm:$0xff]
        %v3687 = vld [vmem:[%s3683 + $0x18] sm:$0xff]
        %v3688 = vld [vmem:[%s3683 + $0x20] sm:$0xff]
        %v3689 = vld [vmem:[%s3683 + $0x28] sm:$0xff]
        %v3690 = vld [vmem:[%s3683 + $0x30] sm:$0xff]
        %v3691 = vld [vmem:[%s3683 + $0x38] sm:$0xff]
        %v3692 = vld [vmem:[%s3683 + $0x40] sm:$0xff]
        %v3693 = vld [vmem:[%s3683 + $0x48] sm:$0xff]
        %v3694 = vld [vmem:[%s3683 + $0x50] sm:$0xff]
        %v3695 = vld [vmem:[%s3683 + $0x58] sm:$0xff]
        %v3696 = vld [vmem:[%s3683 + $0x60] sm:$0xff]
        %v3697 = vld [vmem:[%s3683 + $0x68] sm:$0xff]
        %v3698 = vld [vmem:[%s3683 + $0x70] sm:$0xff]
        %v3699 = vld [vmem:[%s3683 + $0x78] sm:$0xff]
        %v3700 = vld [vmem:[%s3683 + $0x80] sm:$0xff]
        %v3701 = vld [vmem:[%s3683 + $0x88] sm:$0xff]
        %v3702 = vld [vmem:[%s3683 + $0x90] sm:$0xff]
        %v3703 = vld [vmem:[%s3683 + $0x98] sm:$0xff]
        %v3704 = vld [vmem:[%s3683 + $0xa0] sm:$0xff]
        %v3705 = vld [vmem:[%s3683 + $0xa8] sm:$0xff]
        %v3706 = vld [vmem:[%s3683 + $0xb0] sm:$0xff]
        %v3707 = vld [vmem:[%s3683 + $0xb8] sm:$0xff]
        %v3708 = vld [vmem:[%s3683 + $0xc0] sm:$0xff]
        %v3709 = vld [vmem:[%s3683 + $0xc8] sm:$0xff]
        %v3710 = vld [vmem:[%s3683 + $0xd0] sm:$0xff]
        %v3711 = vld [vmem:[%s3683 + $0xd8] sm:$0xff]
        %v3712 = vld [vmem:[%s3683 + $0xe0] sm:$0xff]
        %v3713 = vld [vmem:[%s3683 + $0xe8] sm:$0xff]
        %v3714 = vld [vmem:[%s3683 + $0xf0] sm:$0xff]
        %v3715 = vld [vmem:[%s3683 + $0xf8] sm:$0xff]
        %v3716 = vld [vmem:[%s3683 + $0x100] sm:$0xff]
        %v3717 = vld [vmem:[%s3683 + $0x108] sm:$0xff]
        %v3718 = vld [vmem:[%s3683 + $0x110] sm:$0xff]
        %v3719 = vld [vmem:[%s3683 + $0x118] sm:$0xff]
        %v3720 = vld [vmem:[%s3683 + $0x120] sm:$0xff]
        %v3721 = vld [vmem:[%s3683 + $0x128] sm:$0xff]
        %v3722 = vld [vmem:[%s3683 + $0x130] sm:$0xff]
        %v3723 = vld [vmem:[%s3683 + $0x138] sm:$0xff]
        %v3724 = vld [vmem:[%s3683 + $0x140] sm:$0xff]
        %v3725 = vld [vmem:[%s3683 + $0x148] sm:$0xff]
        %v3726 = vld [vmem:[%s3683 + $0x150] sm:$0xff]
        %v3727 = vld [vmem:[%s3683 + $0x158] sm:$0xff]
        %v3728 = vld [vmem:[%s3683 + $0x160] sm:$0xff]
        %v3729 = vld [vmem:[%s3683 + $0x168] sm:$0xff]
        %v3730 = vld [vmem:[%s3683 + $0x170] sm:$0xff]
        %v3731 = vld [vmem:[%s3683 + $0x178] sm:$0xff]
        %v3732 = vld [vmem:[%s3683 + $0x180] sm:$0xff]
        %v3733 = vld [vmem:[%s3683 + $0x188] sm:$0xff]
        %v3734 = vld [vmem:[%s3683 + $0x190] sm:$0xff]
        %v3735 = vld [vmem:[%s3683 + $0x198] sm:$0xff]
        %v3736 = vld [vmem:[%s3683 + $0x1a0] sm:$0xff]
        %v3737 = vld [vmem:[%s3683 + $0x1a8] sm:$0xff]
        %v3738 = vld [vmem:[%s3683 + $0x1b0] sm:$0xff]
        %v3739 = vld [vmem:[%s3683 + $0x1b8] sm:$0xff]
        %v3740 = vld [vmem:[%s3683 + $0x1c0] sm:$0xff]
        %v3741 = vld [vmem:[%s3683 + $0x1c8] sm:$0xff]
        %v3742 = vld [vmem:[%s3683 + $0x1d0] sm:$0xff]
        %v3743 = vld [vmem:[%s3683 + $0x1d8] sm:$0xff]
        %v3744 = vld [vmem:[%s3683 + $0x1e0] sm:$0xff]
        %v3745 = vld [vmem:[%s3683 + $0x1e8] sm:$0xff]
        %v3746 = vld [vmem:[%s3683 + $0x1f0] sm:$0xff]
        %v3747 = vld [vmem:[%s3683 + $0x1f8] sm:$0xff]
        %s3748 = scalar_lea.vmem %s6, 8
        %v3749 = vld [vmem:[%s3748] sm:$0xf]
        %v3751 = vperm.slane %v3749, 0
        %v3752 = vperm.slane %v3749, 1
        %v3753 = vperm.slane %v3749, 2
        %v3754 = vperm.slane %v3749, 3
        %3759 = vmatpush.msra.mxu0 %v3744
        %3760 = vmatpush.msra.mxu0 %v3740
        %3761 = vmatpush.msra.mxu0 %v3736
        %3762 = vmatpush.msra.mxu0 %v3732
        %3763 = vmatpush.msra.mxu0 %v3728
        %3764 = vmatpush.msra.mxu0 %v3724
        %3765 = vmatpush.msra.mxu0 %v3720
        %3766 = vmatpush.msra.mxu0 %v3716
        %3767 = vmatpush.msra.mxu0 %v3712
        %3768 = vmatpush.msra.mxu0 %v3708
        %3769 = vmatpush.msra.mxu0 %v3704
        %3770 = vmatpush.msra.mxu0 %v3700
        %3771 = vmatpush.msra.mxu0 %v3696
        %3772 = vmatpush.msra.mxu0 %v3692
        %3773 = vmatpush.msra.mxu0 %v3688
        %3774 = vmatpush.msra.mxu0 %v3684
        %3775 = vmatmul.f32.gmra.mxu0 %v3682
        %v3776 = vpop.f32.mrf.mxu0
        %v3777 = vadd.f32 %v3751, %v3776
        %3778 = vdwg.mxu0
        %3779 = vmatpush.msra.mxu0 %v3745
        %3780 = vmatpush.msra.mxu0 %v3741
        %3781 = vmatpush.msra.mxu0 %v3737
        %3782 = vmatpush.msra.mxu0 %v3733
        %3783 = vmatpush.msra.mxu0 %v3729
        %3784 = vmatpush.msra.mxu0 %v3725
        %3785 = vmatpush.msra.mxu0 %v3721
        %3786 = vmatpush.msra.mxu0 %v3717
        %3787 = vmatpush.msra.mxu0 %v3713
        %3788 = vmatpush.msra.mxu0 %v3709
        %3789 = vmatpush.msra.mxu0 %v3705
        %3790 = vmatpush.msra.mxu0 %v3701
        %3791 = vmatpush.msra.mxu0 %v3697
        %3792 = vmatpush.msra.mxu0 %v3693
        %3793 = vmatpush.msra.mxu0 %v3689
        %3794 = vmatpush.msra.mxu0 %v3685
        %3795 = vmatmul.f32.gmra.mxu0 %v3682
        %v3796 = vpop.f32.mrf.mxu0
        %v3797 = vadd.f32 %v3752, %v3796
        %3798 = vdwg.mxu0
        %3799 = vmatpush.msra.mxu0 %v3746
        %3800 = vmatpush.msra.mxu0 %v3742
        %3801 = vmatpush.msra.mxu0 %v3738
        %3802 = vmatpush.msra.mxu0 %v3734
        %3803 = vmatpush.msra.mxu0 %v3730
        %3804 = vmatpush.msra.mxu0 %v3726
        %3805 = vmatpush.msra.mxu0 %v3722
        %3806 = vmatpush.msra.mxu0 %v3718
        %3807 = vmatpush.msra.mxu0 %v3714
        %3808 = vmatpush.msra.mxu0 %v3710
        %3809 = vmatpush.msra.mxu0 %v3706
        %3810 = vmatpush.msra.mxu0 %v3702
        %3811 = vmatpush.msra.mxu0 %v3698
        %3812 = vmatpush.msra.mxu0 %v3694
        %3813 = vmatpush.msra.mxu0 %v3690
        %3814 = vmatpush.msra.mxu0 %v3686
        %3815 = vmatmul.f32.gmra.mxu0 %v3682
        %v3816 = vpop.f32.mrf.mxu0
        %v3817 = vadd.f32 %v3753, %v3816
        %3818 = vdwg.mxu0
        %3819 = vmatpush.msra.mxu0 %v3747
        %3820 = vmatpush.msra.mxu0 %v3743
        %3821 = vmatpush.msra.mxu0 %v3739
        %3822 = vmatpush.msra.mxu0 %v3735
        %3823 = vmatpush.msra.mxu0 %v3731
        %3824 = vmatpush.msra.mxu0 %v3727
        %3825 = vmatpush.msra.mxu0 %v3723
        %3826 = vmatpush.msra.mxu0 %v3719
        %3827 = vmatpush.msra.mxu0 %v3715
        %3828 = vmatpush.msra.mxu0 %v3711
        %3829 = vmatpush.msra.mxu0 %v3707
        %3830 = vmatpush.msra.mxu0 %v3703
        %3831 = vmatpush.msra.mxu0 %v3699
        %3832 = vmatpush.msra.mxu0 %v3695
        %3833 = vmatpush.msra.mxu0 %v3691
        %3834 = vmatpush.msra.mxu0 %v3687
        %3835 = vmatmul.f32.gmra.mxu0 %v3682
        %v3836 = vpop.f32.mrf.mxu0
        %v3837 = vadd.f32 %v3754, %v3836
        %3838 = vdwg.mxu0
        %v3839 = vmax.f32 %v3777, 0.0
        %v3840 = vmax.f32 %v3797, 0.0
        %v3841 = vmax.f32 %v3817, 0.0
        %v3842 = vmax.f32 %v3837, 0.0
        %s3843 = scalar_lea.vmem [#allocation8], 1024
        %v3844 = vld [vmem:[%s3843] sm:$0xff]
        %v3845 = vld [vmem:[%s3843 + $0x8] sm:$0xff]
        %v3846 = vld [vmem:[%s3843 + $0x10] sm:$0xff]
        %v3847 = vld [vmem:[%s3843 + $0x18] sm:$0xff]
        %v3848 = vld [vmem:[%s3843 + $0x20] sm:$0xff]
        %v3849 = vld [vmem:[%s3843 + $0x28] sm:$0xff]
        %v3850 = vld [vmem:[%s3843 + $0x30] sm:$0xff]
        %v3851 = vld [vmem:[%s3843 + $0x38] sm:$0xff]
        %v3852 = vld [vmem:[%s3843 + $0x40] sm:$0xff]
        %v3853 = vld [vmem:[%s3843 + $0x48] sm:$0xff]
        %v3854 = vld [vmem:[%s3843 + $0x50] sm:$0xff]
        %v3855 = vld [vmem:[%s3843 + $0x58] sm:$0xff]
        %v3856 = vld [vmem:[%s3843 + $0x60] sm:$0xff]
        %v3857 = vld [vmem:[%s3843 + $0x68] sm:$0xff]
        %v3858 = vld [vmem:[%s3843 + $0x70] sm:$0xff]
        %v3859 = vld [vmem:[%s3843 + $0x78] sm:$0xff]
        %v3860 = vld [vmem:[%s3843 + $0x80] sm:$0xff]
        %v3861 = vld [vmem:[%s3843 + $0x88] sm:$0xff]
        %v3862 = vld [vmem:[%s3843 + $0x90] sm:$0xff]
        %v3863 = vld [vmem:[%s3843 + $0x98] sm:$0xff]
        %v3864 = vld [vmem:[%s3843 + $0xa0] sm:$0xff]
        %v3865 = vld [vmem:[%s3843 + $0xa8] sm:$0xff]
        %v3866 = vld [vmem:[%s3843 + $0xb0] sm:$0xff]
        %v3867 = vld [vmem:[%s3843 + $0xb8] sm:$0xff]
        %v3868 = vld [vmem:[%s3843 + $0xc0] sm:$0xff]
        %v3869 = vld [vmem:[%s3843 + $0xc8] sm:$0xff]
        %v3870 = vld [vmem:[%s3843 + $0xd0] sm:$0xff]
        %v3871 = vld [vmem:[%s3843 + $0xd8] sm:$0xff]
        %v3872 = vld [vmem:[%s3843 + $0xe0] sm:$0xff]
        %v3873 = vld [vmem:[%s3843 + $0xe8] sm:$0xff]
        %v3874 = vld [vmem:[%s3843 + $0xf0] sm:$0xff]
        %v3875 = vld [vmem:[%s3843 + $0xf8] sm:$0xff]
        %v3876 = vld [vmem:[%s3843 + $0x100] sm:$0xff]
        %v3877 = vld [vmem:[%s3843 + $0x108] sm:$0xff]
        %v3878 = vld [vmem:[%s3843 + $0x110] sm:$0xff]
        %v3879 = vld [vmem:[%s3843 + $0x118] sm:$0xff]
        %v3880 = vld [vmem:[%s3843 + $0x120] sm:$0xff]
        %v3881 = vld [vmem:[%s3843 + $0x128] sm:$0xff]
        %v3882 = vld [vmem:[%s3843 + $0x130] sm:$0xff]
        %v3883 = vld [vmem:[%s3843 + $0x138] sm:$0xff]
        %v3884 = vld [vmem:[%s3843 + $0x140] sm:$0xff]
        %v3885 = vld [vmem:[%s3843 + $0x148] sm:$0xff]
        %v3886 = vld [vmem:[%s3843 + $0x150] sm:$0xff]
        %v3887 = vld [vmem:[%s3843 + $0x158] sm:$0xff]
        %v3888 = vld [vmem:[%s3843 + $0x160] sm:$0xff]
        %v3889 = vld [vmem:[%s3843 + $0x168] sm:$0xff]
        %v3890 = vld [vmem:[%s3843 + $0x170] sm:$0xff]
        %v3891 = vld [vmem:[%s3843 + $0x178] sm:$0xff]
        %v3892 = vld [vmem:[%s3843 + $0x180] sm:$0xff]
        %v3893 = vld [vmem:[%s3843 + $0x188] sm:$0xff]
        %v3894 = vld [vmem:[%s3843 + $0x190] sm:$0xff]
        %v3895 = vld [vmem:[%s3843 + $0x198] sm:$0xff]
        %v3896 = vld [vmem:[%s3843 + $0x1a0] sm:$0xff]
        %v3897 = vld [vmem:[%s3843 + $0x1a8] sm:$0xff]
        %v3898 = vld [vmem:[%s3843 + $0x1b0] sm:$0xff]
        %v3899 = vld [vmem:[%s3843 + $0x1b8] sm:$0xff]
        %v3900 = vld [vmem:[%s3843 + $0x1c0] sm:$0xff]
        %v3901 = vld [vmem:[%s3843 + $0x1c8] sm:$0xff]
        %v3902 = vld [vmem:[%s3843 + $0x1d0] sm:$0xff]
        %v3903 = vld [vmem:[%s3843 + $0x1d8] sm:$0xff]
        %v3904 = vld [vmem:[%s3843 + $0x1e0] sm:$0xff]
        %v3905 = vld [vmem:[%s3843 + $0x1e8] sm:$0xff]
        %v3906 = vld [vmem:[%s3843 + $0x1f0] sm:$0xff]
        %v3907 = vld [vmem:[%s3843 + $0x1f8] sm:$0xff]
        %s3908 = scalar_lea.vmem %s8, 2
        %v3909 = vld [vmem:[%s3908] sm:$0x1]
        %v3911 = vperm.slane %v3909, 0
        %3913 = vmatpush.msra.mxu0 %v3859
        %3914 = vmatpush.msra.mxu0 %v3858
        %3915 = vmatpush.msra.mxu0 %v3857
        %3916 = vmatpush.msra.mxu0 %v3856
        %3917 = vmatpush.msra.mxu0 %v3855
        %3918 = vmatpush.msra.mxu0 %v3854
        %3919 = vmatpush.msra.mxu0 %v3853
        %3920 = vmatpush.msra.mxu0 %v3852
        %3921 = vmatpush.msra.mxu0 %v3851
        %3922 = vmatpush.msra.mxu0 %v3850
        %3923 = vmatpush.msra.mxu0 %v3849
        %3924 = vmatpush.msra.mxu0 %v3848
        %3925 = vmatpush.msra.mxu0 %v3847
        %3926 = vmatpush.msra.mxu0 %v3846
        %3927 = vmatpush.msra.mxu0 %v3845
        %3928 = vmatpush.msra.mxu0 %v3844
        %3929 = vmatmul.f32.gmra.mxu0 %v3839
        %v3930 = vpop.f32.mrf.mxu0
        %v3931 = vadd.f32 %v3911, %v3930
        %3932 = vdwg.mxu0
        %3933 = vmatpush.msra.mxu0 %v3875
        %3934 = vmatpush.msra.mxu0 %v3874
        %3935 = vmatpush.msra.mxu0 %v3873
        %3936 = vmatpush.msra.mxu0 %v3872
        %3937 = vmatpush.msra.mxu0 %v3871
        %3938 = vmatpush.msra.mxu0 %v3870
        %3939 = vmatpush.msra.mxu0 %v3869
        %3940 = vmatpush.msra.mxu0 %v3868
        %3941 = vmatpush.msra.mxu0 %v3867
        %3942 = vmatpush.msra.mxu0 %v3866
        %3943 = vmatpush.msra.mxu0 %v3865
        %3944 = vmatpush.msra.mxu0 %v3864
        %3945 = vmatpush.msra.mxu0 %v3863
        %3946 = vmatpush.msra.mxu0 %v3862
        %3947 = vmatpush.msra.mxu0 %v3861
        %3948 = vmatpush.msra.mxu0 %v3860
        %3949 = vmatmul.f32.gmra.mxu0 %v3840
        %v3950 = vpop.f32.mrf.mxu0
        %v3951 = vadd.f32 %v3931, %v3950
        %3952 = vdwg.mxu0
        %3953 = vmatpush.msra.mxu0 %v3891
        %3954 = vmatpush.msra.mxu0 %v3890
        %3955 = vmatpush.msra.mxu0 %v3889
        %3956 = vmatpush.msra.mxu0 %v3888
        %3957 = vmatpush.msra.mxu0 %v3887
        %3958 = vmatpush.msra.mxu0 %v3886
        %3959 = vmatpush.msra.mxu0 %v3885
        %3960 = vmatpush.msra.mxu0 %v3884
        %3961 = vmatpush.msra.mxu0 %v3883
        %3962 = vmatpush.msra.mxu0 %v3882
        %3963 = vmatpush.msra.mxu0 %v3881
        %3964 = vmatpush.msra.mxu0 %v3880
        %3965 = vmatpush.msra.mxu0 %v3879
        %3966 = vmatpush.msra.mxu0 %v3878
        %3967 = vmatpush.msra.mxu0 %v3877
        %3968 = vmatpush.msra.mxu0 %v3876
        %3969 = vmatmul.f32.gmra.mxu0 %v3841
        %v3970 = vpop.f32.mrf.mxu0
        %v3971 = vadd.f32 %v3951, %v3970
        %3972 = vdwg.mxu0
        %3973 = vmatpush.msra.mxu0 %v3907
        %3974 = vmatpush.msra.mxu0 %v3906
        %3975 = vmatpush.msra.mxu0 %v3905
        %3976 = vmatpush.msra.mxu0 %v3904
        %3977 = vmatpush.msra.mxu0 %v3903
        %3978 = vmatpush.msra.mxu0 %v3902
        %3979 = vmatpush.msra.mxu0 %v3901
        %3980 = vmatpush.msra.mxu0 %v3900
        %3981 = vmatpush.msra.mxu0 %v3899
        %3982 = vmatpush.msra.mxu0 %v3898
        %3983 = vmatpush.msra.mxu0 %v3897
        %3984 = vmatpush.msra.mxu0 %v3896
        %3985 = vmatpush.msra.mxu0 %v3895
        %3986 = vmatpush.msra.mxu0 %v3894
        %3987 = vmatpush.msra.mxu0 %v3893
        %3988 = vmatpush.msra.mxu0 %v3892
        %3989 = vmatmul.f32.gmra.mxu0 %v3842
        %v3990 = vpop.f32.mrf.mxu0
        %v3991 = vadd.f32 %v3971, %v3990
        %3992 = vdwg.mxu0
        %v3993 = vadd.f32 %v3682, %v3991
        %3994 = vadd.xlane.f32.xlu0 %v3993
        %v3995 = vpop.xlane.xlu0 %3994
        %v3996 = vmul.f32 %v3995, %v1282
        %v3997 = vsub.f32 %v3993, %v3996
        %v3998 = vmul.f32 %v3997, %v3997
        %3999 = vadd.xlane.f32.xlu0 %v3998
        %v4000 = vpop.xlane.xlu0 %3999
        %v4001 = vmul.f32 %v4000, %v1282
        %v4002 = vadd.f32 %v4001, 1e-05
        %v4003 = vrsqrt.pop %v4002
        %v4004 = vmul.f32 %v4003, %v4002
        %v4005 = vmul.f32 %v4004, %v4003
        %v4006 = vmul.f32 0.5, %v4005
        %v4007 = vsub.f32 1.5, %v4006
        %v4008 = vmul.f32 %v4003, %v4007
        %vm4009 = vweird.f32 %v4002
        %vm4010 = vweird.f32 %v4003
        %vm4011 = vmor %vm4009, %vm4010
        %v4012 = vsel %vm4011, %v4003, %v4008
        %v4013 = vmul.f32 %v3997, %v4012
        %v4015 = vperm.slane %v2835, 0
        %v4017 = vmul.f32 %v4013, %v4015
        %v4019 = vperm.slane %v2838, 0
        %v4021 = vadd.f32 %v4017, %v4019
        %4022 = vst [vmem:[%s444] sm:$0xff] %v4021
        %s4023 = sand.u32 %s272, 1
        %s4024 = scalar_lea.sflag [#allocation4], %s4023
        %s4025 = sand.u32 %s272, 1
        %s4026 = smul.addr %s4025, 8
        %s4027 = scalar_lea.vmem [#allocation10], %s4026
        // Predicated region
        $region81: #{source_encoder_forward.1} parent=63 // pred_check
          %p4028 = pneg %p282
        $region82: #{source_encoder_forward.1} parent=63 // pred_check_branch
          %4030 = sbr.rel (%p4028) target = $region84
        $region83: #{source_encoder_forward.1} parent=63 // pred_region
          %4032 = vsyncadd %s4024, 0
          %s4033 = smul.addr %s28, 8
          %s4034 = scalar_lea.hbm %s11, %s4033
          %s4036 = sshll.u32 %s4027, 4
          %s4037 = int_to_ptr.vmem [resolvable:$true] %s4036
          %s4038 = sshll.u32 %s4034, 4
          %s4039 = int_to_ptr.hbm [resolvable:$true] %s4038
          %4041 = dma.vmem_to_hbm [thread:$0]  %s4037, 128, %s4039, %s4024
        $region84: #{source_encoder_forward.1} parent=63 // pred_fallthru
          _
      $region64: #{source_encoder_forward.1} parent=5 // pred_fallthru
        _
      %p4042 = scmp.le.s32.totalorder 2, %s23
      // Predicated region
      $region85: #{source_encoder_forward.1} parent=5 // pred_check
        %p4043 = pneg %p4042
      $region86: #{source_encoder_forward.1} parent=5 // pred_check_branch
        %4045 = sbr.rel (%p4043) target = $region88
      $region87: #{source_encoder_forward.1} parent=5 // pred_region
        %s4046 = ssub.s32 %s23, 2
        // Predicated region
        $region89: #{source_encoder_forward.1} parent=87 // pred_check
          %p4047 = pneg %p288
        $region90: #{source_encoder_forward.1} parent=87 // pred_check_branch
          %4049 = sbr.rel (%p4047) target = $region92
        $region91: #{source_encoder_forward.1} parent=87 // pred_region
          %s4050 = sand.u32 %s273, 1
          %s4051 = scalar_lea.sflag [#allocation4], %s4050
          %s4052 = sand.u32 %s273, 1
          %s4053 = smul.addr %s4052, 8
          %s4054 = scalar_lea.vmem [#allocation10], %s4053
          %4056 = dma.done %s4051, 128
        $region92: #{source_encoder_forward.1} parent=87 // pred_fallthru
          _
      $region88: #{source_encoder_forward.1} parent=5 // pred_fallthru
        _
    $region6: #{source_encoder_forward.1} parent=1 // loop_footer
      %s27 = sadd.s32 1, %s23
    $region7: #{source_encoder_forward.1} parent=1 // loop_footer_branch
      %22 = sbr.rel target = $region3
    $region8: #{source_encoder_forward.1} parent=1 // loop_exit
      _
    %4057 = vsyncpa [#allocation3], 1
    %s4058 = scalar_lea.sflag [#allocation3], 1
    %4059 = vsyncpa %s4058, 1
    %4060 = vsyncpa [#allocation6], 1
    %4061 = vsyncpa [#allocation9], 1
    %4062 = vsyncpa [#allocation4], 1
    %s4063 = scalar_lea.sflag [#allocation4], 1
    %4064 = vsyncpa %s4063, 1

</llo_original>
